<compile_context>
chip_gen: v7x
topology: tpu7x:2x2x1
jax: 0.10.0
libtpu: 0.0.40
codegen_flags: <defaults>
</compile_context>

<pallas_src>
import numpy as np
import jax
import jax.numpy as jnp
from jax import lax
from jax.experimental import pallas as pl
from jax.experimental.pallas import tpu as pltpu

EPS = 1e-5   # torch.nn.GroupNorm default eps
G = 16       # GroupNorm(16, C)


def _groupnorm(y, red_row, P, gamma, beta):
    """GroupNorm on a (P_, C) tile (positions x channels), all in f32.

    red_row: (1, P_) with 1.0 at positions that participate in the statistics
             (lets stage 1 run on the halo-padded grid with exact stats).
    P:       (C, C) group-projection matrix pre-scaled by 1/n_per_group.
    """
    s = jnp.dot(red_row, y, preferred_element_type=jnp.float32)        # (1, C) sum
    sq = jnp.dot(red_row, y * y, preferred_element_type=jnp.float32)   # (1, C) sum of squares
    mean = jnp.dot(s, P, preferred_element_type=jnp.float32)           # per-channel group mean
    ex2 = jnp.dot(sq, P, preferred_element_type=jnp.float32)           # per-channel group E[y^2]
    var = ex2 - mean * mean                                            # biased variance (torch)
    scale = gamma * lax.rsqrt(var + EPS)                               # (1, C)
    shift = beta - mean * scale                                        # (1, C)
    return y * scale + shift                                           # one mul + one add / element


def make_fused_kernel(H, W, Cin, Cout, Hh, Wh):
    PP, HW = Hh * Wh, H * W

    def kernel(cols1_ref, xds_ref, w1_ref, w2_ref, wds_ref,
               g1_ref, b1_ref, g2_ref, b2_ref, gds_ref, bds_ref,
               p_ref, intr_ref, intc_ref, out_ref):
        f32 = jnp.float32
        P = p_ref[...]
        intr_row = intr_ref[...]                     # (1, PP) interior indicator

        # -------- stage 1: conv3x3 as ONE matmul (K = 9*Cin) over the padded grid
        cols1 = cols1_ref[0]                         # (PP, 9*Cin) bf16
        conv1 = jnp.dot(cols1, w1_ref[...], preferred_element_type=f32)   # (PP, Cout)

        y1 = _groupnorm(conv1, intr_row, P, g1_ref[...], b1_ref[...])
        y1 = jnp.maximum(y1, 0.0) * intc_ref[...]    # ReLU, then zero the halo ring
        y1_3d = y1.reshape(Hh, Wh, Cout)             # padded stage-1 output stays in VMEM/regs

        # -------- stage 2: conv3x3 over y1 (halo already in place, no HBM round-trip)
        # TODO(synk): fold these 9 taps into one (HW, 9*Cout) x (9*Cout, Cout) im2col
        # matmul once unaligned minor-dim concatenation is verified on the target
        # Mosaic version; the 9 shifted bf16 matmuls below are the safe form.
        w2 = w2_ref[...]                             # (3, 3, Cout, Cout) bf16
        acc = jnp.zeros((HW, Cout), f32)
        for dy in range(3):
            for dx in range(3):
                win = y1_3d[dy:dy + H, dx:dx + W, :].reshape(HW, Cout)
                acc = acc + jnp.dot(win.astype(jnp.bfloat16), w2[dy, dx],
                                    preferred_element_type=f32)
        ones_row = jnp.ones((1, HW), f32)
        out2 = _groupnorm(acc, ones_row, P, g2_ref[...], b2_ref[...])

        # -------- downsample path: 1x1 conv == (HW, Cin) x (Cin, Cout) matmul
        ident = jnp.dot(xds_ref[0], wds_ref[...], preferred_element_type=f32)
        ident = _groupnorm(ident, ones_row, P, gds_ref[...], bds_ref[...])

        out = jnp.maximum(out2 + ident, 0.0)         # (HW, Cout) f32
        out_ref[0] = out.T                           # (Cout, HW): lane-dense, NCHW-native

    return kernel


def basic_block_forward(x_nchw, params):
    """Fused Pallas forward. x_nchw: (N, Cin, H, W) f32 -> (N, Cout, H, W) f32."""
    N, Cin, H, W = x_nchw.shape
    Cout = params["gn1_g"].shape[0]
    cpg = Cout // G
    HW = H * W

    # Halo-padded stage-1 grid: height H+2; width H+2 rounded up to a multiple
    # of 8 so the in-kernel (PP, C) -> (Hh, Wh, C) reshape stays tile-aligned.
    Hh = H + 2
    Wh = ((W + 2 + 7) // 8) * 8
    PP = Hh * Wh

    bf16, f32 = jnp.bfloat16, jnp.float32

    # ---- weights in kernel-friendly layouts (from torch OIHW) ------------------
    w1f = jnp.transpose(params["conv1_w"], (2, 3, 1, 0)).reshape(9 * Cin, Cout).astype(bf16)
    w2t = jnp.transpose(params["conv2_w"], (2, 3, 1, 0)).astype(bf16)        # (3,3,Cout,Cout)
    wds = jnp.transpose(params["ds_w"][:, :, 0, 0], (1, 0)).astype(bf16)     # (Cin, Cout)
    g1 = params["gn1_g"].reshape(1, Cout).astype(f32)
    b1 = params["gn1_b"].reshape(1, Cout).astype(f32)
    g2 = params["gn2_g"].reshape(1, Cout).astype(f32)
    b2 = params["gn2_b"].reshape(1, Cout).astype(f32)
    gd = params["gnd_g"].reshape(1, Cout).astype(f32)
    bd = params["gnd_b"].reshape(1, Cout).astype(f32)

    # Group projection (C, C), pre-scaled by 1/n_per_group (shared by all 3 norms).
    gid = jnp.arange(Cout) // cpg
    P = (gid[:, None] == gid[None, :]).astype(f32) / float(HW * cpg)

    # Interior indicator over the padded (Hh, Wh) grid (row & column forms).
    ii = jnp.arange(PP) // Wh
    jj = jnp.arange(PP) % Wh
    interior = ((ii >= 1) & (ii <= H) & (jj >= 1) & (jj <= W)).astype(f32)
    intr_row = interior.reshape(1, PP)
    intr_col = interior.reshape(PP, 1)

    # ---- im2col for stage 1 (positions-major, K = 9*Cin), built once by XLA ----
    xpad = jnp.pad(x_nchw, ((0, 0), (0, 0), (2, 2), (2, 2 + (Wh - (W + 2)))))
    xpad = jnp.transpose(xpad, (0, 2, 3, 1))                                 # (N, Hh+2, Wh+2, Cin)
    cols1 = jnp.concatenate(
        [xpad[:, dy:dy + Hh, dx:dx + Wh, :].reshape(N, PP, Cin)
         for dy in range(3) for dx in range(3)], axis=-1).astype(bf16)       # (N, PP, 9*Cin)
    # Flat, position-major input for the 1x1 downsample conv (no 4-D tile, no in-kernel reshape).
    xds = jnp.transpose(x_nchw, (0, 2, 3, 1)).reshape(N, HW, Cin).astype(bf16)

    const = lambda shape: pl.BlockSpec(shape, lambda n: (0,) * len(shape))

    out = pl.pallas_call(
        make_fused_kernel(H, W, Cin, Cout, Hh, Wh),
        out_shape=jax.ShapeDtypeStruct((N, Cout, HW), f32),
        grid=(N,),
        in_specs=[
            pl.BlockSpec((1, PP, 9 * Cin), lambda n: (n, 0, 0)),
            pl.BlockSpec((1, HW, Cin), lambda n: (n, 0, 0)),
            const((9 * Cin, Cout)),
            const((3, 3, Cout, Cout)),
            const((Cin, Cout)),
            const((1, Cout)), const((1, Cout)),
            const((1, Cout)), const((1, Cout)),
            const((1, Cout)), const((1, Cout)),
            const((Cout, Cout)),
            const((1, PP)),
            const((PP, 1)),
        ],
        out_specs=pl.BlockSpec((1, Cout, HW), lambda n: (n, 0, 0)),
        compiler_params=pltpu.CompilerParams(
            dimension_semantics=("parallel",)),   # even batch grid keeps both v7x cores busy
    )(cols1, xds, w1f, w2t, wds, g1, b1, g2, b2, gd, bd, P, intr_row, intr_col)

    return out.reshape(N, Cout, H, W)             # already NCHW; reshape is free


def reference_forward(x, params):
    """Pure-JAX (f32) reference mirroring the PyTorch BasicBlock forward."""
    hi = lax.Precision.HIGHEST

    def conv(v, w, pad):
        return lax.conv_general_dilated(
            v, w, (1, 1), [(pad, pad), (pad, pad)],
            dimension_numbers=("NCHW", "OIHW", "NCHW"), precision=hi)

    def gn(y, gamma, beta):
        n, c, h, w = y.shape
        yr = y.reshape(n, G, c // G, h, w)
        mean = yr.mean(axis=(2, 3, 4), keepdims=True)
        var = yr.var(axis=(2, 3, 4), keepdims=True)
        yn = ((yr - mean) * lax.rsqrt(var + EPS)).reshape(n, c, h, w)
        return yn * gamma.reshape(1, c, 1, 1) + beta.reshape(1, c, 1, 1)

    out = jnp.maximum(gn(conv(x, params["conv1_w"], 1),
                         params["gn1_g"], params["gn1_b"]), 0.0)
    out = gn(conv(out, params["conv2_w"], 1), params["gn2_g"], params["gn2_b"])
    ident = gn(conv(x, params["ds_w"], 0), params["gnd_g"], params["gnd_b"])
    return jnp.maximum(out + ident, 0.0)


def init_params(key, Cin, Cout):
    ks = jax.random.split(key, 9)

    def w(k, shape):
        return 0.1 * jax.random.normal(k, shape, jnp.float32)

    return {
        "conv1_w": w(ks[0], (Cout, Cin, 3, 3)),    # torch OIHW
        "conv2_w": w(ks[1], (Cout, Cout, 3, 3)),
        "ds_w":    w(ks[2], (Cout, Cin, 1, 1)),
        "gn1_g": 1.0 + 0.1 * jax.random.normal(ks[3], (Cout,), jnp.float32),
        "gn1_b": 0.1 * jax.random.normal(ks[4], (Cout,), jnp.float32),
        "gn2_g": 1.0 + 0.1 * jax.random.normal(ks[5], (Cout,), jnp.float32),
        "gn2_b": 0.1 * jax.random.normal(ks[6], (Cout,), jnp.float32),
        "gnd_g": 1.0 + 0.1 * jax.random.normal(ks[7], (Cout,), jnp.float32),
        "gnd_b": 0.1 * jax.random.normal(ks[8], (Cout,), jnp.float32),
    }


if __name__ == "__main__":
    # Small shapes; Cout must be divisible by 16 for GroupNorm(16, Cout).
    N, Cin, Cout, H, W = 2, 16, 32, 16, 16

    key = jax.random.PRNGKey(0)
    kx, kp = jax.random.split(key)
    x = jax.random.normal(kx, (N, Cin, H, W), jnp.float32)     # NCHW like PyTorch
    params = init_params(kp, Cin, Cout)

    out = jax.jit(basic_block_forward)(x, params)
    out = jax.block_until_ready(out)

    ref = reference_forward(x, params)
    # MXU inputs are bfloat16 (with f32 accumulation); compare at a bf16-appropriate tolerance.
    np.testing.assert_allclose(np.asarray(out), np.asarray(ref), rtol=2e-2, atol=3e-2)
    assert out.shape == (N, Cout, H, W)
    print("KERNEL_OK")
</pallas_src>

<mosaic_0001>
module attributes {stable_mosaic.version = 11 : i64} {
  func.func @kernel(%arg0: i32, %arg1: memref<1x432x144xbf16, #tpu.memory_space<vmem>>, %arg2: memref<1x256x16xbf16, #tpu.memory_space<vmem>>, %arg3: memref<144x32xbf16, #tpu.memory_space<vmem>>, %arg4: memref<3x3x32x32xbf16, #tpu.memory_space<vmem>>, %arg5: memref<16x32xbf16, #tpu.memory_space<vmem>>, %arg6: memref<1x32xf32, #tpu.memory_space<vmem>>, %arg7: memref<1x32xf32, #tpu.memory_space<vmem>>, %arg8: memref<1x32xf32, #tpu.memory_space<vmem>>, %arg9: memref<1x32xf32, #tpu.memory_space<vmem>>, %arg10: memref<1x32xf32, #tpu.memory_space<vmem>>, %arg11: memref<1x32xf32, #tpu.memory_space<vmem>>, %arg12: memref<32x32xf32, #tpu.memory_space<vmem>>, %arg13: memref<1x432xf32, #tpu.memory_space<vmem>>, %arg14: memref<432x1xf32, #tpu.memory_space<vmem>>, %arg15: memref<1x32x256xf32, #tpu.memory_space<vmem>>) attributes {dimension_semantics = [#tpu.dimension_semantics<parallel>], iteration_bounds = array<i64: 2>, scalar_prefetch = 0 : i64, scratch_operands = 0 : i64, tpu.core_type = #tpu.core_type<tc>, window_params = [{transform_indices = @transform_0, window_bounds = array<i64: 1, 432, 144>}, {transform_indices = @transform_1, window_bounds = array<i64: 1, 256, 16>}, {pipeline_mode = #tpu.pipeline_mode<synchronous>, transform_indices = @transform_2, window_bounds = array<i64: 144, 32>}, {pipeline_mode = #tpu.pipeline_mode<synchronous>, transform_indices = @transform_3, window_bounds = array<i64: 3, 3, 32, 32>}, {pipeline_mode = #tpu.pipeline_mode<synchronous>, transform_indices = @transform_4, window_bounds = array<i64: 16, 32>}, {pipeline_mode = #tpu.pipeline_mode<synchronous>, transform_indices = @transform_5, window_bounds = array<i64: 1, 32>}, {pipeline_mode = #tpu.pipeline_mode<synchronous>, transform_indices = @transform_6, window_bounds = array<i64: 1, 32>}, {pipeline_mode = #tpu.pipeline_mode<synchronous>, transform_indices = @transform_7, window_bounds = array<i64: 1, 32>}, {pipeline_mode = #tpu.pipeline_mode<synchronous>, transform_indices = @transform_8, window_bounds = array<i64: 1, 32>}, {pipeline_mode = #tpu.pipeline_mode<synchronous>, transform_indices = @transform_9, window_bounds = array<i64: 1, 32>}, {pipeline_mode = #tpu.pipeline_mode<synchronous>, transform_indices = @transform_10, window_bounds = array<i64: 1, 32>}, {pipeline_mode = #tpu.pipeline_mode<synchronous>, transform_indices = @transform_11, window_bounds = array<i64: 32, 32>}, {pipeline_mode = #tpu.pipeline_mode<synchronous>, transform_indices = @transform_12, window_bounds = array<i64: 1, 432>}, {pipeline_mode = #tpu.pipeline_mode<synchronous>, transform_indices = @transform_13, window_bounds = array<i64: 432, 1>}, {transform_indices = @transform_14, window_bounds = array<i64: 1, 32, 256>}]} {
    %c0 = arith.constant 0 : index
    %c0_0 = arith.constant 0 : index
    %0 = vector.load %arg12[%c0, %c0_0] : memref<32x32xf32, #tpu.memory_space<vmem>>, vector<32x32xf32>
    %c0_1 = arith.constant 0 : index
    %c0_2 = arith.constant 0 : index
    %1 = vector.load %arg13[%c0_1, %c0_2] : memref<1x432xf32, #tpu.memory_space<vmem>>, vector<1x432xf32>
    %c0_3 = arith.constant 0 : index
    %c0_4 = arith.constant 0 : index
    %c0_5 = arith.constant 0 : index
    %2 = vector.load %arg1[%c0_3, %c0_4, %c0_5] : memref<1x432x144xbf16, #tpu.memory_space<vmem>>, vector<1x432x144xbf16>
    %3 = vector.shape_cast %2 : vector<1x432x144xbf16> to vector<432x144xbf16>
    %c0_6 = arith.constant 0 : index
    %c0_7 = arith.constant 0 : index
    %4 = vector.load %arg3[%c0_6, %c0_7] : memref<144x32xbf16, #tpu.memory_space<vmem>>, vector<144x32xbf16>
    %cst = arith.constant dense<0.000000e+00> : vector<432x32xf32>
    %5 = tpu.matmul %3, %4, %cst {dimension_numbers = #tpu.dot_dimension_numbers<[1], [0], [0], [1], [0, 0, 1, 1], [], []>} : vector<432x144xbf16>, vector<144x32xbf16>, vector<432x32xf32> -> vector<432x32xf32>
    %c0_8 = arith.constant 0 : index
    %c0_9 = arith.constant 0 : index
    %6 = vector.load %arg6[%c0_8, %c0_9] : memref<1x32xf32, #tpu.memory_space<vmem>>, vector<1x32xf32>
    %c0_10 = arith.constant 0 : index
    %c0_11 = arith.constant 0 : index
    %7 = vector.load %arg7[%c0_10, %c0_11] : memref<1x32xf32, #tpu.memory_space<vmem>>, vector<1x32xf32>
    %cst_12 = arith.constant dense<0.000000e+00> : vector<1x32xf32>
    %8 = tpu.matmul %1, %5, %cst_12 {dimension_numbers = #tpu.dot_dimension_numbers<[1], [0], [0], [1], [0, 0, 1, 1], [], []>} : vector<1x432xf32>, vector<432x32xf32>, vector<1x32xf32> -> vector<1x32xf32>
    %9 = arith.mulf %5, %5 : vector<432x32xf32>
    %cst_13 = arith.constant dense<0.000000e+00> : vector<1x32xf32>
    %10 = tpu.matmul %1, %9, %cst_13 {dimension_numbers = #tpu.dot_dimension_numbers<[1], [0], [0], [1], [0, 0, 1, 1], [], []>} : vector<1x432xf32>, vector<432x32xf32>, vector<1x32xf32> -> vector<1x32xf32>
    %cst_14 = arith.constant dense<0.000000e+00> : vector<1x32xf32>
    %11 = tpu.matmul %8, %0, %cst_14 {dimension_numbers = #tpu.dot_dimension_numbers<[1], [0], [0], [1], [0, 0, 1, 1], [], []>} : vector<1x32xf32>, vector<32x32xf32>, vector<1x32xf32> -> vector<1x32xf32>
    %cst_15 = arith.constant dense<0.000000e+00> : vector<1x32xf32>
    %12 = tpu.matmul %10, %0, %cst_15 {dimension_numbers = #tpu.dot_dimension_numbers<[1], [0], [0], [1], [0, 0, 1, 1], [], []>} : vector<1x32xf32>, vector<32x32xf32>, vector<1x32xf32> -> vector<1x32xf32>
    %13 = arith.mulf %11, %11 : vector<1x32xf32>
    %14 = arith.subf %12, %13 : vector<1x32xf32>
    %cst_16 = arith.constant 9.99999974E-6 : f32
    %15 = vector.broadcast %cst_16 : f32 to vector<1x32xf32>
    %16 = arith.addf %14, %15 : vector<1x32xf32>
    %17 = math.rsqrt %16 : vector<1x32xf32>
    %18 = arith.mulf %6, %17 : vector<1x32xf32>
    %19 = arith.mulf %11, %18 : vector<1x32xf32>
    %20 = arith.subf %7, %19 : vector<1x32xf32>
    %21 = vector.broadcast %18 : vector<1x32xf32> to vector<432x32xf32>
    %22 = arith.mulf %5, %21 : vector<432x32xf32>
    %23 = vector.broadcast %20 : vector<1x32xf32> to vector<432x32xf32>
    %24 = arith.addf %22, %23 : vector<432x32xf32>
    %cst_17 = arith.constant 0.000000e+00 : f32
    %25 = vector.broadcast %cst_17 : f32 to vector<432x32xf32>
    %26 = arith.maximumf %24, %25 : vector<432x32xf32>
    %c0_18 = arith.constant 0 : index
    %c0_19 = arith.constant 0 : index
    %27 = vector.load %arg14[%c0_18, %c0_19] : memref<432x1xf32, #tpu.memory_space<vmem>>, vector<432x1xf32>
    %28 = vector.broadcast %27 : vector<432x1xf32> to vector<432x32xf32>
    %29 = arith.mulf %26, %28 : vector<432x32xf32>
    %30 = vector.shape_cast %29 : vector<432x32xf32> to vector<18x24x32xf32>
    %c0_20 = arith.constant 0 : index
    %c0_21 = arith.constant 0 : index
    %c0_22 = arith.constant 0 : index
    %c0_23 = arith.constant 0 : index
    %31 = vector.load %arg4[%c0_20, %c0_21, %c0_22, %c0_23] : memref<3x3x32x32xbf16, #tpu.memory_space<vmem>>, vector<3x3x32x32xbf16>
    %cst_24 = arith.constant 0.000000e+00 : f32
    %32 = vector.broadcast %cst_24 : f32 to vector<256x32xf32>
    %33 = vector.extract_strided_slice %30 {offsets = [0, 0, 0], sizes = [16, 16, 32], strides = [1, 1, 1]} : vector<18x24x32xf32> to vector<16x16x32xf32>
    %34 = vector.shape_cast %33 : vector<16x16x32xf32> to vector<256x32xf32>
    %35 = arith.truncf %34 : vector<256x32xf32> to vector<256x32xbf16>
    %36 = vector.extract_strided_slice %31 {offsets = [0, 0, 0, 0], sizes = [1, 1, 32, 32], strides = [1, 1, 1, 1]} : vector<3x3x32x32xbf16> to vector<1x1x32x32xbf16>
    %37 = vector.shape_cast %36 : vector<1x1x32x32xbf16> to vector<32x32xbf16>
    %cst_25 = arith.constant dense<0.000000e+00> : vector<256x32xf32>
    %38 = tpu.matmul %35, %37, %cst_25 {dimension_numbers = #tpu.dot_dimension_numbers<[1], [0], [0], [1], [0, 0, 1, 1], [], []>} : vector<256x32xbf16>, vector<32x32xbf16>, vector<256x32xf32> -> vector<256x32xf32>
    %39 = arith.addf %32, %38 : vector<256x32xf32>
    %40 = vector.extract_strided_slice %30 {offsets = [0, 1, 0], sizes = [16, 16, 32], strides = [1, 1, 1]} : vector<18x24x32xf32> to vector<16x16x32xf32>
    %41 = vector.shape_cast %40 : vector<16x16x32xf32> to vector<256x32xf32>
    %42 = arith.truncf %41 : vector<256x32xf32> to vector<256x32xbf16>
    %43 = vector.extract_strided_slice %31 {offsets = [0, 1, 0, 0], sizes = [1, 1, 32, 32], strides = [1, 1, 1, 1]} : vector<3x3x32x32xbf16> to vector<1x1x32x32xbf16>
    %44 = vector.shape_cast %43 : vector<1x1x32x32xbf16> to vector<32x32xbf16>
    %cst_26 = arith.constant dense<0.000000e+00> : vector<256x32xf32>
    %45 = tpu.matmul %42, %44, %cst_26 {dimension_numbers = #tpu.dot_dimension_numbers<[1], [0], [0], [1], [0, 0, 1, 1], [], []>} : vector<256x32xbf16>, vector<32x32xbf16>, vector<256x32xf32> -> vector<256x32xf32>
    %46 = arith.addf %39, %45 : vector<256x32xf32>
    %47 = vector.extract_strided_slice %30 {offsets = [0, 2, 0], sizes = [16, 16, 32], strides = [1, 1, 1]} : vector<18x24x32xf32> to vector<16x16x32xf32>
    %48 = vector.shape_cast %47 : vector<16x16x32xf32> to vector<256x32xf32>
    %49 = arith.truncf %48 : vector<256x32xf32> to vector<256x32xbf16>
    %50 = vector.extract_strided_slice %31 {offsets = [0, 2, 0, 0], sizes = [1, 1, 32, 32], strides = [1, 1, 1, 1]} : vector<3x3x32x32xbf16> to vector<1x1x32x32xbf16>
    %51 = vector.shape_cast %50 : vector<1x1x32x32xbf16> to vector<32x32xbf16>
    %cst_27 = arith.constant dense<0.000000e+00> : vector<256x32xf32>
    %52 = tpu.matmul %49, %51, %cst_27 {dimension_numbers = #tpu.dot_dimension_numbers<[1], [0], [0], [1], [0, 0, 1, 1], [], []>} : vector<256x32xbf16>, vector<32x32xbf16>, vector<256x32xf32> -> vector<256x32xf32>
    %53 = arith.addf %46, %52 : vector<256x32xf32>
    %54 = vector.extract_strided_slice %30 {offsets = [1, 0, 0], sizes = [16, 16, 32], strides = [1, 1, 1]} : vector<18x24x32xf32> to vector<16x16x32xf32>
    %55 = vector.shape_cast %54 : vector<16x16x32xf32> to vector<256x32xf32>
    %56 = arith.truncf %55 : vector<256x32xf32> to vector<256x32xbf16>
    %57 = vector.extract_strided_slice %31 {offsets = [1, 0, 0, 0], sizes = [1, 1, 32, 32], strides = [1, 1, 1, 1]} : vector<3x3x32x32xbf16> to vector<1x1x32x32xbf16>
    %58 = vector.shape_cast %57 : vector<1x1x32x32xbf16> to vector<32x32xbf16>
    %cst_28 = arith.constant dense<0.000000e+00> : vector<256x32xf32>
    %59 = tpu.matmul %56, %58, %cst_28 {dimension_numbers = #tpu.dot_dimension_numbers<[1], [0], [0], [1], [0, 0, 1, 1], [], []>} : vector<256x32xbf16>, vector<32x32xbf16>, vector<256x32xf32> -> vector<256x32xf32>
    %60 = arith.addf %53, %59 : vector<256x32xf32>
    %61 = vector.extract_strided_slice %30 {offsets = [1, 1, 0], sizes = [16, 16, 32], strides = [1, 1, 1]} : vector<18x24x32xf32> to vector<16x16x32xf32>
    %62 = vector.shape_cast %61 : vector<16x16x32xf32> to vector<256x32xf32>
    %63 = arith.truncf %62 : vector<256x32xf32> to vector<256x32xbf16>
    %64 = vector.extract_strided_slice %31 {offsets = [1, 1, 0, 0], sizes = [1, 1, 32, 32], strides = [1, 1, 1, 1]} : vector<3x3x32x32xbf16> to vector<1x1x32x32xbf16>
    %65 = vector.shape_cast %64 : vector<1x1x32x32xbf16> to vector<32x32xbf16>
    %cst_29 = arith.constant dense<0.000000e+00> : vector<256x32xf32>
    %66 = tpu.matmul %63, %65, %cst_29 {dimension_numbers = #tpu.dot_dimension_numbers<[1], [0], [0], [1], [0, 0, 1, 1], [], []>} : vector<256x32xbf16>, vector<32x32xbf16>, vector<256x32xf32> -> vector<256x32xf32>
    %67 = arith.addf %60, %66 : vector<256x32xf32>
    %68 = vector.extract_strided_slice %30 {offsets = [1, 2, 0], sizes = [16, 16, 32], strides = [1, 1, 1]} : vector<18x24x32xf32> to vector<16x16x32xf32>
    %69 = vector.shape_cast %68 : vector<16x16x32xf32> to vector<256x32xf32>
    %70 = arith.truncf %69 : vector<256x32xf32> to vector<256x32xbf16>
    %71 = vector.extract_strided_slice %31 {offsets = [1, 2, 0, 0], sizes = [1, 1, 32, 32], strides = [1, 1, 1, 1]} : vector<3x3x32x32xbf16> to vector<1x1x32x32xbf16>
    %72 = vector.shape_cast %71 : vector<1x1x32x32xbf16> to vector<32x32xbf16>
    %cst_30 = arith.constant dense<0.000000e+00> : vector<256x32xf32>
    %73 = tpu.matmul %70, %72, %cst_30 {dimension_numbers = #tpu.dot_dimension_numbers<[1], [0], [0], [1], [0, 0, 1, 1], [], []>} : vector<256x32xbf16>, vector<32x32xbf16>, vector<256x32xf32> -> vector<256x32xf32>
    %74 = arith.addf %67, %73 : vector<256x32xf32>
    %75 = vector.extract_strided_slice %30 {offsets = [2, 0, 0], sizes = [16, 16, 32], strides = [1, 1, 1]} : vector<18x24x32xf32> to vector<16x16x32xf32>
    %76 = vector.shape_cast %75 : vector<16x16x32xf32> to vector<256x32xf32>
    %77 = arith.truncf %76 : vector<256x32xf32> to vector<256x32xbf16>
    %78 = vector.extract_strided_slice %31 {offsets = [2, 0, 0, 0], sizes = [1, 1, 32, 32], strides = [1, 1, 1, 1]} : vector<3x3x32x32xbf16> to vector<1x1x32x32xbf16>
    %79 = vector.shape_cast %78 : vector<1x1x32x32xbf16> to vector<32x32xbf16>
    %cst_31 = arith.constant dense<0.000000e+00> : vector<256x32xf32>
    %80 = tpu.matmul %77, %79, %cst_31 {dimension_numbers = #tpu.dot_dimension_numbers<[1], [0], [0], [1], [0, 0, 1, 1], [], []>} : vector<256x32xbf16>, vector<32x32xbf16>, vector<256x32xf32> -> vector<256x32xf32>
    %81 = arith.addf %74, %80 : vector<256x32xf32>
    %82 = vector.extract_strided_slice %30 {offsets = [2, 1, 0], sizes = [16, 16, 32], strides = [1, 1, 1]} : vector<18x24x32xf32> to vector<16x16x32xf32>
    %83 = vector.shape_cast %82 : vector<16x16x32xf32> to vector<256x32xf32>
    %84 = arith.truncf %83 : vector<256x32xf32> to vector<256x32xbf16>
    %85 = vector.extract_strided_slice %31 {offsets = [2, 1, 0, 0], sizes = [1, 1, 32, 32], strides = [1, 1, 1, 1]} : vector<3x3x32x32xbf16> to vector<1x1x32x32xbf16>
    %86 = vector.shape_cast %85 : vector<1x1x32x32xbf16> to vector<32x32xbf16>
    %cst_32 = arith.constant dense<0.000000e+00> : vector<256x32xf32>
    %87 = tpu.matmul %84, %86, %cst_32 {dimension_numbers = #tpu.dot_dimension_numbers<[1], [0], [0], [1], [0, 0, 1, 1], [], []>} : vector<256x32xbf16>, vector<32x32xbf16>, vector<256x32xf32> -> vector<256x32xf32>
    %88 = arith.addf %81, %87 : vector<256x32xf32>
    %89 = vector.extract_strided_slice %30 {offsets = [2, 2, 0], sizes = [16, 16, 32], strides = [1, 1, 1]} : vector<18x24x32xf32> to vector<16x16x32xf32>
    %90 = vector.shape_cast %89 : vector<16x16x32xf32> to vector<256x32xf32>
    %91 = arith.truncf %90 : vector<256x32xf32> to vector<256x32xbf16>
    %92 = vector.extract_strided_slice %31 {offsets = [2, 2, 0, 0], sizes = [1, 1, 32, 32], strides = [1, 1, 1, 1]} : vector<3x3x32x32xbf16> to vector<1x1x32x32xbf16>
    %93 = vector.shape_cast %92 : vector<1x1x32x32xbf16> to vector<32x32xbf16>
    %cst_33 = arith.constant dense<0.000000e+00> : vector<256x32xf32>
    %94 = tpu.matmul %91, %93, %cst_33 {dimension_numbers = #tpu.dot_dimension_numbers<[1], [0], [0], [1], [0, 0, 1, 1], [], []>} : vector<256x32xbf16>, vector<32x32xbf16>, vector<256x32xf32> -> vector<256x32xf32>
    %95 = arith.addf %88, %94 : vector<256x32xf32>
    %cst_34 = arith.constant 1.000000e+00 : f32
    %96 = vector.broadcast %cst_34 : f32 to vector<1x256xf32>
    %c0_35 = arith.constant 0 : index
    %c0_36 = arith.constant 0 : index
    %97 = vector.load %arg8[%c0_35, %c0_36] : memref<1x32xf32, #tpu.memory_space<vmem>>, vector<1x32xf32>
    %c0_37 = arith.constant 0 : index
    %c0_38 = arith.constant 0 : index
    %98 = vector.load %arg9[%c0_37, %c0_38] : memref<1x32xf32, #tpu.memory_space<vmem>>, vector<1x32xf32>
    %cst_39 = arith.constant dense<0.000000e+00> : vector<1x32xf32>
    %99 = tpu.matmul %96, %95, %cst_39 {dimension_numbers = #tpu.dot_dimension_numbers<[1], [0], [0], [1], [0, 0, 1, 1], [], []>} : vector<1x256xf32>, vector<256x32xf32>, vector<1x32xf32> -> vector<1x32xf32>
    %100 = arith.mulf %95, %95 : vector<256x32xf32>
    %cst_40 = arith.constant dense<0.000000e+00> : vector<1x32xf32>
    %101 = tpu.matmul %96, %100, %cst_40 {dimension_numbers = #tpu.dot_dimension_numbers<[1], [0], [0], [1], [0, 0, 1, 1], [], []>} : vector<1x256xf32>, vector<256x32xf32>, vector<1x32xf32> -> vector<1x32xf32>
    %cst_41 = arith.constant dense<0.000000e+00> : vector<1x32xf32>
    %102 = tpu.matmul %99, %0, %cst_41 {dimension_numbers = #tpu.dot_dimension_numbers<[1], [0], [0], [1], [0, 0, 1, 1], [], []>} : vector<1x32xf32>, vector<32x32xf32>, vector<1x32xf32> -> vector<1x32xf32>
    %cst_42 = arith.constant dense<0.000000e+00> : vector<1x32xf32>
    %103 = tpu.matmul %101, %0, %cst_42 {dimension_numbers = #tpu.dot_dimension_numbers<[1], [0], [0], [1], [0, 0, 1, 1], [], []>} : vector<1x32xf32>, vector<32x32xf32>, vector<1x32xf32> -> vector<1x32xf32>
    %104 = arith.mulf %102, %102 : vector<1x32xf32>
    %105 = arith.subf %103, %104 : vector<1x32xf32>
    %cst_43 = arith.constant 9.99999974E-6 : f32
    %106 = vector.broadcast %cst_43 : f32 to vector<1x32xf32>
    %107 = arith.addf %105, %106 : vector<1x32xf32>
    %108 = math.rsqrt %107 : vector<1x32xf32>
    %109 = arith.mulf %97, %108 : vector<1x32xf32>
    %110 = arith.mulf %102, %109 : vector<1x32xf32>
    %111 = arith.subf %98, %110 : vector<1x32xf32>
    %112 = vector.broadcast %109 : vector<1x32xf32> to vector<256x32xf32>
    %113 = arith.mulf %95, %112 : vector<256x32xf32>
    %114 = vector.broadcast %111 : vector<1x32xf32> to vector<256x32xf32>
    %115 = arith.addf %113, %114 : vector<256x32xf32>
    %c0_44 = arith.constant 0 : index
    %c0_45 = arith.constant 0 : index
    %c0_46 = arith.constant 0 : index
    %116 = vector.load %arg2[%c0_44, %c0_45, %c0_46] : memref<1x256x16xbf16, #tpu.memory_space<vmem>>, vector<1x256x16xbf16>
    %117 = vector.shape_cast %116 : vector<1x256x16xbf16> to vector<256x16xbf16>
    %c0_47 = arith.constant 0 : index
    %c0_48 = arith.constant 0 : index
    %118 = vector.load %arg5[%c0_47, %c0_48] : memref<16x32xbf16, #tpu.memory_space<vmem>>, vector<16x32xbf16>
    %cst_49 = arith.constant dense<0.000000e+00> : vector<256x32xf32>
    %119 = tpu.matmul %117, %118, %cst_49 {dimension_numbers = #tpu.dot_dimension_numbers<[1], [0], [0], [1], [0, 0, 1, 1], [], []>} : vector<256x16xbf16>, vector<16x32xbf16>, vector<256x32xf32> -> vector<256x32xf32>
    %c0_50 = arith.constant 0 : index
    %c0_51 = arith.constant 0 : index
    %120 = vector.load %arg10[%c0_50, %c0_51] : memref<1x32xf32, #tpu.memory_space<vmem>>, vector<1x32xf32>
    %c0_52 = arith.constant 0 : index
    %c0_53 = arith.constant 0 : index
    %121 = vector.load %arg11[%c0_52, %c0_53] : memref<1x32xf32, #tpu.memory_space<vmem>>, vector<1x32xf32>
    %cst_54 = arith.constant dense<0.000000e+00> : vector<1x32xf32>
    %122 = tpu.matmul %96, %119, %cst_54 {dimension_numbers = #tpu.dot_dimension_numbers<[1], [0], [0], [1], [0, 0, 1, 1], [], []>} : vector<1x256xf32>, vector<256x32xf32>, vector<1x32xf32> -> vector<1x32xf32>
    %123 = arith.mulf %119, %119 : vector<256x32xf32>
    %cst_55 = arith.constant dense<0.000000e+00> : vector<1x32xf32>
    %124 = tpu.matmul %96, %123, %cst_55 {dimension_numbers = #tpu.dot_dimension_numbers<[1], [0], [0], [1], [0, 0, 1, 1], [], []>} : vector<1x256xf32>, vector<256x32xf32>, vector<1x32xf32> -> vector<1x32xf32>
    %cst_56 = arith.constant dense<0.000000e+00> : vector<1x32xf32>
    %125 = tpu.matmul %122, %0, %cst_56 {dimension_numbers = #tpu.dot_dimension_numbers<[1], [0], [0], [1], [0, 0, 1, 1], [], []>} : vector<1x32xf32>, vector<32x32xf32>, vector<1x32xf32> -> vector<1x32xf32>
    %cst_57 = arith.constant dense<0.000000e+00> : vector<1x32xf32>
    %126 = tpu.matmul %124, %0, %cst_57 {dimension_numbers = #tpu.dot_dimension_numbers<[1], [0], [0], [1], [0, 0, 1, 1], [], []>} : vector<1x32xf32>, vector<32x32xf32>, vector<1x32xf32> -> vector<1x32xf32>
    %127 = arith.mulf %125, %125 : vector<1x32xf32>
    %128 = arith.subf %126, %127 : vector<1x32xf32>
    %cst_58 = arith.constant 9.99999974E-6 : f32
    %129 = vector.broadcast %cst_58 : f32 to vector<1x32xf32>
    %130 = arith.addf %128, %129 : vector<1x32xf32>
    %131 = math.rsqrt %130 : vector<1x32xf32>
    %132 = arith.mulf %120, %131 : vector<1x32xf32>
    %133 = arith.mulf %125, %132 : vector<1x32xf32>
    %134 = arith.subf %121, %133 : vector<1x32xf32>
    %135 = vector.broadcast %132 : vector<1x32xf32> to vector<256x32xf32>
    %136 = arith.mulf %119, %135 : vector<256x32xf32>
    %137 = vector.broadcast %134 : vector<1x32xf32> to vector<256x32xf32>
    %138 = arith.addf %136, %137 : vector<256x32xf32>
    %139 = arith.addf %115, %138 : vector<256x32xf32>
    %cst_59 = arith.constant 0.000000e+00 : f32
    %140 = vector.broadcast %cst_59 : f32 to vector<256x32xf32>
    %141 = arith.maximumf %139, %140 : vector<256x32xf32>
    %142 = tpu.transpose %141, [1, 0] : vector<256x32xf32> -> vector<32x256xf32>
    %c0_60 = arith.constant 0 : index
    %c0_61 = arith.constant 0 : index
    %c0_62 = arith.constant 0 : index
    %143 = vector.load %arg15[%c0_60, %c0_61, %c0_62] : memref<1x32x256xf32, #tpu.memory_space<vmem>>, vector<1x32x256xf32>
    %144 = vector.shape_cast %143 : vector<1x32x256xf32> to vector<32x256xf32>
    %145 = vector.shape_cast %142 : vector<32x256xf32> to vector<1x32x256xf32>
    tpu.vector_store %arg15[%c0_60, %c0_61, %c0_62], %145 {strides = array<i32>} : memref<1x32x256xf32, #tpu.memory_space<vmem>>, vector<1x32x256xf32>,
    return
  }
  func.func @transform_0(%arg0: i32) -> (i32, i32, i32) {
    %c0_i32 = arith.constant 0 : i32
    %c0_i32_0 = arith.constant 0 : i32
    %c0_i32_1 = arith.constant 0 : i32
    return %arg0, %c0_i32, %c0_i32_0 : i32, i32, i32
  }
  func.func @transform_1(%arg0: i32) -> (i32, i32, i32) {
    %c0_i32 = arith.constant 0 : i32
    %c0_i32_0 = arith.constant 0 : i32
    %c0_i32_1 = arith.constant 0 : i32
    return %arg0, %c0_i32, %c0_i32_0 : i32, i32, i32
  }
  func.func @transform_2(%arg0: i32) -> (i32, i32) {
    %c0_i32 = arith.constant 0 : i32
    %c0_i32_0 = arith.constant 0 : i32
    %c0_i32_1 = arith.constant 0 : i32
    return %c0_i32, %c0_i32_0 : i32, i32
  }
  func.func @transform_3(%arg0: i32) -> (i32, i32, i32, i32) {
    %c0_i32 = arith.constant 0 : i32
    %c0_i32_0 = arith.constant 0 : i32
    %c0_i32_1 = arith.constant 0 : i32
    %c0_i32_2 = arith.constant 0 : i32
    %c0_i32_3 = arith.constant 0 : i32
    return %c0_i32, %c0_i32_0, %c0_i32_1, %c0_i32_2 : i32, i32, i32, i32
  }
  func.func @transform_4(%arg0: i32) -> (i32, i32) {
    %c0_i32 = arith.constant 0 : i32
    %c0_i32_0 = arith.constant 0 : i32
    %c0_i32_1 = arith.constant 0 : i32
    return %c0_i32, %c0_i32_0 : i32, i32
  }
  func.func @transform_5(%arg0: i32) -> (i32, i32) {
    %c0_i32 = arith.constant 0 : i32
    %c0_i32_0 = arith.constant 0 : i32
    %c0_i32_1 = arith.constant 0 : i32
    return %c0_i32, %c0_i32_0 : i32, i32
  }
  func.func @transform_6(%arg0: i32) -> (i32, i32) {
    %c0_i32 = arith.constant 0 : i32
    %c0_i32_0 = arith.constant 0 : i32
    %c0_i32_1 = arith.constant 0 : i32
    return %c0_i32, %c0_i32_0 : i32, i32
  }
  func.func @transform_7(%arg0: i32) -> (i32, i32) {
    %c0_i32 = arith.constant 0 : i32
    %c0_i32_0 = arith.constant 0 : i32
    %c0_i32_1 = arith.constant 0 : i32
    return %c0_i32, %c0_i32_0 : i32, i32
  }
  func.func @transform_8(%arg0: i32) -> (i32, i32) {
    %c0_i32 = arith.constant 0 : i32
    %c0_i32_0 = arith.constant 0 : i32
    %c0_i32_1 = arith.constant 0 : i32
    return %c0_i32, %c0_i32_0 : i32, i32
  }
  func.func @transform_9(%arg0: i32) -> (i32, i32) {
    %c0_i32 = arith.constant 0 : i32
    %c0_i32_0 = arith.constant 0 : i32
    %c0_i32_1 = arith.constant 0 : i32
    return %c0_i32, %c0_i32_0 : i32, i32
  }
  func.func @transform_10(%arg0: i32) -> (i32, i32) {
    %c0_i32 = arith.constant 0 : i32
    %c0_i32_0 = arith.constant 0 : i32
    %c0_i32_1 = arith.constant 0 : i32
    return %c0_i32, %c0_i32_0 : i32, i32
  }
  func.func @transform_11(%arg0: i32) -> (i32, i32) {
    %c0_i32 = arith.constant 0 : i32
    %c0_i32_0 = arith.constant 0 : i32
    %c0_i32_1 = arith.constant 0 : i32
    return %c0_i32, %c0_i32_0 : i32, i32
  }
  func.func @transform_12(%arg0: i32) -> (i32, i32) {
    %c0_i32 = arith.constant 0 : i32
    %c0_i32_0 = arith.constant 0 : i32
    %c0_i32_1 = arith.constant 0 : i32
    return %c0_i32, %c0_i32_0 : i32, i32
  }
  func.func @transform_13(%arg0: i32) -> (i32, i32) {
    %c0_i32 = arith.constant 0 : i32
    %c0_i32_0 = arith.constant 0 : i32
    %c0_i32_1 = arith.constant 0 : i32
    return %c0_i32, %c0_i32_0 : i32, i32
  }
  func.func @transform_14(%arg0: i32) -> (i32, i32, i32) {
    %c0_i32 = arith.constant 0 : i32
    %c0_i32_0 = arith.constant 0 : i32
    %c0_i32_1 = arith.constant 0 : i32
    return %arg0, %c0_i32, %c0_i32_0 : i32, i32, i32
  }
}

</mosaic_0001>

<llo_original>
// kernel: basic_block_forward.1
$region0: #{basic_block_forward.1}
  #allocation0 [shape = 'u32[]', space=smem, size = 0x4, offset = 0x4, fixed_abs, tag = 'smem constant byte address 0x4 - core index']
  #allocation1 [shape = 'u32[144,128]{1,0:T(1,128)}', space=vmem, size = 0x12000, scoped, tag = 'internal scratch']
  %s0 = inlined_call_operand.vmem [shape: bf16[2,432,144], index: 0, kind: input, shape index: {}]
  %s1 = inlined_call_operand.vmem [shape: bf16[2,256,16], index: 1, kind: input, shape index: {}]
  %s2 = inlined_call_operand.vmem [shape: bf16[144,32], index: 2, kind: input, shape index: {}]
  %s3 = inlined_call_operand.vmem [shape: bf16[3,3,32,32], index: 3, kind: input, shape index: {}]
  %s4 = inlined_call_operand.vmem [shape: bf16[16,32], index: 4, kind: input, shape index: {}]
  %s5 = inlined_call_operand.vmem [shape: f32[1,32], index: 5, kind: input, shape index: {}]
  %s6 = inlined_call_operand.vmem [shape: f32[1,32], index: 6, kind: input, shape index: {}]
  %s7 = inlined_call_operand.vmem [shape: f32[1,32], index: 7, kind: input, shape index: {}]
  %s8 = inlined_call_operand.vmem [shape: f32[1,32], index: 8, kind: input, shape index: {}]
  %s9 = inlined_call_operand.vmem [shape: f32[1,32], index: 9, kind: input, shape index: {}]
  %s10 = inlined_call_operand.vmem [shape: f32[1,32], index: 10, kind: input, shape index: {}]
  %s11 = inlined_call_operand.vmem [shape: f32[32,32], index: 11, kind: input, shape index: {}]
  %s12 = inlined_call_operand.vmem [shape: f32[1,432], index: 12, kind: input, shape index: {}]
  %s13 = inlined_call_operand.vmem [shape: f32[432,1], index: 13, kind: input, shape index: {}]
  %s14 = inlined_call_operand.vmem [shape: f32[2,32,256], index: 14, kind: output, shape index: {}]
  %s15 = sld [smem:[#allocation0]]
  $region89: #{basic_block_forward.1} parent=0
    _
  %s17 = ssub.s32 1, %s15
  %s18 = scalar_select 0, %s17, %s15
  loop: start=0, step=1, limit=4
  $region2: #{basic_block_forward.1} parent=0 // loop_pre_header
    _
  $region3: #{basic_block_forward.1} parent=0 // loop_header
    %s20 = sphi 0, %s24
    %p21 = scmp.ge.s32.totalorder %s20, 4
    %s30 = sphi 0, %s32
    %s33 = sphi 0, %s30
    %s34 = sphi 0, %s33
    %s50 = sphi 0, %s34
    %s56 = sphi 0, %s58
    %s59 = sphi 0, %s56
    %s60 = sphi 0, %s59
    %s76 = sphi 0, %s60
    %s80 = sphi 0, %s80
    %s82 = sphi 0, %s80
    %s83 = sphi 0, %s82
    %s97 = sphi 0, %s83
    %s101 = sphi 0, %s101
    %s103 = sphi 0, %s101
    %s104 = sphi 0, %s103
    %s118 = sphi 0, %s104
    %s122 = sphi 0, %s122
    %s124 = sphi 0, %s122
    %s125 = sphi 0, %s124
    %s139 = sphi 0, %s125
    %s143 = sphi 0, %s143
    %s145 = sphi 0, %s143
    %s146 = sphi 0, %s145
    %s160 = sphi 0, %s146
    %s164 = sphi 0, %s164
    %s166 = sphi 0, %s164
    %s167 = sphi 0, %s166
    %s181 = sphi 0, %s167
    %s185 = sphi 0, %s185
    %s187 = sphi 0, %s185
    %s188 = sphi 0, %s187
    %s202 = sphi 0, %s188
    %s206 = sphi 0, %s206
    %s208 = sphi 0, %s206
    %s209 = sphi 0, %s208
    %s223 = sphi 0, %s209
    %s227 = sphi 0, %s227
    %s229 = sphi 0, %s227
    %s230 = sphi 0, %s229
    %s244 = sphi 0, %s230
    %s248 = sphi 0, %s248
    %s250 = sphi 0, %s248
    %s251 = sphi 0, %s250
    %s265 = sphi 0, %s251
    %s269 = sphi 0, %s269
    %s271 = sphi 0, %s269
    %s272 = sphi 0, %s271
    %s286 = sphi 0, %s272
    %s290 = sphi 0, %s290
    %s292 = sphi 0, %s290
    %s293 = sphi 0, %s292
    %s307 = sphi 0, %s293
    %s311 = sphi 0, %s311
    %s313 = sphi 0, %s311
    %s314 = sphi 0, %s313
    %s328 = sphi 0, %s314
    %s334 = sphi 0, %s336
    %s337 = sphi 0, %s334
    %s338 = sphi 0, %s337
    %s354 = sphi 0, %s338
  $region4: #{basic_block_forward.1} parent=0 // loop_header_branch
    %23 = sbr.rel (%p21) target = $region8
  $region5: #{basic_block_forward.1} parent=0 // loop_body
    %s25 = ssub.s32 %s20, 1
    %s26 = ssub.s32 %s20, 2
    %s27 = sadd.s32 %s20, 1
    %s28 = ssub.s32 %s20, %s27
    %p29 = scmp.eq.s32.totalorder %s28, 0
    %s31 = sadd.s32 %s30, 1
    %s32 = scalar_select %p29, %s30, %s31
    %p35 = pneg %p29
    %p36 = scmp.eq.s32.totalorder %s20, 1
    %p37 = por %p35, %p36
    %p38 = scmp.ne.s32.totalorder %s30, %s33
    %p39 = scmp.eq.s32.totalorder %s20, 0
    %p40 = por %p38, %p39
    %p41 = scmp.ne.s32.totalorder %s30, %s33
    %p42 = scmp.eq.s32.totalorder %s25, 1
    %p43 = por %p41, %p42
    %p44 = scmp.ne.s32.totalorder %s33, %s34
    %p45 = scmp.eq.s32.totalorder %s25, 0
    %p46 = por %p44, %p45
    %p47 = scmp.ne.s32.totalorder %s33, %s34
    %p48 = scmp.eq.s32.totalorder %s26, 1
    %p49 = por %p47, %p48
    %p51 = scmp.ne.s32.totalorder %s34, %s50
    %p52 = scmp.eq.s32.totalorder %s26, 0
    %p53 = por %p51, %p52
    %s54 = ssub.s32 %s20, %s27
    %p55 = scmp.eq.s32.totalorder %s54, 0
    %s57 = sadd.s32 %s56, 1
    %s58 = scalar_select %p55, %s56, %s57
    %p61 = pneg %p55
    %p62 = scmp.eq.s32.totalorder %s20, 1
    %p63 = por %p61, %p62
    %p64 = scmp.ne.s32.totalorder %s56, %s59
    %p65 = scmp.eq.s32.totalorder %s20, 0
    %p66 = por %p64, %p65
    %p67 = scmp.ne.s32.totalorder %s56, %s59
    %p68 = scmp.eq.s32.totalorder %s25, 1
    %p69 = por %p67, %p68
    %p70 = scmp.ne.s32.totalorder %s59, %s60
    %p71 = scmp.eq.s32.totalorder %s25, 0
    %p72 = por %p70, %p71
    %p73 = scmp.ne.s32.totalorder %s59, %s60
    %p74 = scmp.eq.s32.totalorder %s26, 1
    %p75 = por %p73, %p74
    %p77 = scmp.ne.s32.totalorder %s60, %s76
    %p78 = scmp.eq.s32.totalorder %s26, 0
    %p79 = por %p77, %p78
    %s81 = sadd.s32 %s80, 1
    %p84 = scmp.eq.s32.totalorder %s20, 1
    %p85 = scmp.ne.s32.totalorder %s80, %s82
    %p86 = scmp.eq.s32.totalorder %s20, 0
    %p87 = por %p85, %p86
    %p88 = scmp.ne.s32.totalorder %s80, %s82
    %p89 = scmp.eq.s32.totalorder %s25, 1
    %p90 = por %p88, %p89
    %p91 = scmp.ne.s32.totalorder %s82, %s83
    %p92 = scmp.eq.s32.totalorder %s25, 0
    %p93 = por %p91, %p92
    %p94 = scmp.ne.s32.totalorder %s82, %s83
    %p95 = scmp.eq.s32.totalorder %s26, 1
    %p96 = por %p94, %p95
    %p98 = scmp.ne.s32.totalorder %s83, %s97
    %p99 = scmp.eq.s32.totalorder %s26, 0
    %p100 = por %p98, %p99
    %s102 = sadd.s32 %s101, 1
    %p105 = scmp.eq.s32.totalorder %s20, 1
    %p106 = scmp.ne.s32.totalorder %s101, %s103
    %p107 = scmp.eq.s32.totalorder %s20, 0
    %p108 = por %p106, %p107
    %p109 = scmp.ne.s32.totalorder %s101, %s103
    %p110 = scmp.eq.s32.totalorder %s25, 1
    %p111 = por %p109, %p110
    %p112 = scmp.ne.s32.totalorder %s103, %s104
    %p113 = scmp.eq.s32.totalorder %s25, 0
    %p114 = por %p112, %p113
    %p115 = scmp.ne.s32.totalorder %s103, %s104
    %p116 = scmp.eq.s32.totalorder %s26, 1
    %p117 = por %p115, %p116
    %p119 = scmp.ne.s32.totalorder %s104, %s118
    %p120 = scmp.eq.s32.totalorder %s26, 0
    %p121 = por %p119, %p120
    %s123 = sadd.s32 %s122, 1
    %p126 = scmp.eq.s32.totalorder %s20, 1
    %p127 = scmp.ne.s32.totalorder %s122, %s124
    %p128 = scmp.eq.s32.totalorder %s20, 0
    %p129 = por %p127, %p128
    %p130 = scmp.ne.s32.totalorder %s122, %s124
    %p131 = scmp.eq.s32.totalorder %s25, 1
    %p132 = por %p130, %p131
    %p133 = scmp.ne.s32.totalorder %s124, %s125
    %p134 = scmp.eq.s32.totalorder %s25, 0
    %p135 = por %p133, %p134
    %p136 = scmp.ne.s32.totalorder %s124, %s125
    %p137 = scmp.eq.s32.totalorder %s26, 1
    %p138 = por %p136, %p137
    %p140 = scmp.ne.s32.totalorder %s125, %s139
    %p141 = scmp.eq.s32.totalorder %s26, 0
    %p142 = por %p140, %p141
    %s144 = sadd.s32 %s143, 1
    %p147 = scmp.eq.s32.totalorder %s20, 1
    %p148 = scmp.ne.s32.totalorder %s143, %s145
    %p149 = scmp.eq.s32.totalorder %s20, 0
    %p150 = por %p148, %p149
    %p151 = scmp.ne.s32.totalorder %s143, %s145
    %p152 = scmp.eq.s32.totalorder %s25, 1
    %p153 = por %p151, %p152
    %p154 = scmp.ne.s32.totalorder %s145, %s146
    %p155 = scmp.eq.s32.totalorder %s25, 0
    %p156 = por %p154, %p155
    %p157 = scmp.ne.s32.totalorder %s145, %s146
    %p158 = scmp.eq.s32.totalorder %s26, 1
    %p159 = por %p157, %p158
    %p161 = scmp.ne.s32.totalorder %s146, %s160
    %p162 = scmp.eq.s32.totalorder %s26, 0
    %p163 = por %p161, %p162
    %s165 = sadd.s32 %s164, 1
    %p168 = scmp.eq.s32.totalorder %s20, 1
    %p169 = scmp.ne.s32.totalorder %s164, %s166
    %p170 = scmp.eq.s32.totalorder %s20, 0
    %p171 = por %p169, %p170
    %p172 = scmp.ne.s32.totalorder %s164, %s166
    %p173 = scmp.eq.s32.totalorder %s25, 1
    %p174 = por %p172, %p173
    %p175 = scmp.ne.s32.totalorder %s166, %s167
    %p176 = scmp.eq.s32.totalorder %s25, 0
    %p177 = por %p175, %p176
    %p178 = scmp.ne.s32.totalorder %s166, %s167
    %p179 = scmp.eq.s32.totalorder %s26, 1
    %p180 = por %p178, %p179
    %p182 = scmp.ne.s32.totalorder %s167, %s181
    %p183 = scmp.eq.s32.totalorder %s26, 0
    %p184 = por %p182, %p183
    %s186 = sadd.s32 %s185, 1
    %p189 = scmp.eq.s32.totalorder %s20, 1
    %p190 = scmp.ne.s32.totalorder %s185, %s187
    %p191 = scmp.eq.s32.totalorder %s20, 0
    %p192 = por %p190, %p191
    %p193 = scmp.ne.s32.totalorder %s185, %s187
    %p194 = scmp.eq.s32.totalorder %s25, 1
    %p195 = por %p193, %p194
    %p196 = scmp.ne.s32.totalorder %s187, %s188
    %p197 = scmp.eq.s32.totalorder %s25, 0
    %p198 = por %p196, %p197
    %p199 = scmp.ne.s32.totalorder %s187, %s188
    %p200 = scmp.eq.s32.totalorder %s26, 1
    %p201 = por %p199, %p200
    %p203 = scmp.ne.s32.totalorder %s188, %s202
    %p204 = scmp.eq.s32.totalorder %s26, 0
    %p205 = por %p203, %p204
    %s207 = sadd.s32 %s206, 1
    %p210 = scmp.eq.s32.totalorder %s20, 1
    %p211 = scmp.ne.s32.totalorder %s206, %s208
    %p212 = scmp.eq.s32.totalorder %s20, 0
    %p213 = por %p211, %p212
    %p214 = scmp.ne.s32.totalorder %s206, %s208
    %p215 = scmp.eq.s32.totalorder %s25, 1
    %p216 = por %p214, %p215
    %p217 = scmp.ne.s32.totalorder %s208, %s209
    %p218 = scmp.eq.s32.totalorder %s25, 0
    %p219 = por %p217, %p218
    %p220 = scmp.ne.s32.totalorder %s208, %s209
    %p221 = scmp.eq.s32.totalorder %s26, 1
    %p222 = por %p220, %p221
    %p224 = scmp.ne.s32.totalorder %s209, %s223
    %p225 = scmp.eq.s32.totalorder %s26, 0
    %p226 = por %p224, %p225
    %s228 = sadd.s32 %s227, 1
    %p231 = scmp.eq.s32.totalorder %s20, 1
    %p232 = scmp.ne.s32.totalorder %s227, %s229
    %p233 = scmp.eq.s32.totalorder %s20, 0
    %p234 = por %p232, %p233
    %p235 = scmp.ne.s32.totalorder %s227, %s229
    %p236 = scmp.eq.s32.totalorder %s25, 1
    %p237 = por %p235, %p236
    %p238 = scmp.ne.s32.totalorder %s229, %s230
    %p239 = scmp.eq.s32.totalorder %s25, 0
    %p240 = por %p238, %p239
    %p241 = scmp.ne.s32.totalorder %s229, %s230
    %p242 = scmp.eq.s32.totalorder %s26, 1
    %p243 = por %p241, %p242
    %p245 = scmp.ne.s32.totalorder %s230, %s244
    %p246 = scmp.eq.s32.totalorder %s26, 0
    %p247 = por %p245, %p246
    %s249 = sadd.s32 %s248, 1
    %p252 = scmp.eq.s32.totalorder %s20, 1
    %p253 = scmp.ne.s32.totalorder %s248, %s250
    %p254 = scmp.eq.s32.totalorder %s20, 0
    %p255 = por %p253, %p254
    %p256 = scmp.ne.s32.totalorder %s248, %s250
    %p257 = scmp.eq.s32.totalorder %s25, 1
    %p258 = por %p256, %p257
    %p259 = scmp.ne.s32.totalorder %s250, %s251
    %p260 = scmp.eq.s32.totalorder %s25, 0
    %p261 = por %p259, %p260
    %p262 = scmp.ne.s32.totalorder %s250, %s251
    %p263 = scmp.eq.s32.totalorder %s26, 1
    %p264 = por %p262, %p263
    %p266 = scmp.ne.s32.totalorder %s251, %s265
    %p267 = scmp.eq.s32.totalorder %s26, 0
    %p268 = por %p266, %p267
    %s270 = sadd.s32 %s269, 1
    %p273 = scmp.eq.s32.totalorder %s20, 1
    %p274 = scmp.ne.s32.totalorder %s269, %s271
    %p275 = scmp.eq.s32.totalorder %s20, 0
    %p276 = por %p274, %p275
    %p277 = scmp.ne.s32.totalorder %s269, %s271
    %p278 = scmp.eq.s32.totalorder %s25, 1
    %p279 = por %p277, %p278
    %p280 = scmp.ne.s32.totalorder %s271, %s272
    %p281 = scmp.eq.s32.totalorder %s25, 0
    %p282 = por %p280, %p281
    %p283 = scmp.ne.s32.totalorder %s271, %s272
    %p284 = scmp.eq.s32.totalorder %s26, 1
    %p285 = por %p283, %p284
    %p287 = scmp.ne.s32.totalorder %s272, %s286
    %p288 = scmp.eq.s32.totalorder %s26, 0
    %p289 = por %p287, %p288
    %s291 = sadd.s32 %s290, 1
    %p294 = scmp.eq.s32.totalorder %s20, 1
    %p295 = scmp.ne.s32.totalorder %s290, %s292
    %p296 = scmp.eq.s32.totalorder %s20, 0
    %p297 = por %p295, %p296
    %p298 = scmp.ne.s32.totalorder %s290, %s292
    %p299 = scmp.eq.s32.totalorder %s25, 1
    %p300 = por %p298, %p299
    %p301 = scmp.ne.s32.totalorder %s292, %s293
    %p302 = scmp.eq.s32.totalorder %s25, 0
    %p303 = por %p301, %p302
    %p304 = scmp.ne.s32.totalorder %s292, %s293
    %p305 = scmp.eq.s32.totalorder %s26, 1
    %p306 = por %p304, %p305
    %p308 = scmp.ne.s32.totalorder %s293, %s307
    %p309 = scmp.eq.s32.totalorder %s26, 0
    %p310 = por %p308, %p309
    %s312 = sadd.s32 %s311, 1
    %p315 = scmp.eq.s32.totalorder %s20, 1
    %p316 = scmp.ne.s32.totalorder %s311, %s313
    %p317 = scmp.eq.s32.totalorder %s20, 0
    %p318 = por %p316, %p317
    %p319 = scmp.ne.s32.totalorder %s311, %s313
    %p320 = scmp.eq.s32.totalorder %s25, 1
    %p321 = por %p319, %p320
    %p322 = scmp.ne.s32.totalorder %s313, %s314
    %p323 = scmp.eq.s32.totalorder %s25, 0
    %p324 = por %p322, %p323
    %p325 = scmp.ne.s32.totalorder %s313, %s314
    %p326 = scmp.eq.s32.totalorder %s26, 1
    %p327 = por %p325, %p326
    %p329 = scmp.ne.s32.totalorder %s314, %s328
    %p330 = scmp.eq.s32.totalorder %s26, 0
    %p331 = por %p329, %p330
    %s332 = ssub.s32 %s20, %s27
    %p333 = scmp.eq.s32.totalorder %s332, 0
    %s335 = sadd.s32 %s334, 1
    %s336 = scalar_select %p333, %s334, %s335
    %p339 = pneg %p333
    %p340 = scmp.eq.s32.totalorder %s20, 1
    %p341 = por %p339, %p340
    %p342 = scmp.ne.s32.totalorder %s334, %s337
    %p343 = scmp.eq.s32.totalorder %s20, 0
    %p344 = por %p342, %p343
    %p345 = scmp.ne.s32.totalorder %s334, %s337
    %p346 = scmp.eq.s32.totalorder %s25, 1
    %p347 = por %p345, %p346
    %p348 = scmp.ne.s32.totalorder %s337, %s338
    %p349 = scmp.eq.s32.totalorder %s25, 0
    %p350 = por %p348, %p349
    %p351 = scmp.ne.s32.totalorder %s337, %s338
    %p352 = scmp.eq.s32.totalorder %s26, 1
    %p353 = por %p351, %p352
    %p355 = scmp.ne.s32.totalorder %s338, %s354
    %p356 = scmp.eq.s32.totalorder %s26, 0
    %p357 = por %p355, %p356
    %p358 = scmp.le.s32.totalorder 1, %s20
    %p359 = scmp.lt.s32.totalorder %s20, 3
    %p360 = pnand %p358, %p359
    %p361 = pneg %p360
    // Predicated region
    $region9: #{basic_block_forward.1} parent=5 // pred_check
      _
    $region10: #{basic_block_forward.1} parent=5 // pred_check_branch
      %363 = sbr.rel (%p360) target = $region12
    $region11: #{basic_block_forward.1} parent=5 // pred_region
      %s364 = ssub.s32 %s20, 1
      // Predicated region
      $region13: #{basic_block_forward.1} parent=11 // pred_check
        %p365 = pneg %p93
      $region14: #{basic_block_forward.1} parent=11 // pred_check_branch
        %367 = sbr.rel (%p365) target = $region16
      $region15: #{basic_block_forward.1} parent=11 // pred_region
        _
      $region16: #{basic_block_forward.1} parent=11 // pred_fallthru
        _
      // Predicated region
      $region17: #{basic_block_forward.1} parent=11 // pred_check
        %p368 = pneg %p114
      $region18: #{basic_block_forward.1} parent=11 // pred_check_branch
        %370 = sbr.rel (%p368) target = $region20
      $region19: #{basic_block_forward.1} parent=11 // pred_region
        _
      $region20: #{basic_block_forward.1} parent=11 // pred_fallthru
        _
      // Predicated region
      $region21: #{basic_block_forward.1} parent=11 // pred_check
        %p371 = pneg %p135
      $region22: #{basic_block_forward.1} parent=11 // pred_check_branch
        %373 = sbr.rel (%p371) target = $region24
      $region23: #{basic_block_forward.1} parent=11 // pred_region
        _
      $region24: #{basic_block_forward.1} parent=11 // pred_fallthru
        _
      // Predicated region
      $region25: #{basic_block_forward.1} parent=11 // pred_check
        %p374 = pneg %p156
      $region26: #{basic_block_forward.1} parent=11 // pred_check_branch
        %376 = sbr.rel (%p374) target = $region28
      $region27: #{basic_block_forward.1} parent=11 // pred_region
        _
      $region28: #{basic_block_forward.1} parent=11 // pred_fallthru
        _
      // Predicated region
      $region29: #{basic_block_forward.1} parent=11 // pred_check
        %p377 = pneg %p177
      $region30: #{basic_block_forward.1} parent=11 // pred_check_branch
        %379 = sbr.rel (%p377) target = $region32
      $region31: #{basic_block_forward.1} parent=11 // pred_region
        _
      $region32: #{basic_block_forward.1} parent=11 // pred_fallthru
        _
      // Predicated region
      $region33: #{basic_block_forward.1} parent=11 // pred_check
        %p380 = pneg %p198
      $region34: #{basic_block_forward.1} parent=11 // pred_check_branch
        %382 = sbr.rel (%p380) target = $region36
      $region35: #{basic_block_forward.1} parent=11 // pred_region
        _
      $region36: #{basic_block_forward.1} parent=11 // pred_fallthru
        _
      // Predicated region
      $region37: #{basic_block_forward.1} parent=11 // pred_check
        %p383 = pneg %p219
      $region38: #{basic_block_forward.1} parent=11 // pred_check_branch
        %385 = sbr.rel (%p383) target = $region40
      $region39: #{basic_block_forward.1} parent=11 // pred_region
        _
      $region40: #{basic_block_forward.1} parent=11 // pred_fallthru
        _
      // Predicated region
      $region41: #{basic_block_forward.1} parent=11 // pred_check
        %p386 = pneg %p240
      $region42: #{basic_block_forward.1} parent=11 // pred_check_branch
        %388 = sbr.rel (%p386) target = $region44
      $region43: #{basic_block_forward.1} parent=11 // pred_region
        _
      $region44: #{basic_block_forward.1} parent=11 // pred_fallthru
        _
      // Predicated region
      $region45: #{basic_block_forward.1} parent=11 // pred_check
        %p389 = pneg %p261
      $region46: #{basic_block_forward.1} parent=11 // pred_check_branch
        %391 = sbr.rel (%p389) target = $region48
      $region47: #{basic_block_forward.1} parent=11 // pred_region
        _
      $region48: #{basic_block_forward.1} parent=11 // pred_fallthru
        _
      // Predicated region
      $region49: #{basic_block_forward.1} parent=11 // pred_check
        %p392 = pneg %p282
      $region50: #{basic_block_forward.1} parent=11 // pred_check_branch
        %394 = sbr.rel (%p392) target = $region52
      $region51: #{basic_block_forward.1} parent=11 // pred_region
        _
      $region52: #{basic_block_forward.1} parent=11 // pred_fallthru
        _
      // Predicated region
      $region53: #{basic_block_forward.1} parent=11 // pred_check
        %p395 = pneg %p303
      $region54: #{basic_block_forward.1} parent=11 // pred_check_branch
        %397 = sbr.rel (%p395) target = $region56
      $region55: #{basic_block_forward.1} parent=11 // pred_region
        _
      $region56: #{basic_block_forward.1} parent=11 // pred_fallthru
        _
      // Predicated region
      $region57: #{basic_block_forward.1} parent=11 // pred_check
        %p398 = pneg %p324
      $region58: #{basic_block_forward.1} parent=11 // pred_check_branch
        %400 = sbr.rel (%p398) target = $region60
      $region59: #{basic_block_forward.1} parent=11 // pred_region
        _
      $region60: #{basic_block_forward.1} parent=11 // pred_fallthru
        _
    $region12: #{basic_block_forward.1} parent=5 // pred_fallthru
      _
    %p401 = scmp.lt.s32.totalorder %s20, 2
    // Predicated region
    $region61: #{basic_block_forward.1} parent=5 // pred_check
      %p402 = pneg %p401
    $region62: #{basic_block_forward.1} parent=5 // pred_check_branch
      %404 = sbr.rel (%p402) target = $region64
    $region63: #{basic_block_forward.1} parent=5 // pred_region
      // Predicated region
      $region65: #{basic_block_forward.1} parent=63 // pred_check
        %p405 = pneg %p40
      $region66: #{basic_block_forward.1} parent=63 // pred_check_branch
        %407 = sbr.rel (%p405) target = $region68
      $region67: #{basic_block_forward.1} parent=63 // pred_region
        %p408 = scmp.lt.s32.totalorder %s20, 1
        %s409 = scalar_select %p408, %s20, 1
        %s410 = smul.addr %s409, 108
        %s411 = smul.addr %s410, 4
        %s412 = scalar_lea.vmem %s0, %s411
      $region68: #{basic_block_forward.1} parent=63 // pred_fallthru
        _
      // Predicated region
      $region69: #{basic_block_forward.1} parent=63 // pred_check
        %p413 = pneg %p66
      $region70: #{basic_block_forward.1} parent=63 // pred_check_branch
        %415 = sbr.rel (%p413) target = $region72
      $region71: #{basic_block_forward.1} parent=63 // pred_region
        %p416 = scmp.lt.s32.totalorder %s20, 1
        %s417 = scalar_select %p416, %s20, 1
        %s418 = smul.addr %s417, 32
        %s419 = smul.addr %s418, 4
        %s420 = scalar_lea.vmem %s1, %s419
      $region72: #{basic_block_forward.1} parent=63 // pred_fallthru
        _
    $region64: #{basic_block_forward.1} parent=5 // pred_fallthru
      _
    %p421 = scmp.le.s32.totalorder 1, %s20
    %p422 = scmp.lt.s32.totalorder %s20, 3
    %p423 = pnand %p421, %p422
    %p424 = pneg %p423
    // Predicated region
    $region73: #{basic_block_forward.1} parent=5 // pred_check
      _
    $region74: #{basic_block_forward.1} parent=5 // pred_check_branch
      %426 = sbr.rel (%p423) target = $region76
    $region75: #{basic_block_forward.1} parent=5 // pred_region
      %s427 = ssub.s32 %s20, 1
      %p428 = scmp.lt.s32.totalorder %s25, 1
      %s429 = scalar_select %p428, %s25, 1
      %s430 = smul.addr %s429, 108
      %s431 = smul.addr %s430, 4
      %s432 = scalar_lea.vmem %s0, %s431
      %p433 = pneg %p46
      %p434 = pneg %p43
      %p435 = scmp.lt.s32.totalorder %s25, 1
      %s436 = scalar_select %p435, %s25, 1
      %s437 = smul.addr %s436, 32
      %s438 = smul.addr %s437, 4
      %s439 = scalar_lea.vmem %s1, %s438
      %p440 = pneg %p72
      %p441 = pneg %p69
      %p442 = pneg %p93
      %p443 = pneg %p90
      %p444 = pneg %p114
      %p445 = pneg %p111
      %p446 = pneg %p135
      %p447 = pneg %p132
      %p448 = pneg %p156
      %p449 = pneg %p153
      %p450 = pneg %p177
      %p451 = pneg %p174
      %p452 = pneg %p198
      %p453 = pneg %p195
      %p454 = pneg %p219
      %p455 = pneg %p216
      %p456 = pneg %p240
      %p457 = pneg %p237
      %p458 = pneg %p261
      %p459 = pneg %p258
      %p460 = pneg %p282
      %p461 = pneg %p279
      %p462 = pneg %p303
      %p463 = pneg %p300
      %p464 = pneg %p324
      %p465 = pneg %p321
      %p466 = pneg %p350
      %p467 = pneg %p347
      %p468 = scmp.lt.s32.totalorder %s25, 1
      %s469 = scalar_select %p468, %s25, 1
      %s470 = smul.addr %s469, 8
      %s471 = smul.addr %s470, 8
      %s472 = scalar_lea.vmem %s14, %s471
      %p473 = scmp.lt.s32.totalorder %s25, 1
      %s474 = scalar_select %p473, %s25, 1
      %s475 = smul.addr %s474, 108
      %s476 = smul.addr %s475, 4
      %s477 = scalar_lea.vmem %s0, %s476
      %p478 = scmp.lt.s32.totalorder %s25, 1
      %s479 = scalar_select %p478, %s25, 1
      %s480 = smul.addr %s479, 32
      %s481 = smul.addr %s480, 4
      %s482 = scalar_lea.vmem %s1, %s481
      %p483 = scmp.lt.s32.totalorder %s25, 1
      %s484 = scalar_select %p483, %s25, 1
      %s485 = smul.addr %s484, 8
      %s486 = smul.addr %s485, 8
      %s487 = scalar_lea.vmem %s14, %s486
      %v489 = vld [vmem:[%s11] sm:$0xff]
      %v490 = vld [vmem:[%s11 + $0x8] sm:$0xff]
      %v491 = vld [vmem:[%s11 + $0x10] sm:$0xff]
      %v492 = vld [vmem:[%s11 + $0x18] sm:$0xff]
      %v493 = vld [vmem:[%s12] sm:$0xf]
      %v494 = vld [vmem:[%s477] sm:$0xff]
      %v495 = vld [vmem:[%s477 + $0x8] sm:$0xff]
      %v496 = vld [vmem:[%s477 + $0x10] sm:$0xff]
      %v497 = vld [vmem:[%s477 + $0x18] sm:$0xff]
      %v498 = vld [vmem:[%s477 + $0x20] sm:$0xff]
      %v499 = vld [vmem:[%s477 + $0x28] sm:$0xff]
      %v500 = vld [vmem:[%s477 + $0x30] sm:$0xff]
      %v501 = vld [vmem:[%s477 + $0x38] sm:$0xff]
      %v502 = vld [vmem:[%s477 + $0x40] sm:$0xff]
      %v503 = vld [vmem:[%s477 + $0x48] sm:$0xff]
      %v504 = vld [vmem:[%s477 + $0x50] sm:$0xff]
      %v505 = vld [vmem:[%s477 + $0x58] sm:$0xff]
      %v506 = vld [vmem:[%s477 + $0x60] sm:$0xff]
      %v507 = vld [vmem:[%s477 + $0x68] sm:$0xff]
      %v508 = vld [vmem:[%s477 + $0x70] sm:$0xff]
      %v509 = vld [vmem:[%s477 + $0x78] sm:$0xff]
      %v510 = vld [vmem:[%s477 + $0x80] sm:$0xff]
      %v511 = vld [vmem:[%s477 + $0x88] sm:$0xff]
      %v512 = vld [vmem:[%s477 + $0x90] sm:$0xff]
      %v513 = vld [vmem:[%s477 + $0x98] sm:$0xff]
      %v514 = vld [vmem:[%s477 + $0xa0] sm:$0xff]
      %v515 = vld [vmem:[%s477 + $0xa8] sm:$0xff]
      %v516 = vld [vmem:[%s477 + $0xb0] sm:$0xff]
      %v517 = vld [vmem:[%s477 + $0xb8] sm:$0xff]
      %v518 = vld [vmem:[%s477 + $0xc0] sm:$0xff]
      %v519 = vld [vmem:[%s477 + $0xc8] sm:$0xff]
      %v520 = vld [vmem:[%s477 + $0xd0] sm:$0xff]
      %v521 = vld [vmem:[%s477 + $0xd8] sm:$0xff]
      %v522 = vld [vmem:[%s477 + $0xe0] sm:$0xff]
      %v523 = vld [vmem:[%s477 + $0xe8] sm:$0xff]
      %v524 = vld [vmem:[%s477 + $0xf0] sm:$0xff]
      %v525 = vld [vmem:[%s477 + $0xf8] sm:$0xff]
      %v526 = vld [vmem:[%s477 + $0x100] sm:$0xff]
      %v527 = vld [vmem:[%s477 + $0x108] sm:$0xff]
      %v528 = vld [vmem:[%s477 + $0x110] sm:$0xff]
      %v529 = vld [vmem:[%s477 + $0x118] sm:$0xff]
      %v530 = vld [vmem:[%s477 + $0x120] sm:$0xff]
      %v531 = vld [vmem:[%s477 + $0x128] sm:$0xff]
      %v532 = vld [vmem:[%s477 + $0x130] sm:$0xff]
      %v533 = vld [vmem:[%s477 + $0x138] sm:$0xff]
      %v534 = vld [vmem:[%s477 + $0x140] sm:$0xff]
      %v535 = vld [vmem:[%s477 + $0x148] sm:$0xff]
      %v536 = vld [vmem:[%s477 + $0x150] sm:$0xff]
      %v537 = vld [vmem:[%s477 + $0x158] sm:$0xff]
      %v538 = vld [vmem:[%s477 + $0x160] sm:$0xff]
      %v539 = vld [vmem:[%s477 + $0x168] sm:$0xff]
      %v540 = vld [vmem:[%s477 + $0x170] sm:$0xff]
      %v541 = vld [vmem:[%s477 + $0x178] sm:$0xff]
      %v542 = vld [vmem:[%s477 + $0x180] sm:$0xff]
      %v543 = vld [vmem:[%s477 + $0x188] sm:$0xff]
      %v544 = vld [vmem:[%s477 + $0x190] sm:$0xff]
      %v545 = vld [vmem:[%s477 + $0x198] sm:$0xff]
      %v546 = vld [vmem:[%s477 + $0x1a0] sm:$0xff]
      %v547 = vld [vmem:[%s477 + $0x1a8] sm:$0xff]
      %v548 = vld [vmem:[%s2] sm:$0xf]
      %v549 = vld [vmem:[%s2 + $0x4] sm:$0xf]
      %v550 = vld [vmem:[%s2 + $0x8] sm:$0xf]
      %v551 = vld [vmem:[%s2 + $0xc] sm:$0xf]
      %v552 = vld [vmem:[%s2 + $0x10] sm:$0xf]
      %v553 = vld [vmem:[%s2 + $0x14] sm:$0xf]
      %v554 = vld [vmem:[%s2 + $0x18] sm:$0xf]
      %v555 = vld [vmem:[%s2 + $0x1c] sm:$0xf]
      %v556 = vld [vmem:[%s2 + $0x20] sm:$0xf]
      %v557 = vld [vmem:[%s2 + $0x24] sm:$0xf]
      %v558 = vld [vmem:[%s2 + $0x28] sm:$0xf]
      %v559 = vld [vmem:[%s2 + $0x2c] sm:$0xf]
      %v560 = vld [vmem:[%s2 + $0x30] sm:$0xf]
      %v561 = vld [vmem:[%s2 + $0x34] sm:$0xf]
      %v562 = vld [vmem:[%s2 + $0x38] sm:$0xf]
      %v563 = vld [vmem:[%s2 + $0x3c] sm:$0xf]
      %v564 = vld [vmem:[%s2 + $0x40] sm:$0xf]
      %v565 = vld [vmem:[%s2 + $0x44] sm:$0xf]
      %v620 = vunpack.c.l.b16 %v494
      %v621 = vunpack.c.h.b16 %v494
      %v622 = vunpack.c.l.b16 %v495
      %v623 = vunpack.c.h.b16 %v495
      %v624 = vunpack.c.l.b16 %v496
      %v625 = vunpack.c.h.b16 %v496
      %v626 = vunpack.c.l.b16 %v497
      %v627 = vunpack.c.h.b16 %v497
      %v628 = vunpack.c.l.b16 %v498
      %v629 = vunpack.c.h.b16 %v498
      %v630 = vunpack.c.l.b16 %v499
      %v631 = vunpack.c.h.b16 %v499
      %v632 = vunpack.c.l.b16 %v500
      %v633 = vunpack.c.h.b16 %v500
      %v634 = vunpack.c.l.b16 %v501
      %v635 = vunpack.c.h.b16 %v501
      %v636 = vunpack.c.l.b16 %v502
      %v637 = vunpack.c.h.b16 %v502
      %v638 = vunpack.c.l.b16 %v503
      %v639 = vunpack.c.h.b16 %v503
      %v640 = vunpack.c.l.b16 %v504
      %v641 = vunpack.c.h.b16 %v504
      %v642 = vunpack.c.l.b16 %v505
      %v643 = vunpack.c.h.b16 %v505
      %v644 = vunpack.c.l.b16 %v506
      %v645 = vunpack.c.h.b16 %v506
      %v646 = vunpack.c.l.b16 %v507
      %v647 = vunpack.c.h.b16 %v507
      %v648 = vunpack.c.l.b16 %v508
      %v649 = vunpack.c.h.b16 %v508
      %v650 = vunpack.c.l.b16 %v509
      %v651 = vunpack.c.h.b16 %v509
      %v652 = vunpack.c.l.b16 %v510
      %v653 = vunpack.c.h.b16 %v510
      %v654 = vunpack.c.l.b16 %v511
      %v655 = vunpack.c.h.b16 %v511
      %v656 = vunpack.c.l.b16 %v512
      %v657 = vunpack.c.h.b16 %v512
      %v658 = vunpack.c.l.b16 %v513
      %v659 = vunpack.c.h.b16 %v513
      %v660 = vunpack.c.l.b16 %v514
      %v661 = vunpack.c.h.b16 %v514
      %v662 = vunpack.c.l.b16 %v515
      %v663 = vunpack.c.h.b16 %v515
      %v664 = vunpack.c.l.b16 %v516
      %v665 = vunpack.c.h.b16 %v516
      %v666 = vunpack.c.l.b16 %v517
      %v667 = vunpack.c.h.b16 %v517
      %v668 = vunpack.c.l.b16 %v518
      %v669 = vunpack.c.h.b16 %v518
      %v670 = vunpack.c.l.b16 %v519
      %v671 = vunpack.c.h.b16 %v519
      %v672 = vunpack.c.l.b16 %v520
      %v673 = vunpack.c.h.b16 %v520
      %v674 = vunpack.c.l.b16 %v521
      %v675 = vunpack.c.h.b16 %v521
      %v676 = vunpack.c.l.b16 %v522
      %v677 = vunpack.c.h.b16 %v522
      %v678 = vunpack.c.l.b16 %v523
      %v679 = vunpack.c.h.b16 %v523
      %v680 = vunpack.c.l.b16 %v524
      %v681 = vunpack.c.h.b16 %v524
      %v682 = vunpack.c.l.b16 %v525
      %v683 = vunpack.c.h.b16 %v525
      %v684 = vunpack.c.l.b16 %v526
      %v685 = vunpack.c.h.b16 %v526
      %v686 = vunpack.c.l.b16 %v527
      %v687 = vunpack.c.h.b16 %v527
      %v688 = vunpack.c.l.b16 %v528
      %v689 = vunpack.c.h.b16 %v528
      %v690 = vunpack.c.l.b16 %v529
      %v691 = vunpack.c.h.b16 %v529
      %v692 = vunpack.c.l.b16 %v530
      %v693 = vunpack.c.h.b16 %v530
      %v694 = vunpack.c.l.b16 %v531
      %v695 = vunpack.c.h.b16 %v531
      %v696 = vunpack.c.l.b16 %v532
      %v697 = vunpack.c.h.b16 %v532
      %v698 = vunpack.c.l.b16 %v533
      %v699 = vunpack.c.h.b16 %v533
      %v700 = vunpack.c.l.b16 %v534
      %v701 = vunpack.c.h.b16 %v534
      %v702 = vunpack.c.l.b16 %v535
      %v703 = vunpack.c.h.b16 %v535
      %v704 = vunpack.c.l.b16 %v536
      %v705 = vunpack.c.h.b16 %v536
      %v706 = vunpack.c.l.b16 %v537
      %v707 = vunpack.c.h.b16 %v537
      %v708 = vunpack.c.l.b16 %v538
      %v709 = vunpack.c.h.b16 %v538
      %v710 = vunpack.c.l.b16 %v539
      %v711 = vunpack.c.h.b16 %v539
      %v712 = vunpack.c.l.b16 %v540
      %v713 = vunpack.c.h.b16 %v540
      %v714 = vunpack.c.l.b16 %v541
      %v715 = vunpack.c.h.b16 %v541
      %v716 = vunpack.c.l.b16 %v542
      %v717 = vunpack.c.h.b16 %v542
      %v718 = vunpack.c.l.b16 %v543
      %v719 = vunpack.c.h.b16 %v543
      %v720 = vunpack.c.l.b16 %v544
      %v721 = vunpack.c.h.b16 %v544
      %v722 = vunpack.c.l.b16 %v545
      %v723 = vunpack.c.h.b16 %v545
      %v724 = vunpack.c.l.b16 %v546
      %v725 = vunpack.c.h.b16 %v546
      %v726 = vunpack.c.l.b16 %v547
      %v727 = vunpack.c.h.b16 %v547
      %v728 = vpack.c.b16 %v622, %v620
      %v729 = vpack.c.b16 %v623, %v621
      %v730 = vpack.c.b16 %v626, %v624
      %v731 = vpack.c.b16 %v627, %v625
      %v732 = vpack.c.b16 %v630, %v628
      %v733 = vpack.c.b16 %v631, %v629
      %v734 = vpack.c.b16 %v634, %v632
      %v735 = vpack.c.b16 %v635, %v633
      %v736 = vpack.c.b16 %v638, %v636
      %v737 = vpack.c.b16 %v639, %v637
      %v738 = vpack.c.b16 %v642, %v640
      %v739 = vpack.c.b16 %v643, %v641
      %v740 = vpack.c.b16 %v646, %v644
      %v741 = vpack.c.b16 %v647, %v645
      %v742 = vpack.c.b16 %v650, %v648
      %v743 = vpack.c.b16 %v651, %v649
      %v744 = vpack.c.b16 %v654, %v652
      %v745 = vpack.c.b16 %v655, %v653
      %v746 = vpack.c.b16 %v658, %v656
      %v747 = vpack.c.b16 %v659, %v657
      %v748 = vpack.c.b16 %v662, %v660
      %v749 = vpack.c.b16 %v663, %v661
      %v750 = vpack.c.b16 %v666, %v664
      %v751 = vpack.c.b16 %v667, %v665
      %v752 = vpack.c.b16 %v670, %v668
      %v753 = vpack.c.b16 %v671, %v669
      %v754 = vpack.c.b16 %v674, %v672
      %v755 = vpack.c.b16 %v675, %v673
      %v756 = vpack.c.b16 %v678, %v676
      %v757 = vpack.c.b16 %v679, %v677
      %v758 = vpack.c.b16 %v682, %v680
      %v759 = vpack.c.b16 %v683, %v681
      %v760 = vpack.c.b16 %v686, %v684
      %v761 = vpack.c.b16 %v687, %v685
      %v762 = vpack.c.b16 %v690, %v688
      %v763 = vpack.c.b16 %v691, %v689
      %v764 = vpack.c.b16 %v694, %v692
      %v765 = vpack.c.b16 %v695, %v693
      %v766 = vpack.c.b16 %v698, %v696
      %v767 = vpack.c.b16 %v699, %v697
      %v768 = vpack.c.b16 %v702, %v700
      %v769 = vpack.c.b16 %v703, %v701
      %v770 = vpack.c.b16 %v706, %v704
      %v771 = vpack.c.b16 %v707, %v705
      %v772 = vpack.c.b16 %v710, %v708
      %v773 = vpack.c.b16 %v711, %v709
      %v774 = vpack.c.b16 %v714, %v712
      %v775 = vpack.c.b16 %v715, %v713
      %v776 = vpack.c.b16 %v718, %v716
      %v777 = vpack.c.b16 %v719, %v717
      %v778 = vpack.c.b16 %v722, %v720
      %v779 = vpack.c.b16 %v723, %v721
      %v780 = vpack.c.b16 %v726, %v724
      %v781 = vpack.c.b16 %v727, %v725
      %v827 = vunpack.c.l.b16 %v548
      %v828 = vunpack.c.l.b16 %v549
      %v829 = vunpack.c.l.b16 %v550
      %v830 = vunpack.c.l.b16 %v551
      %v831 = vunpack.c.l.b16 %v552
      %v832 = vunpack.c.l.b16 %v553
      %v833 = vunpack.c.l.b16 %v554
      %v834 = vunpack.c.l.b16 %v555
      %v835 = vunpack.c.l.b16 %v556
      %v836 = vunpack.c.l.b16 %v557
      %v837 = vunpack.c.l.b16 %v558
      %v838 = vunpack.c.l.b16 %v559
      %v839 = vunpack.c.l.b16 %v560
      %v840 = vunpack.c.l.b16 %v561
      %v841 = vunpack.c.l.b16 %v562
      %v842 = vunpack.c.l.b16 %v563
      %v843 = vunpack.c.l.b16 %v564
      %v844 = vunpack.c.l.b16 %v565
      %v845 = vpack.c.b16 %v828, %v827
      %v846 = vpack.c.b16 %v830, %v829
      %v847 = vpack.c.b16 %v832, %v831
      %v848 = vpack.c.b16 %v834, %v833
      %v849 = vpack.c.b16 %v836, %v835
      %v850 = vpack.c.b16 %v838, %v837
      %v851 = vpack.c.b16 %v840, %v839
      %v852 = vpack.c.b16 %v842, %v841
      %v853 = vpack.c.b16 %v844, %v843
      %vm863 = vcmask 130048
      %v865 = vsel %vm863, %v729, 0
      %v868 = vsel %vm863, %v731, 0
      %v871 = vsel %vm863, %v733, 0
      %v874 = vsel %vm863, %v735, 0
      %v877 = vsel %vm863, %v737, 0
      %v880 = vsel %vm863, %v739, 0
      %v883 = vsel %vm863, %v741, 0
      %v886 = vsel %vm863, %v743, 0
      %v889 = vsel %vm863, %v745, 0
      %v892 = vsel %vm863, %v747, 0
      %v895 = vsel %vm863, %v749, 0
      %v898 = vsel %vm863, %v751, 0
      %v901 = vsel %vm863, %v753, 0
      %v904 = vsel %vm863, %v755, 0
      %v907 = vsel %vm863, %v757, 0
      %v910 = vsel %vm863, %v759, 0
      %v913 = vsel %vm863, %v761, 0
      %v916 = vsel %vm863, %v763, 0
      %v919 = vsel %vm863, %v765, 0
      %v922 = vsel %vm863, %v767, 0
      %v925 = vsel %vm863, %v769, 0
      %v928 = vsel %vm863, %v771, 0
      %v931 = vsel %vm863, %v773, 0
      %v934 = vsel %vm863, %v775, 0
      %v937 = vsel %vm863, %v777, 0
      %v940 = vsel %vm863, %v779, 0
      %v943 = vsel %vm863, %v781, 0
      %945 = vmatprep.subr.bf16.mxu0 0
      %946 = vmatpush1.bf16.msra.mxu0 %v845
      %947 = vmatprep.subr.bf16.mxu0 0
      %948 = vmatpush1.bf16.msra.mxu0 %v846
      %949 = vmatprep.subr.bf16.mxu0 0
      %950 = vmatpush1.bf16.msra.mxu0 %v847
      %951 = vmatprep.subr.bf16.mxu0 0
      %952 = vmatpush1.bf16.msra.mxu0 %v848
      %953 = vmatprep.subr.bf16.mxu0 0
      %954 = vmatpush1.bf16.msra.mxu0 %v849
      %955 = vmatprep.subr.bf16.mxu0 0
      %956 = vmatpush1.bf16.msra.mxu0 %v850
      %957 = vmatprep.subr.bf16.mxu0 0
      %958 = vmatpush1.bf16.msra.mxu0 %v851
      %959 = vmatprep.subr.bf16.mxu0 0
      %960 = vmatpush1.bf16.msra.mxu0 %v852
      %961 = vmatprep.subr.bf16.mxu0 0
      %962 = vmatpush1.bf16.msra.mxu0 %v853
      %963 = vmatprep.subr.bf16.mxu0 0
      %964 = vmatpush1.bf16.msra.mxu0 0
      %965 = vmatprep.subr.bf16.mxu0 0
      %966 = vmatpush1.bf16.msra.mxu0 0
      %967 = vmatprep.subr.bf16.mxu0 0
      %968 = vmatpush1.bf16.msra.mxu0 0
      %969 = vmatprep.subr.bf16.mxu0 0
      %970 = vmatpush1.bf16.msra.mxu0 0
      %971 = vmatprep.subr.bf16.mxu0 0
      %972 = vmatpush1.bf16.msra.mxu0 0
      %973 = vmatprep.subr.bf16.mxu0 0
      %974 = vmatpush1.bf16.msra.mxu0 0
      %975 = vmatprep.subr.bf16.mxu0 0
      %976 = vmatpush1.bf16.msra.mxu0 0
      %977 = vmatprep.mubr.bf16.mxu0 %v865
      %978 = vmatmul.mubr.bf16.gmra.mrb[0].mxu0 %v728
      %v979 = vpop.f32.mrb[0].mxu0
      %v980 = vadd.f32 0.0, %v979
      %v981 = vpop.f32.mrb[0].mxu0
      %v982 = vpop.f32.mrb[0].mxu0
      %v983 = vadd.f32 0.0, %v982
      %v984 = vpop.f32.mrb[0].mxu0
      %985 = vmatprep.mubr.bf16.mxu0 %v868
      %986 = vmatmul.mubr.bf16.gmra.mrb[0].mxu0 %v730
      %v987 = vpop.f32.mrb[0].mxu0
      %v988 = vadd.f32 0.0, %v987
      %v989 = vpop.f32.mrb[0].mxu0
      %v990 = vpop.f32.mrb[0].mxu0
      %v991 = vadd.f32 0.0, %v990
      %v992 = vpop.f32.mrb[0].mxu0
      %993 = vmatprep.mubr.bf16.mxu0 %v871
      %994 = vmatmul.mubr.bf16.gmra.mrb[0].mxu0 %v732
      %v995 = vpop.f32.mrb[0].mxu0
      %v996 = vadd.f32 0.0, %v995
      %v997 = vpop.f32.mrb[0].mxu0
      %v998 = vpop.f32.mrb[0].mxu0
      %v999 = vadd.f32 0.0, %v998
      %v1000 = vpop.f32.mrb[0].mxu0
      %1001 = vmatprep.mubr.bf16.mxu0 %v874
      %1002 = vmatmul.mubr.bf16.gmra.mrb[0].mxu0 %v734
      %v1003 = vpop.f32.mrb[0].mxu0
      %v1004 = vadd.f32 0.0, %v1003
      %v1005 = vpop.f32.mrb[0].mxu0
      %v1006 = vpop.f32.mrb[0].mxu0
      %v1007 = vadd.f32 0.0, %v1006
      %v1008 = vpop.f32.mrb[0].mxu0
      %1009 = vmatprep.mubr.bf16.mxu0 %v877
      %1010 = vmatmul.mubr.bf16.gmra.mrb[0].mxu0 %v736
      %v1011 = vpop.f32.mrb[0].mxu0
      %v1012 = vadd.f32 0.0, %v1011
      %v1013 = vpop.f32.mrb[0].mxu0
      %v1014 = vpop.f32.mrb[0].mxu0
      %v1015 = vadd.f32 0.0, %v1014
      %v1016 = vpop.f32.mrb[0].mxu0
      %1017 = vmatprep.mubr.bf16.mxu0 %v880
      %1018 = vmatmul.mubr.bf16.gmra.mrb[0].mxu0 %v738
      %v1019 = vpop.f32.mrb[0].mxu0
      %v1020 = vadd.f32 0.0, %v1019
      %v1021 = vpop.f32.mrb[0].mxu0
      %v1022 = vpop.f32.mrb[0].mxu0
      %v1023 = vadd.f32 0.0, %v1022
      %v1024 = vpop.f32.mrb[0].mxu0
      %1025 = vmatprep.mubr.bf16.mxu0 %v883
      %1026 = vmatmul.mubr.bf16.gmra.mrb[0].mxu0 %v740
      %v1027 = vpop.f32.mrb[0].mxu0
      %v1028 = vadd.f32 0.0, %v1027
      %v1029 = vpop.f32.mrb[0].mxu0
      %v1030 = vpop.f32.mrb[0].mxu0
      %v1031 = vadd.f32 0.0, %v1030
      %v1032 = vpop.f32.mrb[0].mxu0
      %1033 = vmatprep.mubr.bf16.mxu0 %v886
      %1034 = vmatmul.mubr.bf16.gmra.mrb[0].mxu0 %v742
      %v1035 = vpop.f32.mrb[0].mxu0
      %v1036 = vadd.f32 0.0, %v1035
      %v1037 = vpop.f32.mrb[0].mxu0
      %v1038 = vpop.f32.mrb[0].mxu0
      %v1039 = vadd.f32 0.0, %v1038
      %v1040 = vpop.f32.mrb[0].mxu0
      %1041 = vmatprep.mubr.bf16.mxu0 %v889
      %1042 = vmatmul.mubr.bf16.gmra.mrb[0].mxu0 %v744
      %v1043 = vpop.f32.mrb[0].mxu0
      %v1044 = vadd.f32 0.0, %v1043
      %v1045 = vpop.f32.mrb[0].mxu0
      %v1046 = vpop.f32.mrb[0].mxu0
      %v1047 = vadd.f32 0.0, %v1046
      %v1048 = vpop.f32.mrb[0].mxu0
      %1049 = vmatprep.mubr.bf16.mxu0 %v892
      %1050 = vmatmul.mubr.bf16.gmra.mrb[0].mxu0 %v746
      %v1051 = vpop.f32.mrb[0].mxu0
      %v1052 = vadd.f32 0.0, %v1051
      %v1053 = vpop.f32.mrb[0].mxu0
      %v1054 = vpop.f32.mrb[0].mxu0
      %v1055 = vadd.f32 0.0, %v1054
      %v1056 = vpop.f32.mrb[0].mxu0
      %1057 = vmatprep.mubr.bf16.mxu0 %v895
      %1058 = vmatmul.mubr.bf16.gmra.mrb[0].mxu0 %v748
      %v1059 = vpop.f32.mrb[0].mxu0
      %v1060 = vadd.f32 0.0, %v1059
      %v1061 = vpop.f32.mrb[0].mxu0
      %v1062 = vpop.f32.mrb[0].mxu0
      %v1063 = vadd.f32 0.0, %v1062
      %v1064 = vpop.f32.mrb[0].mxu0
      %1065 = vmatprep.mubr.bf16.mxu0 %v898
      %1066 = vmatmul.mubr.bf16.gmra.mrb[0].mxu0 %v750
      %v1067 = vpop.f32.mrb[0].mxu0
      %v1068 = vadd.f32 0.0, %v1067
      %v1069 = vpop.f32.mrb[0].mxu0
      %v1070 = vpop.f32.mrb[0].mxu0
      %v1071 = vadd.f32 0.0, %v1070
      %v1072 = vpop.f32.mrb[0].mxu0
      %1073 = vmatprep.mubr.bf16.mxu0 %v901
      %1074 = vmatmul.mubr.bf16.gmra.mrb[0].mxu0 %v752
      %v1075 = vpop.f32.mrb[0].mxu0
      %v1076 = vadd.f32 0.0, %v1075
      %v1077 = vpop.f32.mrb[0].mxu0
      %v1078 = vpop.f32.mrb[0].mxu0
      %v1079 = vadd.f32 0.0, %v1078
      %v1080 = vpop.f32.mrb[0].mxu0
      %1081 = vmatprep.mubr.bf16.mxu0 %v904
      %1082 = vmatmul.mubr.bf16.gmra.mrb[0].mxu0 %v754
      %v1083 = vpop.f32.mrb[0].mxu0
      %v1084 = vadd.f32 0.0, %v1083
      %v1085 = vpop.f32.mrb[0].mxu0
      %v1086 = vpop.f32.mrb[0].mxu0
      %v1087 = vadd.f32 0.0, %v1086
      %v1088 = vpop.f32.mrb[0].mxu0
      %1089 = vmatprep.mubr.bf16.mxu0 %v907
      %1090 = vmatmul.mubr.bf16.gmra.mrb[0].mxu0 %v756
      %v1091 = vpop.f32.mrb[0].mxu0
      %v1092 = vadd.f32 0.0, %v1091
      %v1093 = vpop.f32.mrb[0].mxu0
      %v1094 = vpop.f32.mrb[0].mxu0
      %v1095 = vadd.f32 0.0, %v1094
      %v1096 = vpop.f32.mrb[0].mxu0
      %1097 = vmatprep.mubr.bf16.mxu0 %v910
      %1098 = vmatmul.mubr.bf16.gmra.mrb[0].mxu0 %v758
      %v1099 = vpop.f32.mrb[0].mxu0
      %v1100 = vadd.f32 0.0, %v1099
      %v1101 = vpop.f32.mrb[0].mxu0
      %v1102 = vpop.f32.mrb[0].mxu0
      %v1103 = vadd.f32 0.0, %v1102
      %v1104 = vpop.f32.mrb[0].mxu0
      %1105 = vmatprep.mubr.bf16.mxu0 %v913
      %1106 = vmatmul.mubr.bf16.gmra.mrb[0].mxu0 %v760
      %v1107 = vpop.f32.mrb[0].mxu0
      %v1108 = vadd.f32 0.0, %v1107
      %v1109 = vpop.f32.mrb[0].mxu0
      %v1110 = vpop.f32.mrb[0].mxu0
      %v1111 = vadd.f32 0.0, %v1110
      %v1112 = vpop.f32.mrb[0].mxu0
      %1113 = vmatprep.mubr.bf16.mxu0 %v916
      %1114 = vmatmul.mubr.bf16.gmra.mrb[0].mxu0 %v762
      %v1115 = vpop.f32.mrb[0].mxu0
      %v1116 = vadd.f32 0.0, %v1115
      %v1117 = vpop.f32.mrb[0].mxu0
      %v1118 = vpop.f32.mrb[0].mxu0
      %v1119 = vadd.f32 0.0, %v1118
      %v1120 = vpop.f32.mrb[0].mxu0
      %1121 = vmatprep.mubr.bf16.mxu0 %v919
      %1122 = vmatmul.mubr.bf16.gmra.mrb[0].mxu0 %v764
      %v1123 = vpop.f32.mrb[0].mxu0
      %v1124 = vadd.f32 0.0, %v1123
      %v1125 = vpop.f32.mrb[0].mxu0
      %v1126 = vpop.f32.mrb[0].mxu0
      %v1127 = vadd.f32 0.0, %v1126
      %v1128 = vpop.f32.mrb[0].mxu0
      %1129 = vmatprep.mubr.bf16.mxu0 %v922
      %1130 = vmatmul.mubr.bf16.gmra.mrb[0].mxu0 %v766
      %v1131 = vpop.f32.mrb[0].mxu0
      %v1132 = vadd.f32 0.0, %v1131
      %v1133 = vpop.f32.mrb[0].mxu0
      %v1134 = vpop.f32.mrb[0].mxu0
      %v1135 = vadd.f32 0.0, %v1134
      %v1136 = vpop.f32.mrb[0].mxu0
      %1137 = vmatprep.mubr.bf16.mxu0 %v925
      %1138 = vmatmul.mubr.bf16.gmra.mrb[0].mxu0 %v768
      %v1139 = vpop.f32.mrb[0].mxu0
      %v1140 = vadd.f32 0.0, %v1139
      %v1141 = vpop.f32.mrb[0].mxu0
      %v1142 = vpop.f32.mrb[0].mxu0
      %v1143 = vadd.f32 0.0, %v1142
      %v1144 = vpop.f32.mrb[0].mxu0
      %1145 = vmatprep.mubr.bf16.mxu0 %v928
      %1146 = vmatmul.mubr.bf16.gmra.mrb[0].mxu0 %v770
      %v1147 = vpop.f32.mrb[0].mxu0
      %v1148 = vadd.f32 0.0, %v1147
      %v1149 = vpop.f32.mrb[0].mxu0
      %v1150 = vpop.f32.mrb[0].mxu0
      %v1151 = vadd.f32 0.0, %v1150
      %v1152 = vpop.f32.mrb[0].mxu0
      %1153 = vmatprep.mubr.bf16.mxu0 %v931
      %1154 = vmatmul.mubr.bf16.gmra.mrb[0].mxu0 %v772
      %v1155 = vpop.f32.mrb[0].mxu0
      %v1156 = vadd.f32 0.0, %v1155
      %v1157 = vpop.f32.mrb[0].mxu0
      %v1158 = vpop.f32.mrb[0].mxu0
      %v1159 = vadd.f32 0.0, %v1158
      %v1160 = vpop.f32.mrb[0].mxu0
      %1161 = vmatprep.mubr.bf16.mxu0 %v934
      %1162 = vmatmul.mubr.bf16.gmra.mrb[0].mxu0 %v774
      %v1163 = vpop.f32.mrb[0].mxu0
      %v1164 = vadd.f32 0.0, %v1163
      %v1165 = vpop.f32.mrb[0].mxu0
      %v1166 = vpop.f32.mrb[0].mxu0
      %v1167 = vadd.f32 0.0, %v1166
      %v1168 = vpop.f32.mrb[0].mxu0
      %1169 = vmatprep.mubr.bf16.mxu0 %v937
      %1170 = vmatmul.mubr.bf16.gmra.mrb[0].mxu0 %v776
      %v1171 = vpop.f32.mrb[0].mxu0
      %v1172 = vadd.f32 0.0, %v1171
      %v1173 = vpop.f32.mrb[0].mxu0
      %v1174 = vpop.f32.mrb[0].mxu0
      %v1175 = vadd.f32 0.0, %v1174
      %v1176 = vpop.f32.mrb[0].mxu0
      %1177 = vmatprep.mubr.bf16.mxu0 %v940
      %1178 = vmatmul.mubr.bf16.gmra.mrb[0].mxu0 %v778
      %v1179 = vpop.f32.mrb[0].mxu0
      %v1180 = vadd.f32 0.0, %v1179
      %v1181 = vpop.f32.mrb[0].mxu0
      %v1182 = vpop.f32.mrb[0].mxu0
      %v1183 = vadd.f32 0.0, %v1182
      %v1184 = vpop.f32.mrb[0].mxu0
      %1185 = vmatprep.mubr.bf16.mxu0 %v943
      %1186 = vmatmul.mubr.bf16.gmra.mrb[0].mxu0 %v780
      %v1187 = vpop.f32.mrb[0].mxu0
      %v1188 = vadd.f32 0.0, %v1187
      %v1189 = vpop.f32.mrb[0].mxu0
      %v1190 = vpop.f32.mrb[0].mxu0
      %v1191 = vadd.f32 0.0, %v1190
      %v1192 = vpop.f32.mrb[0].mxu0
      %1193 = vdwg.mxu0
      %v1194 = vld [vmem:[%s5] sm:$0x1]
      %v1195 = vld [vmem:[%s6] sm:$0x1]
      %v1197 = vlaneseq
      %v1198 = vshrl.u32 %v1197, 7
      %v1199 = vsub.s32 0, %v1198
      %v1200 = vrot.slane %v493, %v1199
      %v1201 = vlaneseq
      %v1202 = vshrl.u32 %v1201, 7
      %v1203 = vsub.s32 1, %v1202
      %v1204 = vrot.slane %v493, %v1203
      %v1205 = vlaneseq
      %v1206 = vshrl.u32 %v1205, 7
      %v1207 = vsub.s32 2, %v1206
      %v1208 = vrot.slane %v493, %v1207
      %v1209 = vlaneseq
      %v1210 = vshrl.u32 %v1209, 7
      %v1211 = vsub.s32 3, %v1210
      %v1212 = vrot.slane %v493, %v1211
      %vm1216 = vcmask 392192
      %v1217 = vsel %vm1216, %v1212, 0
      %1219 = vmatprep.subr.mxu0 0.0
      %1220 = vmatpush1.msra.mxu0 %v980
      %1221 = vmatprep.subr.mxu0 0.0
      %1222 = vmatpush1.msra.mxu0 %v983
      %1223 = vmatprep.subr.mxu0 0.0
      %1224 = vmatpush1.msra.mxu0 %v988
      %1225 = vmatprep.subr.mxu0 0.0
      %1226 = vmatpush1.msra.mxu0 %v991
      %1227 = vmatprep.subr.mxu0 0.0
      %1228 = vmatpush1.msra.mxu0 %v996
      %1229 = vmatprep.subr.mxu0 0.0
      %1230 = vmatpush1.msra.mxu0 %v999
      %1231 = vmatprep.subr.mxu0 0.0
      %1232 = vmatpush1.msra.mxu0 %v1004
      %1233 = vmatprep.subr.mxu0 0.0
      %1234 = vmatpush1.msra.mxu0 %v1007
      %1235 = vmatprep.subr.mxu0 0.0
      %1236 = vmatpush1.msra.mxu0 %v1012
      %1237 = vmatprep.subr.mxu0 0.0
      %1238 = vmatpush1.msra.mxu0 %v1015
      %1239 = vmatprep.subr.mxu0 0.0
      %1240 = vmatpush1.msra.mxu0 %v1020
      %1241 = vmatprep.subr.mxu0 0.0
      %1242 = vmatpush1.msra.mxu0 %v1023
      %1243 = vmatprep.subr.mxu0 0.0
      %1244 = vmatpush1.msra.mxu0 %v1028
      %1245 = vmatprep.subr.mxu0 0.0
      %1246 = vmatpush1.msra.mxu0 %v1031
      %1247 = vmatprep.subr.mxu0 0.0
      %1248 = vmatpush1.msra.mxu0 %v1036
      %1249 = vmatprep.subr.mxu0 0.0
      %1250 = vmatpush1.msra.mxu0 %v1039
      %1251 = vmatprep.subr.mxu0 0.0
      %1252 = vmatpush1.msra.mxu0 %v1044
      %1253 = vmatprep.subr.mxu0 0.0
      %1254 = vmatpush1.msra.mxu0 %v1047
      %1255 = vmatprep.subr.mxu0 0.0
      %1256 = vmatpush1.msra.mxu0 %v1052
      %1257 = vmatprep.subr.mxu0 0.0
      %1258 = vmatpush1.msra.mxu0 %v1055
      %1259 = vmatprep.subr.mxu0 0.0
      %1260 = vmatpush1.msra.mxu0 %v1060
      %1261 = vmatprep.subr.mxu0 0.0
      %1262 = vmatpush1.msra.mxu0 %v1063
      %1263 = vmatprep.subr.mxu0 0.0
      %1264 = vmatpush1.msra.mxu0 %v1068
      %1265 = vmatprep.subr.mxu0 0.0
      %1266 = vmatpush1.msra.mxu0 %v1071
      %1267 = vmatprep.subr.mxu0 0.0
      %1268 = vmatpush1.msra.mxu0 %v1076
      %1269 = vmatprep.subr.mxu0 0.0
      %1270 = vmatpush1.msra.mxu0 %v1079
      %1271 = vmatprep.subr.mxu0 0.0
      %1272 = vmatpush1.msra.mxu0 %v1084
      %1273 = vmatprep.subr.mxu0 0.0
      %1274 = vmatpush1.msra.mxu0 %v1087
      %1275 = vmatprep.subr.mxu0 0.0
      %1276 = vmatpush1.msra.mxu0 %v1092
      %1277 = vmatprep.subr.mxu0 0.0
      %1278 = vmatpush1.msra.mxu0 %v1095
      %1279 = vmatprep.subr.mxu0 0.0
      %1280 = vmatpush1.msra.mxu0 %v1100
      %1281 = vmatprep.subr.mxu0 0.0
      %1282 = vmatpush1.msra.mxu0 %v1103
      %1283 = vmatprep.mubr.f32.mxu0 %v1204
      %1284 = vmatmul.mubr.f32.gmra.mrb[0].mxu0 %v1200
      %v1285 = vpop.f32.mrb[0].mxu0
      %v1286 = vadd.f32 0.0, %v1285
      %v1287 = vpop.f32.mrb[0].mxu0
      %1288 = vdwg.mxu0
      %1289 = vmatprep.subr.mxu0 0.0
      %1290 = vmatpush1.msra.mxu0 %v1108
      %1291 = vmatprep.subr.mxu0 0.0
      %1292 = vmatpush1.msra.mxu0 %v1111
      %1293 = vmatprep.subr.mxu0 0.0
      %1294 = vmatpush1.msra.mxu0 %v1116
      %1295 = vmatprep.subr.mxu0 0.0
      %1296 = vmatpush1.msra.mxu0 %v1119
      %1297 = vmatprep.subr.mxu0 0.0
      %1298 = vmatpush1.msra.mxu0 %v1124
      %1299 = vmatprep.subr.mxu0 0.0
      %1300 = vmatpush1.msra.mxu0 %v1127
      %1301 = vmatprep.subr.mxu0 0.0
      %1302 = vmatpush1.msra.mxu0 %v1132
      %1303 = vmatprep.subr.mxu0 0.0
      %1304 = vmatpush1.msra.mxu0 %v1135
      %1305 = vmatprep.subr.mxu0 0.0
      %1306 = vmatpush1.msra.mxu0 %v1140
      %1307 = vmatprep.subr.mxu0 0.0
      %1308 = vmatpush1.msra.mxu0 %v1143
      %1309 = vmatprep.subr.mxu0 0.0
      %1310 = vmatpush1.msra.mxu0 %v1148
      %1311 = vmatprep.subr.mxu0 0.0
      %1312 = vmatpush1.msra.mxu0 %v1151
      %1313 = vmatprep.subr.mxu0 0.0
      %1314 = vmatpush1.msra.mxu0 %v1156
      %1315 = vmatprep.subr.mxu0 0.0
      %1316 = vmatpush1.msra.mxu0 %v1159
      %1317 = vmatprep.subr.mxu0 0.0
      %1318 = vmatpush1.msra.mxu0 %v1164
      %1319 = vmatprep.subr.mxu0 0.0
      %1320 = vmatpush1.msra.mxu0 %v1167
      %1321 = vmatprep.subr.mxu0 0.0
      %1322 = vmatpush1.msra.mxu0 %v1172
      %1323 = vmatprep.subr.mxu0 0.0
      %1324 = vmatpush1.msra.mxu0 %v1175
      %1325 = vmatprep.subr.mxu0 0.0
      %1326 = vmatpush1.msra.mxu0 %v1180
      %1327 = vmatprep.subr.mxu0 0.0
      %1328 = vmatpush1.msra.mxu0 %v1183
      %1329 = vmatprep.subr.mxu0 0.0
      %1330 = vmatpush1.msra.mxu0 %v1188
      %1331 = vmatprep.subr.mxu0 0.0
      %1332 = vmatpush1.msra.mxu0 %v1191
      %1333 = vmatprep.subr.mxu0 0.0
      %1334 = vmatpush1.msra.mxu0 0.0
      %1335 = vmatprep.subr.mxu0 0.0
      %1336 = vmatpush1.msra.mxu0 0.0
      %1337 = vmatprep.subr.mxu0 0.0
      %1338 = vmatpush1.msra.mxu0 0.0
      %1339 = vmatprep.subr.mxu0 0.0
      %1340 = vmatpush1.msra.mxu0 0.0
      %1341 = vmatprep.subr.mxu0 0.0
      %1342 = vmatpush1.msra.mxu0 0.0
      %1343 = vmatprep.subr.mxu0 0.0
      %1344 = vmatpush1.msra.mxu0 0.0
      %1345 = vmatprep.subr.mxu0 0.0
      %1346 = vmatpush1.msra.mxu0 0.0
      %1347 = vmatprep.subr.mxu0 0.0
      %1348 = vmatpush1.msra.mxu0 0.0
      %1349 = vmatprep.subr.mxu0 0.0
      %1350 = vmatpush1.msra.mxu0 0.0
      %1351 = vmatprep.subr.mxu0 0.0
      %1352 = vmatpush1.msra.mxu0 0.0
      %1353 = vmatprep.mubr.f32.mxu0 %v1217
      %1354 = vmatmul.mubr.f32.gmra.mrb[0].mxu0 %v1208
      %v1355 = vpop.f32.mrb[0].mxu0
      %v1356 = vadd.f32 %v1286, %v1355
      %v1357 = vpop.f32.mrb[0].mxu0
      %1358 = vdwg.mxu0
      %v1359 = vmul.f32 %v980, %v980
      %v1360 = vmul.f32 %v983, %v983
      %v1361 = vmul.f32 %v988, %v988
      %v1362 = vmul.f32 %v991, %v991
      %v1363 = vmul.f32 %v996, %v996
      %v1364 = vmul.f32 %v999, %v999
      %v1365 = vmul.f32 %v1004, %v1004
      %v1366 = vmul.f32 %v1007, %v1007
      %v1367 = vmul.f32 %v1012, %v1012
      %v1368 = vmul.f32 %v1015, %v1015
      %v1369 = vmul.f32 %v1020, %v1020
      %v1370 = vmul.f32 %v1023, %v1023
      %v1371 = vmul.f32 %v1028, %v1028
      %v1372 = vmul.f32 %v1031, %v1031
      %v1373 = vmul.f32 %v1036, %v1036
      %v1374 = vmul.f32 %v1039, %v1039
      %v1375 = vmul.f32 %v1044, %v1044
      %v1376 = vmul.f32 %v1047, %v1047
      %v1377 = vmul.f32 %v1052, %v1052
      %v1378 = vmul.f32 %v1055, %v1055
      %v1379 = vmul.f32 %v1060, %v1060
      %v1380 = vmul.f32 %v1063, %v1063
      %v1381 = vmul.f32 %v1068, %v1068
      %v1382 = vmul.f32 %v1071, %v1071
      %v1383 = vmul.f32 %v1076, %v1076
      %v1384 = vmul.f32 %v1079, %v1079
      %v1385 = vmul.f32 %v1084, %v1084
      %v1386 = vmul.f32 %v1087, %v1087
      %v1387 = vmul.f32 %v1092, %v1092
      %v1388 = vmul.f32 %v1095, %v1095
      %v1389 = vmul.f32 %v1100, %v1100
      %v1390 = vmul.f32 %v1103, %v1103
      %v1391 = vmul.f32 %v1108, %v1108
      %v1392 = vmul.f32 %v1111, %v1111
      %v1393 = vmul.f32 %v1116, %v1116
      %v1394 = vmul.f32 %v1119, %v1119
      %v1395 = vmul.f32 %v1124, %v1124
      %v1396 = vmul.f32 %v1127, %v1127
      %v1397 = vmul.f32 %v1132, %v1132
      %v1398 = vmul.f32 %v1135, %v1135
      %v1399 = vmul.f32 %v1140, %v1140
      %v1400 = vmul.f32 %v1143, %v1143
      %v1401 = vmul.f32 %v1148, %v1148
      %v1402 = vmul.f32 %v1151, %v1151
      %v1403 = vmul.f32 %v1156, %v1156
      %v1404 = vmul.f32 %v1159, %v1159
      %v1405 = vmul.f32 %v1164, %v1164
      %v1406 = vmul.f32 %v1167, %v1167
      %v1407 = vmul.f32 %v1172, %v1172
      %v1408 = vmul.f32 %v1175, %v1175
      %v1409 = vmul.f32 %v1180, %v1180
      %v1410 = vmul.f32 %v1183, %v1183
      %v1411 = vmul.f32 %v1188, %v1188
      %v1412 = vmul.f32 %v1191, %v1191
      %1413 = vmatprep.subr.mxu0 0.0
      %1414 = vmatpush1.msra.mxu0 %v1359
      %1415 = vmatprep.subr.mxu0 0.0
      %1416 = vmatpush1.msra.mxu0 %v1360
      %1417 = vmatprep.subr.mxu0 0.0
      %1418 = vmatpush1.msra.mxu0 %v1361
      %1419 = vmatprep.subr.mxu0 0.0
      %1420 = vmatpush1.msra.mxu0 %v1362
      %1421 = vmatprep.subr.mxu0 0.0
      %1422 = vmatpush1.msra.mxu0 %v1363
      %1423 = vmatprep.subr.mxu0 0.0
      %1424 = vmatpush1.msra.mxu0 %v1364
      %1425 = vmatprep.subr.mxu0 0.0
      %1426 = vmatpush1.msra.mxu0 %v1365
      %1427 = vmatprep.subr.mxu0 0.0
      %1428 = vmatpush1.msra.mxu0 %v1366
      %1429 = vmatprep.subr.mxu0 0.0
      %1430 = vmatpush1.msra.mxu0 %v1367
      %1431 = vmatprep.subr.mxu0 0.0
      %1432 = vmatpush1.msra.mxu0 %v1368
      %1433 = vmatprep.subr.mxu0 0.0
      %1434 = vmatpush1.msra.mxu0 %v1369
      %1435 = vmatprep.subr.mxu0 0.0
      %1436 = vmatpush1.msra.mxu0 %v1370
      %1437 = vmatprep.subr.mxu0 0.0
      %1438 = vmatpush1.msra.mxu0 %v1371
      %1439 = vmatprep.subr.mxu0 0.0
      %1440 = vmatpush1.msra.mxu0 %v1372
      %1441 = vmatprep.subr.mxu0 0.0
      %1442 = vmatpush1.msra.mxu0 %v1373
      %1443 = vmatprep.subr.mxu0 0.0
      %1444 = vmatpush1.msra.mxu0 %v1374
      %1445 = vmatprep.subr.mxu0 0.0
      %1446 = vmatpush1.msra.mxu0 %v1375
      %1447 = vmatprep.subr.mxu0 0.0
      %1448 = vmatpush1.msra.mxu0 %v1376
      %1449 = vmatprep.subr.mxu0 0.0
      %1450 = vmatpush1.msra.mxu0 %v1377
      %1451 = vmatprep.subr.mxu0 0.0
      %1452 = vmatpush1.msra.mxu0 %v1378
      %1453 = vmatprep.subr.mxu0 0.0
      %1454 = vmatpush1.msra.mxu0 %v1379
      %1455 = vmatprep.subr.mxu0 0.0
      %1456 = vmatpush1.msra.mxu0 %v1380
      %1457 = vmatprep.subr.mxu0 0.0
      %1458 = vmatpush1.msra.mxu0 %v1381
      %1459 = vmatprep.subr.mxu0 0.0
      %1460 = vmatpush1.msra.mxu0 %v1382
      %1461 = vmatprep.subr.mxu0 0.0
      %1462 = vmatpush1.msra.mxu0 %v1383
      %1463 = vmatprep.subr.mxu0 0.0
      %1464 = vmatpush1.msra.mxu0 %v1384
      %1465 = vmatprep.subr.mxu0 0.0
      %1466 = vmatpush1.msra.mxu0 %v1385
      %1467 = vmatprep.subr.mxu0 0.0
      %1468 = vmatpush1.msra.mxu0 %v1386
      %1469 = vmatprep.subr.mxu0 0.0
      %1470 = vmatpush1.msra.mxu0 %v1387
      %1471 = vmatprep.subr.mxu0 0.0
      %1472 = vmatpush1.msra.mxu0 %v1388
      %1473 = vmatprep.subr.mxu0 0.0
      %1474 = vmatpush1.msra.mxu0 %v1389
      %1475 = vmatprep.subr.mxu0 0.0
      %1476 = vmatpush1.msra.mxu0 %v1390
      %1477 = vmatprep.mubr.f32.mxu0 %v1204
      %1478 = vmatmul.mubr.f32.gmra.mrb[0].mxu0 %v1200
      %v1479 = vpop.f32.mrb[0].mxu0
      %v1480 = vadd.f32 0.0, %v1479
      %v1481 = vpop.f32.mrb[0].mxu0
      %1482 = vdwg.mxu0
      %1483 = vmatprep.subr.mxu0 0.0
      %1484 = vmatpush1.msra.mxu0 %v1391
      %1485 = vmatprep.subr.mxu0 0.0
      %1486 = vmatpush1.msra.mxu0 %v1392
      %1487 = vmatprep.subr.mxu0 0.0
      %1488 = vmatpush1.msra.mxu0 %v1393
      %1489 = vmatprep.subr.mxu0 0.0
      %1490 = vmatpush1.msra.mxu0 %v1394
      %1491 = vmatprep.subr.mxu0 0.0
      %1492 = vmatpush1.msra.mxu0 %v1395
      %1493 = vmatprep.subr.mxu0 0.0
      %1494 = vmatpush1.msra.mxu0 %v1396
      %1495 = vmatprep.subr.mxu0 0.0
      %1496 = vmatpush1.msra.mxu0 %v1397
      %1497 = vmatprep.subr.mxu0 0.0
      %1498 = vmatpush1.msra.mxu0 %v1398
      %1499 = vmatprep.subr.mxu0 0.0
      %1500 = vmatpush1.msra.mxu0 %v1399
      %1501 = vmatprep.subr.mxu0 0.0
      %1502 = vmatpush1.msra.mxu0 %v1400
      %1503 = vmatprep.subr.mxu0 0.0
      %1504 = vmatpush1.msra.mxu0 %v1401
      %1505 = vmatprep.subr.mxu0 0.0
      %1506 = vmatpush1.msra.mxu0 %v1402
      %1507 = vmatprep.subr.mxu0 0.0
      %1508 = vmatpush1.msra.mxu0 %v1403
      %1509 = vmatprep.subr.mxu0 0.0
      %1510 = vmatpush1.msra.mxu0 %v1404
      %1511 = vmatprep.subr.mxu0 0.0
      %1512 = vmatpush1.msra.mxu0 %v1405
      %1513 = vmatprep.subr.mxu0 0.0
      %1514 = vmatpush1.msra.mxu0 %v1406
      %1515 = vmatprep.subr.mxu0 0.0
      %1516 = vmatpush1.msra.mxu0 %v1407
      %1517 = vmatprep.subr.mxu0 0.0
      %1518 = vmatpush1.msra.mxu0 %v1408
      %1519 = vmatprep.subr.mxu0 0.0
      %1520 = vmatpush1.msra.mxu0 %v1409
      %1521 = vmatprep.subr.mxu0 0.0
      %1522 = vmatpush1.msra.mxu0 %v1410
      %1523 = vmatprep.subr.mxu0 0.0
      %1524 = vmatpush1.msra.mxu0 %v1411
      %1525 = vmatprep.subr.mxu0 0.0
      %1526 = vmatpush1.msra.mxu0 %v1412
      %1527 = vmatprep.subr.mxu0 0.0
      %1528 = vmatpush1.msra.mxu0 0.0
      %1529 = vmatprep.subr.mxu0 0.0
      %1530 = vmatpush1.msra.mxu0 0.0
      %1531 = vmatprep.subr.mxu0 0.0
      %1532 = vmatpush1.msra.mxu0 0.0
      %1533 = vmatprep.subr.mxu0 0.0
      %1534 = vmatpush1.msra.mxu0 0.0
      %1535 = vmatprep.subr.mxu0 0.0
      %1536 = vmatpush1.msra.mxu0 0.0
      %1537 = vmatprep.subr.mxu0 0.0
      %1538 = vmatpush1.msra.mxu0 0.0
      %1539 = vmatprep.subr.mxu0 0.0
      %1540 = vmatpush1.msra.mxu0 0.0
      %1541 = vmatprep.subr.mxu0 0.0
      %1542 = vmatpush1.msra.mxu0 0.0
      %1543 = vmatprep.subr.mxu0 0.0
      %1544 = vmatpush1.msra.mxu0 0.0
      %1545 = vmatprep.subr.mxu0 0.0
      %1546 = vmatpush1.msra.mxu0 0.0
      %1547 = vmatprep.mubr.f32.mxu0 %v1217
      %1548 = vmatmul.mubr.f32.gmra.mrb[0].mxu0 %v1208
      %v1549 = vpop.f32.mrb[0].mxu0
      %v1550 = vadd.f32 %v1480, %v1549
      %v1551 = vpop.f32.mrb[0].mxu0
      %1552 = vdwg.mxu0
      %vm1553 = vcmask 261120
      %v1555 = vsel %vm1553, %v1356, 0
      %1557 = vmatprep.subr.mxu0 0.0
      %1558 = vmatpush1.msra.mxu0 %v489
      %1559 = vmatprep.subr.mxu0 0.0
      %1560 = vmatpush1.msra.mxu0 %v490
      %1561 = vmatprep.subr.mxu0 0.0
      %1562 = vmatpush1.msra.mxu0 %v491
      %1563 = vmatprep.subr.mxu0 0.0
      %1564 = vmatpush1.msra.mxu0 %v492
      %1565 = vmatprep.subr.mxu0 0.0
      %1566 = vmatpush1.msra.mxu0 0.0
      %1567 = vmatprep.subr.mxu0 0.0
      %1568 = vmatpush1.msra.mxu0 0.0
      %1569 = vmatprep.subr.mxu0 0.0
      %1570 = vmatpush1.msra.mxu0 0.0
      %1571 = vmatprep.subr.mxu0 0.0
      %1572 = vmatpush1.msra.mxu0 0.0
      %1573 = vmatprep.subr.mxu0 0.0
      %1574 = vmatpush1.msra.mxu0 0.0
      %1575 = vmatprep.subr.mxu0 0.0
      %1576 = vmatpush1.msra.mxu0 0.0
      %1577 = vmatprep.subr.mxu0 0.0
      %1578 = vmatpush1.msra.mxu0 0.0
      %1579 = vmatprep.subr.mxu0 0.0
      %1580 = vmatpush1.msra.mxu0 0.0
      %1581 = vmatprep.subr.mxu0 0.0
      %1582 = vmatpush1.msra.mxu0 0.0
      %1583 = vmatprep.subr.mxu0 0.0
      %1584 = vmatpush1.msra.mxu0 0.0
      %1585 = vmatprep.subr.mxu0 0.0
      %1586 = vmatpush1.msra.mxu0 0.0
      %1587 = vmatprep.subr.mxu0 0.0
      %1588 = vmatpush1.msra.mxu0 0.0
      %1589 = vmatprep.subr.mxu0 0.0
      %1590 = vmatpush1.msra.mxu0 0.0
      %1591 = vmatprep.subr.mxu0 0.0
      %1592 = vmatpush1.msra.mxu0 0.0
      %1593 = vmatprep.subr.mxu0 0.0
      %1594 = vmatpush1.msra.mxu0 0.0
      %1595 = vmatprep.subr.mxu0 0.0
      %1596 = vmatpush1.msra.mxu0 0.0
      %1597 = vmatprep.subr.mxu0 0.0
      %1598 = vmatpush1.msra.mxu0 0.0
      %1599 = vmatprep.subr.mxu0 0.0
      %1600 = vmatpush1.msra.mxu0 0.0
      %1601 = vmatprep.subr.mxu0 0.0
      %1602 = vmatpush1.msra.mxu0 0.0
      %1603 = vmatprep.subr.mxu0 0.0
      %1604 = vmatpush1.msra.mxu0 0.0
      %1605 = vmatprep.subr.mxu0 0.0
      %1606 = vmatpush1.msra.mxu0 0.0
      %1607 = vmatprep.subr.mxu0 0.0
      %1608 = vmatpush1.msra.mxu0 0.0
      %1609 = vmatprep.subr.mxu0 0.0
      %1610 = vmatpush1.msra.mxu0 0.0
      %1611 = vmatprep.subr.mxu0 0.0
      %1612 = vmatpush1.msra.mxu0 0.0
      %1613 = vmatprep.subr.mxu0 0.0
      %1614 = vmatpush1.msra.mxu0 0.0
      %1615 = vmatprep.subr.mxu0 0.0
      %1616 = vmatpush1.msra.mxu0 0.0
      %1617 = vmatprep.subr.mxu0 0.0
      %1618 = vmatpush1.msra.mxu0 0.0
      %1619 = vmatprep.subr.mxu0 0.0
      %1620 = vmatpush1.msra.mxu0 0.0
      %1621 = vmatprep.mubr.f32.mxu0 0.0
      %1622 = vmatmul.mubr.f32.gmra.mrb[0].mxu0 %v1555
      %v1623 = vpop.f32.mrb[0].mxu0
      %v1624 = vadd.f32 0.0, %v1623
      %v1625 = vpop.f32.mrb[0].mxu0
      %1626 = vdwg.mxu0
      %v1628 = vsel %vm1553, %v1550, 0
      %1630 = vmatprep.subr.mxu0 0.0
      %1631 = vmatpush1.msra.mxu0 %v489
      %1632 = vmatprep.subr.mxu0 0.0
      %1633 = vmatpush1.msra.mxu0 %v490
      %1634 = vmatprep.subr.mxu0 0.0
      %1635 = vmatpush1.msra.mxu0 %v491
      %1636 = vmatprep.subr.mxu0 0.0
      %1637 = vmatpush1.msra.mxu0 %v492
      %1638 = vmatprep.subr.mxu0 0.0
      %1639 = vmatpush1.msra.mxu0 0.0
      %1640 = vmatprep.subr.mxu0 0.0
      %1641 = vmatpush1.msra.mxu0 0.0
      %1642 = vmatprep.subr.mxu0 0.0
      %1643 = vmatpush1.msra.mxu0 0.0
      %1644 = vmatprep.subr.mxu0 0.0
      %1645 = vmatpush1.msra.mxu0 0.0
      %1646 = vmatprep.subr.mxu0 0.0
      %1647 = vmatpush1.msra.mxu0 0.0
      %1648 = vmatprep.subr.mxu0 0.0
      %1649 = vmatpush1.msra.mxu0 0.0
      %1650 = vmatprep.subr.mxu0 0.0
      %1651 = vmatpush1.msra.mxu0 0.0
      %1652 = vmatprep.subr.mxu0 0.0
      %1653 = vmatpush1.msra.mxu0 0.0
      %1654 = vmatprep.subr.mxu0 0.0
      %1655 = vmatpush1.msra.mxu0 0.0
      %1656 = vmatprep.subr.mxu0 0.0
      %1657 = vmatpush1.msra.mxu0 0.0
      %1658 = vmatprep.subr.mxu0 0.0
      %1659 = vmatpush1.msra.mxu0 0.0
      %1660 = vmatprep.subr.mxu0 0.0
      %1661 = vmatpush1.msra.mxu0 0.0
      %1662 = vmatprep.subr.mxu0 0.0
      %1663 = vmatpush1.msra.mxu0 0.0
      %1664 = vmatprep.subr.mxu0 0.0
      %1665 = vmatpush1.msra.mxu0 0.0
      %1666 = vmatprep.subr.mxu0 0.0
      %1667 = vmatpush1.msra.mxu0 0.0
      %1668 = vmatprep.subr.mxu0 0.0
      %1669 = vmatpush1.msra.mxu0 0.0
      %1670 = vmatprep.subr.mxu0 0.0
      %1671 = vmatpush1.msra.mxu0 0.0
      %1672 = vmatprep.subr.mxu0 0.0
      %1673 = vmatpush1.msra.mxu0 0.0
      %1674 = vmatprep.subr.mxu0 0.0
      %1675 = vmatpush1.msra.mxu0 0.0
      %1676 = vmatprep.subr.mxu0 0.0
      %1677 = vmatpush1.msra.mxu0 0.0
      %1678 = vmatprep.subr.mxu0 0.0
      %1679 = vmatpush1.msra.mxu0 0.0
      %1680 = vmatprep.subr.mxu0 0.0
      %1681 = vmatpush1.msra.mxu0 0.0
      %1682 = vmatprep.subr.mxu0 0.0
      %1683 = vmatpush1.msra.mxu0 0.0
      %1684 = vmatprep.subr.mxu0 0.0
      %1685 = vmatpush1.msra.mxu0 0.0
      %1686 = vmatprep.subr.mxu0 0.0
      %1687 = vmatpush1.msra.mxu0 0.0
      %1688 = vmatprep.subr.mxu0 0.0
      %1689 = vmatpush1.msra.mxu0 0.0
      %1690 = vmatprep.subr.mxu0 0.0
      %1691 = vmatpush1.msra.mxu0 0.0
      %1692 = vmatprep.subr.mxu0 0.0
      %1693 = vmatpush1.msra.mxu0 0.0
      %1694 = vmatprep.mubr.f32.mxu0 0.0
      %1695 = vmatmul.mubr.f32.gmra.mrb[0].mxu0 %v1628
      %v1696 = vpop.f32.mrb[0].mxu0
      %v1697 = vadd.f32 0.0, %v1696
      %v1698 = vpop.f32.mrb[0].mxu0
      %1699 = vdwg.mxu0
      %v1700 = vmul.f32 %v1624, %v1624
      %v1701 = vsub.f32 %v1697, %v1700
      %v1702 = vadd.f32 %v1701, 1e-05
      %v1703 = vrsqrt.pop %v1702
      %v1704 = vmul.f32 %v1194, %v1703
      %v1705 = vmul.f32 %v1624, %v1704
      %v1706 = vsub.f32 %v1195, %v1705
      %v1708 = vlaneseq
      %v1709 = vshrl.u32 %v1708, 7
      %v1710 = vsub.s32 0, %v1709
      %v1711 = vrot.slane %v1704, %v1710
      %v1713 = vmul.f32 %v980, %v1711
      %v1714 = vmul.f32 %v983, %v1711
      %v1715 = vmul.f32 %v988, %v1711
      %v1716 = vmul.f32 %v991, %v1711
      %v1717 = vmul.f32 %v996, %v1711
      %v1718 = vmul.f32 %v999, %v1711
      %v1719 = vmul.f32 %v1004, %v1711
      %v1720 = vmul.f32 %v1007, %v1711
      %v1721 = vmul.f32 %v1012, %v1711
      %v1722 = vmul.f32 %v1015, %v1711
      %v1723 = vmul.f32 %v1020, %v1711
      %v1724 = vmul.f32 %v1023, %v1711
      %v1725 = vmul.f32 %v1028, %v1711
      %v1726 = vmul.f32 %v1031, %v1711
      %v1727 = vmul.f32 %v1036, %v1711
      %v1728 = vmul.f32 %v1039, %v1711
      %v1729 = vmul.f32 %v1044, %v1711
      %v1730 = vmul.f32 %v1047, %v1711
      %v1731 = vmul.f32 %v1052, %v1711
      %v1732 = vmul.f32 %v1055, %v1711
      %v1733 = vmul.f32 %v1060, %v1711
      %v1734 = vmul.f32 %v1063, %v1711
      %v1735 = vmul.f32 %v1068, %v1711
      %v1736 = vmul.f32 %v1071, %v1711
      %v1737 = vmul.f32 %v1076, %v1711
      %v1738 = vmul.f32 %v1079, %v1711
      %v1739 = vmul.f32 %v1084, %v1711
      %v1740 = vmul.f32 %v1087, %v1711
      %v1741 = vmul.f32 %v1092, %v1711
      %v1742 = vmul.f32 %v1095, %v1711
      %v1743 = vmul.f32 %v1100, %v1711
      %v1744 = vmul.f32 %v1103, %v1711
      %v1745 = vmul.f32 %v1108, %v1711
      %v1746 = vmul.f32 %v1111, %v1711
      %v1747 = vmul.f32 %v1116, %v1711
      %v1748 = vmul.f32 %v1119, %v1711
      %v1749 = vmul.f32 %v1124, %v1711
      %v1750 = vmul.f32 %v1127, %v1711
      %v1751 = vmul.f32 %v1132, %v1711
      %v1752 = vmul.f32 %v1135, %v1711
      %v1753 = vmul.f32 %v1140, %v1711
      %v1754 = vmul.f32 %v1143, %v1711
      %v1755 = vmul.f32 %v1148, %v1711
      %v1756 = vmul.f32 %v1151, %v1711
      %v1757 = vmul.f32 %v1156, %v1711
      %v1758 = vmul.f32 %v1159, %v1711
      %v1759 = vmul.f32 %v1164, %v1711
      %v1760 = vmul.f32 %v1167, %v1711
      %v1761 = vmul.f32 %v1172, %v1711
      %v1762 = vmul.f32 %v1175, %v1711
      %v1763 = vmul.f32 %v1180, %v1711
      %v1764 = vmul.f32 %v1183, %v1711
      %v1765 = vmul.f32 %v1188, %v1711
      %v1766 = vmul.f32 %v1191, %v1711
      %v1768 = vlaneseq
      %v1769 = vshrl.u32 %v1768, 7
      %v1770 = vsub.s32 0, %v1769
      %v1771 = vrot.slane %v1706, %v1770
      %v1773 = vadd.f32 %v1713, %v1771
      %v1774 = vadd.f32 %v1714, %v1771
      %v1775 = vadd.f32 %v1715, %v1771
      %v1776 = vadd.f32 %v1716, %v1771
      %v1777 = vadd.f32 %v1717, %v1771
      %v1778 = vadd.f32 %v1718, %v1771
      %v1779 = vadd.f32 %v1719, %v1771
      %v1780 = vadd.f32 %v1720, %v1771
      %v1781 = vadd.f32 %v1721, %v1771
      %v1782 = vadd.f32 %v1722, %v1771
      %v1783 = vadd.f32 %v1723, %v1771
      %v1784 = vadd.f32 %v1724, %v1771
      %v1785 = vadd.f32 %v1725, %v1771
      %v1786 = vadd.f32 %v1726, %v1771
      %v1787 = vadd.f32 %v1727, %v1771
      %v1788 = vadd.f32 %v1728, %v1771
      %v1789 = vadd.f32 %v1729, %v1771
      %v1790 = vadd.f32 %v1730, %v1771
      %v1791 = vadd.f32 %v1731, %v1771
      %v1792 = vadd.f32 %v1732, %v1771
      %v1793 = vadd.f32 %v1733, %v1771
      %v1794 = vadd.f32 %v1734, %v1771
      %v1795 = vadd.f32 %v1735, %v1771
      %v1796 = vadd.f32 %v1736, %v1771
      %v1797 = vadd.f32 %v1737, %v1771
      %v1798 = vadd.f32 %v1738, %v1771
      %v1799 = vadd.f32 %v1739, %v1771
      %v1800 = vadd.f32 %v1740, %v1771
      %v1801 = vadd.f32 %v1741, %v1771
      %v1802 = vadd.f32 %v1742, %v1771
      %v1803 = vadd.f32 %v1743, %v1771
      %v1804 = vadd.f32 %v1744, %v1771
      %v1805 = vadd.f32 %v1745, %v1771
      %v1806 = vadd.f32 %v1746, %v1771
      %v1807 = vadd.f32 %v1747, %v1771
      %v1808 = vadd.f32 %v1748, %v1771
      %v1809 = vadd.f32 %v1749, %v1771
      %v1810 = vadd.f32 %v1750, %v1771
      %v1811 = vadd.f32 %v1751, %v1771
      %v1812 = vadd.f32 %v1752, %v1771
      %v1813 = vadd.f32 %v1753, %v1771
      %v1814 = vadd.f32 %v1754, %v1771
      %v1815 = vadd.f32 %v1755, %v1771
      %v1816 = vadd.f32 %v1756, %v1771
      %v1817 = vadd.f32 %v1757, %v1771
      %v1818 = vadd.f32 %v1758, %v1771
      %v1819 = vadd.f32 %v1759, %v1771
      %v1820 = vadd.f32 %v1760, %v1771
      %v1821 = vadd.f32 %v1761, %v1771
      %v1822 = vadd.f32 %v1762, %v1771
      %v1823 = vadd.f32 %v1763, %v1771
      %v1824 = vadd.f32 %v1764, %v1771
      %v1825 = vadd.f32 %v1765, %v1771
      %v1826 = vadd.f32 %v1766, %v1771
      %v1827 = vmax.f32 %v1773, 0.0
      %v1828 = vmax.f32 %v1774, 0.0
      %v1829 = vmax.f32 %v1775, 0.0
      %v1830 = vmax.f32 %v1776, 0.0
      %v1831 = vmax.f32 %v1777, 0.0
      %v1832 = vmax.f32 %v1778, 0.0
      %v1833 = vmax.f32 %v1779, 0.0
      %v1834 = vmax.f32 %v1780, 0.0
      %v1835 = vmax.f32 %v1781, 0.0
      %v1836 = vmax.f32 %v1782, 0.0
      %v1837 = vmax.f32 %v1783, 0.0
      %v1838 = vmax.f32 %v1784, 0.0
      %v1839 = vmax.f32 %v1785, 0.0
      %v1840 = vmax.f32 %v1786, 0.0
      %v1841 = vmax.f32 %v1787, 0.0
      %v1842 = vmax.f32 %v1788, 0.0
      %v1843 = vmax.f32 %v1789, 0.0
      %v1844 = vmax.f32 %v1790, 0.0
      %v1845 = vmax.f32 %v1791, 0.0
      %v1846 = vmax.f32 %v1792, 0.0
      %v1847 = vmax.f32 %v1793, 0.0
      %v1848 = vmax.f32 %v1794, 0.0
      %v1849 = vmax.f32 %v1795, 0.0
      %v1850 = vmax.f32 %v1796, 0.0
      %v1851 = vmax.f32 %v1797, 0.0
      %v1852 = vmax.f32 %v1798, 0.0
      %v1853 = vmax.f32 %v1799, 0.0
      %v1854 = vmax.f32 %v1800, 0.0
      %v1855 = vmax.f32 %v1801, 0.0
      %v1856 = vmax.f32 %v1802, 0.0
      %v1857 = vmax.f32 %v1803, 0.0
      %v1858 = vmax.f32 %v1804, 0.0
      %v1859 = vmax.f32 %v1805, 0.0
      %v1860 = vmax.f32 %v1806, 0.0
      %v1861 = vmax.f32 %v1807, 0.0
      %v1862 = vmax.f32 %v1808, 0.0
      %v1863 = vmax.f32 %v1809, 0.0
      %v1864 = vmax.f32 %v1810, 0.0
      %v1865 = vmax.f32 %v1811, 0.0
      %v1866 = vmax.f32 %v1812, 0.0
      %v1867 = vmax.f32 %v1813, 0.0
      %v1868 = vmax.f32 %v1814, 0.0
      %v1869 = vmax.f32 %v1815, 0.0
      %v1870 = vmax.f32 %v1816, 0.0
      %v1871 = vmax.f32 %v1817, 0.0
      %v1872 = vmax.f32 %v1818, 0.0
      %v1873 = vmax.f32 %v1819, 0.0
      %v1874 = vmax.f32 %v1820, 0.0
      %v1875 = vmax.f32 %v1821, 0.0
      %v1876 = vmax.f32 %v1822, 0.0
      %v1877 = vmax.f32 %v1823, 0.0
      %v1878 = vmax.f32 %v1824, 0.0
      %v1879 = vmax.f32 %v1825, 0.0
      %v1880 = vmax.f32 %v1826, 0.0
      %v1881 = vld [vmem:[%s13] sm:$0xff]
      %v1882 = vld [vmem:[%s13 + $0x8] sm:$0xff]
      %v1883 = vld [vmem:[%s13 + $0x10] sm:$0xff]
      %v1884 = vld [vmem:[%s13 + $0x18] sm:$0xff]
      %v1885 = vld [vmem:[%s13 + $0x20] sm:$0xff]
      %v1886 = vld [vmem:[%s13 + $0x28] sm:$0xff]
      %v1887 = vld [vmem:[%s13 + $0x30] sm:$0xff]
      %v1888 = vld [vmem:[%s13 + $0x38] sm:$0xff]
      %v1889 = vld [vmem:[%s13 + $0x40] sm:$0xff]
      %v1890 = vld [vmem:[%s13 + $0x48] sm:$0xff]
      %v1891 = vld [vmem:[%s13 + $0x50] sm:$0xff]
      %v1892 = vld [vmem:[%s13 + $0x58] sm:$0xff]
      %v1893 = vld [vmem:[%s13 + $0x60] sm:$0xff]
      %v1894 = vld [vmem:[%s13 + $0x68] sm:$0xff]
      %v1895 = vld [vmem:[%s13 + $0x70] sm:$0xff]
      %v1896 = vld [vmem:[%s13 + $0x78] sm:$0xff]
      %v1897 = vld [vmem:[%s13 + $0x80] sm:$0xff]
      %v1898 = vld [vmem:[%s13 + $0x88] sm:$0xff]
      %v1899 = vld [vmem:[%s13 + $0x90] sm:$0xff]
      %v1900 = vld [vmem:[%s13 + $0x98] sm:$0xff]
      %v1901 = vld [vmem:[%s13 + $0xa0] sm:$0xff]
      %v1902 = vld [vmem:[%s13 + $0xa8] sm:$0xff]
      %v1903 = vld [vmem:[%s13 + $0xb0] sm:$0xff]
      %v1904 = vld [vmem:[%s13 + $0xb8] sm:$0xff]
      %v1905 = vld [vmem:[%s13 + $0xc0] sm:$0xff]
      %v1906 = vld [vmem:[%s13 + $0xc8] sm:$0xff]
      %v1907 = vld [vmem:[%s13 + $0xd0] sm:$0xff]
      %v1908 = vld [vmem:[%s13 + $0xd8] sm:$0xff]
      %v1909 = vld [vmem:[%s13 + $0xe0] sm:$0xff]
      %v1910 = vld [vmem:[%s13 + $0xe8] sm:$0xff]
      %v1911 = vld [vmem:[%s13 + $0xf0] sm:$0xff]
      %v1912 = vld [vmem:[%s13 + $0xf8] sm:$0xff]
      %v1913 = vld [vmem:[%s13 + $0x100] sm:$0xff]
      %v1914 = vld [vmem:[%s13 + $0x108] sm:$0xff]
      %v1915 = vld [vmem:[%s13 + $0x110] sm:$0xff]
      %v1916 = vld [vmem:[%s13 + $0x118] sm:$0xff]
      %v1917 = vld [vmem:[%s13 + $0x120] sm:$0xff]
      %v1918 = vld [vmem:[%s13 + $0x128] sm:$0xff]
      %v1919 = vld [vmem:[%s13 + $0x130] sm:$0xff]
      %v1920 = vld [vmem:[%s13 + $0x138] sm:$0xff]
      %v1921 = vld [vmem:[%s13 + $0x140] sm:$0xff]
      %v1922 = vld [vmem:[%s13 + $0x148] sm:$0xff]
      %v1923 = vld [vmem:[%s13 + $0x150] sm:$0xff]
      %v1924 = vld [vmem:[%s13 + $0x158] sm:$0xff]
      %v1925 = vld [vmem:[%s13 + $0x160] sm:$0xff]
      %v1926 = vld [vmem:[%s13 + $0x168] sm:$0xff]
      %v1927 = vld [vmem:[%s13 + $0x170] sm:$0xff]
      %v1928 = vld [vmem:[%s13 + $0x178] sm:$0xff]
      %v1929 = vld [vmem:[%s13 + $0x180] sm:$0xff]
      %v1930 = vld [vmem:[%s13 + $0x188] sm:$0xff]
      %v1931 = vld [vmem:[%s13 + $0x190] sm:$0xff]
      %v1932 = vld [vmem:[%s13 + $0x198] sm:$0xff]
      %v1933 = vld [vmem:[%s13 + $0x1a0] sm:$0xff]
      %v1934 = vld [vmem:[%s13 + $0x1a8] sm:$0xff]
      %1936 = vset.pattern.permute.xlu0 0
      %1937 = vperm.xlu0 %1936, %v1881
      %v1938 = vpop.permute.xlu0 %1937
      %1941 = vset.pattern.permute.xlu0 0
      %1942 = vperm.xlu0 %1941, %v1882
      %v1943 = vpop.permute.xlu0 %1942
      %1946 = vset.pattern.permute.xlu0 0
      %1947 = vperm.xlu0 %1946, %v1883
      %v1948 = vpop.permute.xlu0 %1947
      %1951 = vset.pattern.permute.xlu0 0
      %1952 = vperm.xlu0 %1951, %v1884
      %v1953 = vpop.permute.xlu0 %1952
      %1956 = vset.pattern.permute.xlu0 0
      %1957 = vperm.xlu0 %1956, %v1885
      %v1958 = vpop.permute.xlu0 %1957
      %1961 = vset.pattern.permute.xlu0 0
      %1962 = vperm.xlu0 %1961, %v1886
      %v1963 = vpop.permute.xlu0 %1962
      %1966 = vset.pattern.permute.xlu0 0
      %1967 = vperm.xlu0 %1966, %v1887
      %v1968 = vpop.permute.xlu0 %1967
      %1971 = vset.pattern.permute.xlu0 0
      %1972 = vperm.xlu0 %1971, %v1888
      %v1973 = vpop.permute.xlu0 %1972
      %1976 = vset.pattern.permute.xlu0 0
      %1977 = vperm.xlu0 %1976, %v1889
      %v1978 = vpop.permute.xlu0 %1977
      %1981 = vset.pattern.permute.xlu0 0
      %1982 = vperm.xlu0 %1981, %v1890
      %v1983 = vpop.permute.xlu0 %1982
      %1986 = vset.pattern.permute.xlu0 0
      %1987 = vperm.xlu0 %1986, %v1891
      %v1988 = vpop.permute.xlu0 %1987
      %1991 = vset.pattern.permute.xlu0 0
      %1992 = vperm.xlu0 %1991, %v1892
      %v1993 = vpop.permute.xlu0 %1992
      %1996 = vset.pattern.permute.xlu0 0
      %1997 = vperm.xlu0 %1996, %v1893
      %v1998 = vpop.permute.xlu0 %1997
      %2001 = vset.pattern.permute.xlu0 0
      %2002 = vperm.xlu0 %2001, %v1894
      %v2003 = vpop.permute.xlu0 %2002
      %2006 = vset.pattern.permute.xlu0 0
      %2007 = vperm.xlu0 %2006, %v1895
      %v2008 = vpop.permute.xlu0 %2007
      %2011 = vset.pattern.permute.xlu0 0
      %2012 = vperm.xlu0 %2011, %v1896
      %v2013 = vpop.permute.xlu0 %2012
      %2016 = vset.pattern.permute.xlu0 0
      %2017 = vperm.xlu0 %2016, %v1897
      %v2018 = vpop.permute.xlu0 %2017
      %2021 = vset.pattern.permute.xlu0 0
      %2022 = vperm.xlu0 %2021, %v1898
      %v2023 = vpop.permute.xlu0 %2022
      %2026 = vset.pattern.permute.xlu0 0
      %2027 = vperm.xlu0 %2026, %v1899
      %v2028 = vpop.permute.xlu0 %2027
      %2031 = vset.pattern.permute.xlu0 0
      %2032 = vperm.xlu0 %2031, %v1900
      %v2033 = vpop.permute.xlu0 %2032
      %2036 = vset.pattern.permute.xlu0 0
      %2037 = vperm.xlu0 %2036, %v1901
      %v2038 = vpop.permute.xlu0 %2037
      %2041 = vset.pattern.permute.xlu0 0
      %2042 = vperm.xlu0 %2041, %v1902
      %v2043 = vpop.permute.xlu0 %2042
      %2046 = vset.pattern.permute.xlu0 0
      %2047 = vperm.xlu0 %2046, %v1903
      %v2048 = vpop.permute.xlu0 %2047
      %2051 = vset.pattern.permute.xlu0 0
      %2052 = vperm.xlu0 %2051, %v1904
      %v2053 = vpop.permute.xlu0 %2052
      %2056 = vset.pattern.permute.xlu0 0
      %2057 = vperm.xlu0 %2056, %v1905
      %v2058 = vpop.permute.xlu0 %2057
      %2061 = vset.pattern.permute.xlu0 0
      %2062 = vperm.xlu0 %2061, %v1906
      %v2063 = vpop.permute.xlu0 %2062
      %2066 = vset.pattern.permute.xlu0 0
      %2067 = vperm.xlu0 %2066, %v1907
      %v2068 = vpop.permute.xlu0 %2067
      %2071 = vset.pattern.permute.xlu0 0
      %2072 = vperm.xlu0 %2071, %v1908
      %v2073 = vpop.permute.xlu0 %2072
      %2076 = vset.pattern.permute.xlu0 0
      %2077 = vperm.xlu0 %2076, %v1909
      %v2078 = vpop.permute.xlu0 %2077
      %2081 = vset.pattern.permute.xlu0 0
      %2082 = vperm.xlu0 %2081, %v1910
      %v2083 = vpop.permute.xlu0 %2082
      %2086 = vset.pattern.permute.xlu0 0
      %2087 = vperm.xlu0 %2086, %v1911
      %v2088 = vpop.permute.xlu0 %2087
      %2091 = vset.pattern.permute.xlu0 0
      %2092 = vperm.xlu0 %2091, %v1912
      %v2093 = vpop.permute.xlu0 %2092
      %2096 = vset.pattern.permute.xlu0 0
      %2097 = vperm.xlu0 %2096, %v1913
      %v2098 = vpop.permute.xlu0 %2097
      %2101 = vset.pattern.permute.xlu0 0
      %2102 = vperm.xlu0 %2101, %v1914
      %v2103 = vpop.permute.xlu0 %2102
      %2106 = vset.pattern.permute.xlu0 0
      %2107 = vperm.xlu0 %2106, %v1915
      %v2108 = vpop.permute.xlu0 %2107
      %2111 = vset.pattern.permute.xlu0 0
      %2112 = vperm.xlu0 %2111, %v1916
      %v2113 = vpop.permute.xlu0 %2112
      %2116 = vset.pattern.permute.xlu0 0
      %2117 = vperm.xlu0 %2116, %v1917
      %v2118 = vpop.permute.xlu0 %2117
      %2121 = vset.pattern.permute.xlu0 0
      %2122 = vperm.xlu0 %2121, %v1918
      %v2123 = vpop.permute.xlu0 %2122
      %2126 = vset.pattern.permute.xlu0 0
      %2127 = vperm.xlu0 %2126, %v1919
      %v2128 = vpop.permute.xlu0 %2127
      %2131 = vset.pattern.permute.xlu0 0
      %2132 = vperm.xlu0 %2131, %v1920
      %v2133 = vpop.permute.xlu0 %2132
      %2136 = vset.pattern.permute.xlu0 0
      %2137 = vperm.xlu0 %2136, %v1921
      %v2138 = vpop.permute.xlu0 %2137
      %2141 = vset.pattern.permute.xlu0 0
      %2142 = vperm.xlu0 %2141, %v1922
      %v2143 = vpop.permute.xlu0 %2142
      %2146 = vset.pattern.permute.xlu0 0
      %2147 = vperm.xlu0 %2146, %v1923
      %v2148 = vpop.permute.xlu0 %2147
      %2151 = vset.pattern.permute.xlu0 0
      %2152 = vperm.xlu0 %2151, %v1924
      %v2153 = vpop.permute.xlu0 %2152
      %2156 = vset.pattern.permute.xlu0 0
      %2157 = vperm.xlu0 %2156, %v1925
      %v2158 = vpop.permute.xlu0 %2157
      %2161 = vset.pattern.permute.xlu0 0
      %2162 = vperm.xlu0 %2161, %v1926
      %v2163 = vpop.permute.xlu0 %2162
      %2166 = vset.pattern.permute.xlu0 0
      %2167 = vperm.xlu0 %2166, %v1927
      %v2168 = vpop.permute.xlu0 %2167
      %2171 = vset.pattern.permute.xlu0 0
      %2172 = vperm.xlu0 %2171, %v1928
      %v2173 = vpop.permute.xlu0 %2172
      %2176 = vset.pattern.permute.xlu0 0
      %2177 = vperm.xlu0 %2176, %v1929
      %v2178 = vpop.permute.xlu0 %2177
      %2181 = vset.pattern.permute.xlu0 0
      %2182 = vperm.xlu0 %2181, %v1930
      %v2183 = vpop.permute.xlu0 %2182
      %2186 = vset.pattern.permute.xlu0 0
      %2187 = vperm.xlu0 %2186, %v1931
      %v2188 = vpop.permute.xlu0 %2187
      %2191 = vset.pattern.permute.xlu0 0
      %2192 = vperm.xlu0 %2191, %v1932
      %v2193 = vpop.permute.xlu0 %2192
      %2196 = vset.pattern.permute.xlu0 0
      %2197 = vperm.xlu0 %2196, %v1933
      %v2198 = vpop.permute.xlu0 %2197
      %2201 = vset.pattern.permute.xlu0 0
      %2202 = vperm.xlu0 %2201, %v1934
      %v2203 = vpop.permute.xlu0 %2202
      %v2205 = vmul.f32 %v1827, %v1938
      %v2206 = vmul.f32 %v1828, %v1943
      %v2207 = vmul.f32 %v1829, %v1948
      %v2208 = vmul.f32 %v1830, %v1953
      %v2209 = vmul.f32 %v1831, %v1958
      %v2210 = vmul.f32 %v1832, %v1963
      %v2211 = vmul.f32 %v1833, %v1968
      %v2212 = vmul.f32 %v1834, %v1973
      %v2213 = vmul.f32 %v1835, %v1978
      %v2214 = vmul.f32 %v1836, %v1983
      %v2215 = vmul.f32 %v1837, %v1988
      %v2216 = vmul.f32 %v1838, %v1993
      %v2217 = vmul.f32 %v1839, %v1998
      %v2218 = vmul.f32 %v1840, %v2003
      %v2219 = vmul.f32 %v1841, %v2008
      %v2220 = vmul.f32 %v1842, %v2013
      %v2221 = vmul.f32 %v1843, %v2018
      %v2222 = vmul.f32 %v1844, %v2023
      %v2223 = vmul.f32 %v1845, %v2028
      %v2224 = vmul.f32 %v1846, %v2033
      %v2225 = vmul.f32 %v1847, %v2038
      %v2226 = vmul.f32 %v1848, %v2043
      %v2227 = vmul.f32 %v1849, %v2048
      %v2228 = vmul.f32 %v1850, %v2053
      %v2229 = vmul.f32 %v1851, %v2058
      %v2230 = vmul.f32 %v1852, %v2063
      %v2231 = vmul.f32 %v1853, %v2068
      %v2232 = vmul.f32 %v1854, %v2073
      %v2233 = vmul.f32 %v1855, %v2078
      %v2234 = vmul.f32 %v1856, %v2083
      %v2235 = vmul.f32 %v1857, %v2088
      %v2236 = vmul.f32 %v1858, %v2093
      %v2237 = vmul.f32 %v1859, %v2098
      %v2238 = vmul.f32 %v1860, %v2103
      %v2239 = vmul.f32 %v1861, %v2108
      %v2240 = vmul.f32 %v1862, %v2113
      %v2241 = vmul.f32 %v1863, %v2118
      %v2242 = vmul.f32 %v1864, %v2123
      %v2243 = vmul.f32 %v1865, %v2128
      %v2244 = vmul.f32 %v1866, %v2133
      %v2245 = vmul.f32 %v1867, %v2138
      %v2246 = vmul.f32 %v1868, %v2143
      %v2247 = vmul.f32 %v1869, %v2148
      %v2248 = vmul.f32 %v1870, %v2153
      %v2249 = vmul.f32 %v1871, %v2158
      %v2250 = vmul.f32 %v1872, %v2163
      %v2251 = vmul.f32 %v1873, %v2168
      %v2252 = vmul.f32 %v1874, %v2173
      %v2253 = vmul.f32 %v1875, %v2178
      %v2254 = vmul.f32 %v1876, %v2183
      %v2255 = vmul.f32 %v1877, %v2188
      %v2256 = vmul.f32 %v1878, %v2193
      %v2257 = vmul.f32 %v1879, %v2198
      %v2258 = vmul.f32 %v1880, %v2203
      %v2259 = vld [vmem:[%s3] sm:$0xf]
      %v2260 = vld [vmem:[%s3 + $0x4] sm:$0xf]
      %v2261 = vld [vmem:[%s3 + $0x8] sm:$0xf]
      %v2262 = vld [vmem:[%s3 + $0xc] sm:$0xf]
      %v2263 = vld [vmem:[%s3 + $0x10] sm:$0xf]
      %v2264 = vld [vmem:[%s3 + $0x14] sm:$0xf]
      %v2265 = vld [vmem:[%s3 + $0x18] sm:$0xf]
      %v2266 = vld [vmem:[%s3 + $0x1c] sm:$0xf]
      %v2267 = vld [vmem:[%s3 + $0x20] sm:$0xf]
      %v2268 = vld [vmem:[%s3 + $0x24] sm:$0xf]
      %v2269 = vld [vmem:[%s3 + $0x28] sm:$0xf]
      %v2270 = vld [vmem:[%s3 + $0x2c] sm:$0xf]
      %v2271 = vld [vmem:[%s3 + $0x30] sm:$0xf]
      %v2272 = vld [vmem:[%s3 + $0x34] sm:$0xf]
      %v2273 = vld [vmem:[%s3 + $0x38] sm:$0xf]
      %v2274 = vld [vmem:[%s3 + $0x3c] sm:$0xf]
      %v2275 = vld [vmem:[%s3 + $0x40] sm:$0xf]
      %v2276 = vld [vmem:[%s3 + $0x44] sm:$0xf]
      %v2277 = vld [vmem:[%s3 + $0x48] sm:$0xf]
      %v2278 = vld [vmem:[%s3 + $0x4c] sm:$0xf]
      %v2279 = vld [vmem:[%s3 + $0x50] sm:$0xf]
      %v2280 = vld [vmem:[%s3 + $0x54] sm:$0xf]
      %v2281 = vld [vmem:[%s3 + $0x58] sm:$0xf]
      %v2282 = vld [vmem:[%s3 + $0x5c] sm:$0xf]
      %v2283 = vld [vmem:[%s3 + $0x60] sm:$0xf]
      %v2284 = vld [vmem:[%s3 + $0x64] sm:$0xf]
      %v2285 = vld [vmem:[%s3 + $0x68] sm:$0xf]
      %v2286 = vld [vmem:[%s3 + $0x6c] sm:$0xf]
      %v2287 = vld [vmem:[%s3 + $0x70] sm:$0xf]
      %v2288 = vld [vmem:[%s3 + $0x74] sm:$0xf]
      %v2289 = vld [vmem:[%s3 + $0x78] sm:$0xf]
      %v2290 = vld [vmem:[%s3 + $0x7c] sm:$0xf]
      %v2291 = vld [vmem:[%s3 + $0x80] sm:$0xf]
      %v2292 = vld [vmem:[%s3 + $0x84] sm:$0xf]
      %v2293 = vld [vmem:[%s3 + $0x88] sm:$0xf]
      %v2294 = vld [vmem:[%s3 + $0x8c] sm:$0xf]
      %v2295 = vpack.c.bf16 %v2206, %v2205
      %v2296 = vpack.c.bf16 %v2209, %v2208
      %v2297 = vpack.c.bf16 %v2212, %v2211
      %v2298 = vpack.c.bf16 %v2215, %v2214
      %v2299 = vpack.c.bf16 %v2218, %v2217
      %v2300 = vpack.c.bf16 %v2221, %v2220
      %v2301 = vpack.c.bf16 %v2224, %v2223
      %v2302 = vpack.c.bf16 %v2227, %v2226
      %v2303 = vpack.c.bf16 %v2230, %v2229
      %v2304 = vpack.c.bf16 %v2233, %v2232
      %v2305 = vpack.c.bf16 %v2236, %v2235
      %v2306 = vpack.c.bf16 %v2239, %v2238
      %v2307 = vpack.c.bf16 %v2242, %v2241
      %v2308 = vpack.c.bf16 %v2245, %v2244
      %v2309 = vpack.c.bf16 %v2248, %v2247
      %v2310 = vpack.c.bf16 %v2251, %v2250
      %vm2359 = vcmask 1046528
      %v2360 = vrot.slane %v2205, 1
      %v2361 = vrot.slane %v2206, 1
      %v2362 = vsel %vm2359, %v2360, %v2361
      %v2363 = vrot.slane %v2207, 1
      %v2364 = vsel %vm2359, %v2361, %v2363
      %v2365 = vrot.slane %v2208, 1
      %v2366 = vrot.slane %v2209, 1
      %v2367 = vsel %vm2359, %v2365, %v2366
      %v2368 = vrot.slane %v2210, 1
      %v2369 = vsel %vm2359, %v2366, %v2368
      %v2370 = vrot.slane %v2211, 1
      %v2371 = vrot.slane %v2212, 1
      %v2372 = vsel %vm2359, %v2370, %v2371
      %v2373 = vrot.slane %v2213, 1
      %v2374 = vsel %vm2359, %v2371, %v2373
      %v2375 = vrot.slane %v2214, 1
      %v2376 = vrot.slane %v2215, 1
      %v2377 = vsel %vm2359, %v2375, %v2376
      %v2378 = vrot.slane %v2216, 1
      %v2379 = vsel %vm2359, %v2376, %v2378
      %v2380 = vrot.slane %v2217, 1
      %v2381 = vrot.slane %v2218, 1
      %v2382 = vsel %vm2359, %v2380, %v2381
      %v2383 = vrot.slane %v2219, 1
      %v2384 = vsel %vm2359, %v2381, %v2383
      %v2385 = vrot.slane %v2220, 1
      %v2386 = vrot.slane %v2221, 1
      %v2387 = vsel %vm2359, %v2385, %v2386
      %v2388 = vrot.slane %v2222, 1
      %v2389 = vsel %vm2359, %v2386, %v2388
      %v2390 = vrot.slane %v2223, 1
      %v2391 = vrot.slane %v2224, 1
      %v2392 = vsel %vm2359, %v2390, %v2391
      %v2393 = vrot.slane %v2225, 1
      %v2394 = vsel %vm2359, %v2391, %v2393
      %v2395 = vrot.slane %v2226, 1
      %v2396 = vrot.slane %v2227, 1
      %v2397 = vsel %vm2359, %v2395, %v2396
      %v2398 = vrot.slane %v2228, 1
      %v2399 = vsel %vm2359, %v2396, %v2398
      %v2400 = vrot.slane %v2229, 1
      %v2401 = vrot.slane %v2230, 1
      %v2402 = vsel %vm2359, %v2400, %v2401
      %v2403 = vrot.slane %v2231, 1
      %v2404 = vsel %vm2359, %v2401, %v2403
      %v2405 = vrot.slane %v2232, 1
      %v2406 = vrot.slane %v2233, 1
      %v2407 = vsel %vm2359, %v2405, %v2406
      %v2408 = vrot.slane %v2234, 1
      %v2409 = vsel %vm2359, %v2406, %v2408
      %v2410 = vrot.slane %v2235, 1
      %v2411 = vrot.slane %v2236, 1
      %v2412 = vsel %vm2359, %v2410, %v2411
      %v2413 = vrot.slane %v2237, 1
      %v2414 = vsel %vm2359, %v2411, %v2413
      %v2415 = vrot.slane %v2238, 1
      %v2416 = vrot.slane %v2239, 1
      %v2417 = vsel %vm2359, %v2415, %v2416
      %v2418 = vrot.slane %v2240, 1
      %v2419 = vsel %vm2359, %v2416, %v2418
      %v2420 = vrot.slane %v2241, 1
      %v2421 = vrot.slane %v2242, 1
      %v2422 = vsel %vm2359, %v2420, %v2421
      %v2423 = vrot.slane %v2243, 1
      %v2424 = vsel %vm2359, %v2421, %v2423
      %v2425 = vrot.slane %v2244, 1
      %v2426 = vrot.slane %v2245, 1
      %v2427 = vsel %vm2359, %v2425, %v2426
      %v2428 = vrot.slane %v2246, 1
      %v2429 = vsel %vm2359, %v2426, %v2428
      %v2430 = vrot.slane %v2247, 1
      %v2431 = vrot.slane %v2248, 1
      %v2432 = vsel %vm2359, %v2430, %v2431
      %v2433 = vrot.slane %v2249, 1
      %v2434 = vsel %vm2359, %v2431, %v2433
      %v2435 = vrot.slane %v2250, 1
      %v2436 = vrot.slane %v2251, 1
      %v2437 = vsel %vm2359, %v2435, %v2436
      %v2438 = vrot.slane %v2252, 1
      %v2439 = vsel %vm2359, %v2436, %v2438
      %v2472 = vpack.c.bf16 %v2364, %v2362
      %v2473 = vpack.c.bf16 %v2369, %v2367
      %v2474 = vpack.c.bf16 %v2374, %v2372
      %v2475 = vpack.c.bf16 %v2379, %v2377
      %v2476 = vpack.c.bf16 %v2384, %v2382
      %v2477 = vpack.c.bf16 %v2389, %v2387
      %v2478 = vpack.c.bf16 %v2394, %v2392
      %v2479 = vpack.c.bf16 %v2399, %v2397
      %v2480 = vpack.c.bf16 %v2404, %v2402
      %v2481 = vpack.c.bf16 %v2409, %v2407
      %v2482 = vpack.c.bf16 %v2414, %v2412
      %v2483 = vpack.c.bf16 %v2419, %v2417
      %v2484 = vpack.c.bf16 %v2424, %v2422
      %v2485 = vpack.c.bf16 %v2429, %v2427
      %v2486 = vpack.c.bf16 %v2434, %v2432
      %v2487 = vpack.c.bf16 %v2439, %v2437
      %v2492 = vunpack.c.l.b16 %v2263
      %v2493 = vunpack.c.l.b16 %v2264
      %v2494 = vunpack.c.l.b16 %v2265
      %v2495 = vunpack.c.l.b16 %v2266
      %v2496 = vpack.c.b16 %v2493, %v2492
      %v2497 = vpack.c.b16 %v2495, %v2494
      %v2501 = vsel %vm1553, %v2472, 0
      %v2504 = vsel %vm1553, %v2473, 0
      %v2507 = vsel %vm1553, %v2474, 0
      %v2510 = vsel %vm1553, %v2475, 0
      %v2513 = vsel %vm1553, %v2476, 0
      %v2516 = vsel %vm1553, %v2477, 0
      %v2519 = vsel %vm1553, %v2478, 0
      %v2522 = vsel %vm1553, %v2479, 0
      %v2525 = vsel %vm1553, %v2480, 0
      %v2528 = vsel %vm1553, %v2481, 0
      %v2531 = vsel %vm1553, %v2482, 0
      %v2534 = vsel %vm1553, %v2483, 0
      %v2537 = vsel %vm1553, %v2484, 0
      %v2540 = vsel %vm1553, %v2485, 0
      %v2543 = vsel %vm1553, %v2486, 0
      %v2546 = vsel %vm1553, %v2487, 0
      %2548 = vmatprep.subr.bf16.mxu0 0
      %2549 = vmatpush1.bf16.msra.mxu0 %v2496
      %2550 = vmatprep.subr.bf16.mxu0 0
      %2551 = vmatpush1.bf16.msra.mxu0 %v2497
      %2552 = vmatprep.subr.bf16.mxu0 0
      %2553 = vmatpush1.bf16.msra.mxu0 0
      %2554 = vmatprep.subr.bf16.mxu0 0
      %2555 = vmatpush1.bf16.msra.mxu0 0
      %2556 = vmatprep.subr.bf16.mxu0 0
      %2557 = vmatpush1.bf16.msra.mxu0 0
      %2558 = vmatprep.subr.bf16.mxu0 0
      %2559 = vmatpush1.bf16.msra.mxu0 0
      %2560 = vmatprep.subr.bf16.mxu0 0
      %2561 = vmatpush1.bf16.msra.mxu0 0
      %2562 = vmatprep.subr.bf16.mxu0 0
      %2563 = vmatpush1.bf16.msra.mxu0 0
      %2564 = vmatprep.subr.bf16.mxu0 0
      %2565 = vmatpush1.bf16.msra.mxu0 0
      %2566 = vmatprep.subr.bf16.mxu0 0
      %2567 = vmatpush1.bf16.msra.mxu0 0
      %2568 = vmatprep.subr.bf16.mxu0 0
      %2569 = vmatpush1.bf16.msra.mxu0 0
      %2570 = vmatprep.subr.bf16.mxu0 0
      %2571 = vmatpush1.bf16.msra.mxu0 0
      %2572 = vmatprep.subr.bf16.mxu0 0
      %2573 = vmatpush1.bf16.msra.mxu0 0
      %2574 = vmatprep.subr.bf16.mxu0 0
      %2575 = vmatpush1.bf16.msra.mxu0 0
      %2576 = vmatprep.subr.bf16.mxu0 0
      %2577 = vmatpush1.bf16.msra.mxu0 0
      %2578 = vmatprep.subr.bf16.mxu0 0
      %2579 = vmatpush1.bf16.msra.mxu0 0
      %2580 = vmatprep.mubr.bf16.mxu0 0
      %2581 = vmatmul.mubr.bf16.gmra.mrb[0].mxu0 %v2501
      %v2582 = vpop.f32.mrb[0].mxu0
      %v2583 = vadd.f32 0.0, %v2582
      %v2584 = vpop.f32.mrb[0].mxu0
      %v2585 = vpop.f32.mrb[0].mxu0
      %v2586 = vadd.f32 0.0, %v2585
      %v2587 = vpop.f32.mrb[0].mxu0
      %2588 = vmatprep.mubr.bf16.mxu0 0
      %2589 = vmatmul.mubr.bf16.gmra.mrb[0].mxu0 %v2504
      %v2590 = vpop.f32.mrb[0].mxu0
      %v2591 = vadd.f32 0.0, %v2590
      %v2592 = vpop.f32.mrb[0].mxu0
      %v2593 = vpop.f32.mrb[0].mxu0
      %v2594 = vadd.f32 0.0, %v2593
      %v2595 = vpop.f32.mrb[0].mxu0
      %2596 = vmatprep.mubr.bf16.mxu0 0
      %2597 = vmatmul.mubr.bf16.gmra.mrb[0].mxu0 %v2507
      %v2598 = vpop.f32.mrb[0].mxu0
      %v2599 = vadd.f32 0.0, %v2598
      %v2600 = vpop.f32.mrb[0].mxu0
      %v2601 = vpop.f32.mrb[0].mxu0
      %v2602 = vadd.f32 0.0, %v2601
      %v2603 = vpop.f32.mrb[0].mxu0
      %2604 = vmatprep.mubr.bf16.mxu0 0
      %2605 = vmatmul.mubr.bf16.gmra.mrb[0].mxu0 %v2510
      %v2606 = vpop.f32.mrb[0].mxu0
      %v2607 = vadd.f32 0.0, %v2606
      %v2608 = vpop.f32.mrb[0].mxu0
      %v2609 = vpop.f32.mrb[0].mxu0
      %v2610 = vadd.f32 0.0, %v2609
      %v2611 = vpop.f32.mrb[0].mxu0
      %2612 = vmatprep.mubr.bf16.mxu0 0
      %2613 = vmatmul.mubr.bf16.gmra.mrb[0].mxu0 %v2513
      %v2614 = vpop.f32.mrb[0].mxu0
      %v2615 = vadd.f32 0.0, %v2614
      %v2616 = vpop.f32.mrb[0].mxu0
      %v2617 = vpop.f32.mrb[0].mxu0
      %v2618 = vadd.f32 0.0, %v2617
      %v2619 = vpop.f32.mrb[0].mxu0
      %2620 = vmatprep.mubr.bf16.mxu0 0
      %2621 = vmatmul.mubr.bf16.gmra.mrb[0].mxu0 %v2516
      %v2622 = vpop.f32.mrb[0].mxu0
      %v2623 = vadd.f32 0.0, %v2622
      %v2624 = vpop.f32.mrb[0].mxu0
      %v2625 = vpop.f32.mrb[0].mxu0
      %v2626 = vadd.f32 0.0, %v2625
      %v2627 = vpop.f32.mrb[0].mxu0
      %2628 = vmatprep.mubr.bf16.mxu0 0
      %2629 = vmatmul.mubr.bf16.gmra.mrb[0].mxu0 %v2519
      %v2630 = vpop.f32.mrb[0].mxu0
      %v2631 = vadd.f32 0.0, %v2630
      %v2632 = vpop.f32.mrb[0].mxu0
      %v2633 = vpop.f32.mrb[0].mxu0
      %v2634 = vadd.f32 0.0, %v2633
      %v2635 = vpop.f32.mrb[0].mxu0
      %2636 = vmatprep.mubr.bf16.mxu0 0
      %2637 = vmatmul.mubr.bf16.gmra.mrb[0].mxu0 %v2522
      %v2638 = vpop.f32.mrb[0].mxu0
      %v2639 = vadd.f32 0.0, %v2638
      %v2640 = vpop.f32.mrb[0].mxu0
      %v2641 = vpop.f32.mrb[0].mxu0
      %v2642 = vadd.f32 0.0, %v2641
      %v2643 = vpop.f32.mrb[0].mxu0
      %2644 = vmatprep.mubr.bf16.mxu0 0
      %2645 = vmatmul.mubr.bf16.gmra.mrb[0].mxu0 %v2525
      %v2646 = vpop.f32.mrb[0].mxu0
      %v2647 = vadd.f32 0.0, %v2646
      %v2648 = vpop.f32.mrb[0].mxu0
      %v2649 = vpop.f32.mrb[0].mxu0
      %v2650 = vadd.f32 0.0, %v2649
      %v2651 = vpop.f32.mrb[0].mxu0
      %2652 = vmatprep.mubr.bf16.mxu0 0
      %2653 = vmatmul.mubr.bf16.gmra.mrb[0].mxu0 %v2528
      %v2654 = vpop.f32.mrb[0].mxu0
      %v2655 = vadd.f32 0.0, %v2654
      %v2656 = vpop.f32.mrb[0].mxu0
      %v2657 = vpop.f32.mrb[0].mxu0
      %v2658 = vadd.f32 0.0, %v2657
      %v2659 = vpop.f32.mrb[0].mxu0
      %2660 = vmatprep.mubr.bf16.mxu0 0
      %2661 = vmatmul.mubr.bf16.gmra.mrb[0].mxu0 %v2531
      %v2662 = vpop.f32.mrb[0].mxu0
      %v2663 = vadd.f32 0.0, %v2662
      %v2664 = vpop.f32.mrb[0].mxu0
      %v2665 = vpop.f32.mrb[0].mxu0
      %v2666 = vadd.f32 0.0, %v2665
      %v2667 = vpop.f32.mrb[0].mxu0
      %2668 = vmatprep.mubr.bf16.mxu0 0
      %2669 = vmatmul.mubr.bf16.gmra.mrb[0].mxu0 %v2534
      %v2670 = vpop.f32.mrb[0].mxu0
      %v2671 = vadd.f32 0.0, %v2670
      %v2672 = vpop.f32.mrb[0].mxu0
      %v2673 = vpop.f32.mrb[0].mxu0
      %v2674 = vadd.f32 0.0, %v2673
      %v2675 = vpop.f32.mrb[0].mxu0
      %2676 = vmatprep.mubr.bf16.mxu0 0
      %2677 = vmatmul.mubr.bf16.gmra.mrb[0].mxu0 %v2537
      %v2678 = vpop.f32.mrb[0].mxu0
      %v2679 = vadd.f32 0.0, %v2678
      %v2680 = vpop.f32.mrb[0].mxu0
      %v2681 = vpop.f32.mrb[0].mxu0
      %v2682 = vadd.f32 0.0, %v2681
      %v2683 = vpop.f32.mrb[0].mxu0
      %2684 = vmatprep.mubr.bf16.mxu0 0
      %2685 = vmatmul.mubr.bf16.gmra.mrb[0].mxu0 %v2540
      %v2686 = vpop.f32.mrb[0].mxu0
      %v2687 = vadd.f32 0.0, %v2686
      %v2688 = vpop.f32.mrb[0].mxu0
      %v2689 = vpop.f32.mrb[0].mxu0
      %v2690 = vadd.f32 0.0, %v2689
      %v2691 = vpop.f32.mrb[0].mxu0
      %2692 = vmatprep.mubr.bf16.mxu0 0
      %2693 = vmatmul.mubr.bf16.gmra.mrb[0].mxu0 %v2543
      %v2694 = vpop.f32.mrb[0].mxu0
      %v2695 = vadd.f32 0.0, %v2694
      %v2696 = vpop.f32.mrb[0].mxu0
      %v2697 = vpop.f32.mrb[0].mxu0
      %v2698 = vadd.f32 0.0, %v2697
      %v2699 = vpop.f32.mrb[0].mxu0
      %2700 = vmatprep.mubr.bf16.mxu0 0
      %2701 = vmatmul.mubr.bf16.gmra.mrb[0].mxu0 %v2546
      %v2702 = vpop.f32.mrb[0].mxu0
      %v2703 = vadd.f32 0.0, %v2702
      %v2704 = vpop.f32.mrb[0].mxu0
      %v2705 = vpop.f32.mrb[0].mxu0
      %v2706 = vadd.f32 0.0, %v2705
      %v2707 = vpop.f32.mrb[0].mxu0
      %2708 = vdwg.mxu0
      %v2713 = vunpack.c.l.b16 %v2259
      %v2714 = vunpack.c.l.b16 %v2260
      %v2715 = vunpack.c.l.b16 %v2261
      %v2716 = vunpack.c.l.b16 %v2262
      %v2717 = vpack.c.b16 %v2714, %v2713
      %v2718 = vpack.c.b16 %v2716, %v2715
      %v2722 = vsel %vm1553, %v2295, 0
      %v2725 = vsel %vm1553, %v2296, 0
      %v2728 = vsel %vm1553, %v2297, 0
      %v2731 = vsel %vm1553, %v2298, 0
      %v2734 = vsel %vm1553, %v2299, 0
      %v2737 = vsel %vm1553, %v2300, 0
      %v2740 = vsel %vm1553, %v2301, 0
      %v2743 = vsel %vm1553, %v2302, 0
      %v2746 = vsel %vm1553, %v2303, 0
      %v2749 = vsel %vm1553, %v2304, 0
      %v2752 = vsel %vm1553, %v2305, 0
      %v2755 = vsel %vm1553, %v2306, 0
      %v2758 = vsel %vm1553, %v2307, 0
      %v2761 = vsel %vm1553, %v2308, 0
      %v2764 = vsel %vm1553, %v2309, 0
      %v2767 = vsel %vm1553, %v2310, 0
      %2769 = vmatprep.subr.bf16.mxu0 0
      %2770 = vmatpush1.bf16.msra.mxu0 %v2717
      %2771 = vmatprep.subr.bf16.mxu0 0
      %2772 = vmatpush1.bf16.msra.mxu0 %v2718
      %2773 = vmatprep.subr.bf16.mxu0 0
      %2774 = vmatpush1.bf16.msra.mxu0 0
      %2775 = vmatprep.subr.bf16.mxu0 0
      %2776 = vmatpush1.bf16.msra.mxu0 0
      %2777 = vmatprep.subr.bf16.mxu0 0
      %2778 = vmatpush1.bf16.msra.mxu0 0
      %2779 = vmatprep.subr.bf16.mxu0 0
      %2780 = vmatpush1.bf16.msra.mxu0 0
      %2781 = vmatprep.subr.bf16.mxu0 0
      %2782 = vmatpush1.bf16.msra.mxu0 0
      %2783 = vmatprep.subr.bf16.mxu0 0
      %2784 = vmatpush1.bf16.msra.mxu0 0
      %2785 = vmatprep.subr.bf16.mxu0 0
      %2786 = vmatpush1.bf16.msra.mxu0 0
      %2787 = vmatprep.subr.bf16.mxu0 0
      %2788 = vmatpush1.bf16.msra.mxu0 0
      %2789 = vmatprep.subr.bf16.mxu0 0
      %2790 = vmatpush1.bf16.msra.mxu0 0
      %2791 = vmatprep.subr.bf16.mxu0 0
      %2792 = vmatpush1.bf16.msra.mxu0 0
      %2793 = vmatprep.subr.bf16.mxu0 0
      %2794 = vmatpush1.bf16.msra.mxu0 0
      %2795 = vmatprep.subr.bf16.mxu0 0
      %2796 = vmatpush1.bf16.msra.mxu0 0
      %2797 = vmatprep.subr.bf16.mxu0 0
      %2798 = vmatpush1.bf16.msra.mxu0 0
      %2799 = vmatprep.subr.bf16.mxu0 0
      %2800 = vmatpush1.bf16.msra.mxu0 0
      %2801 = vmatprep.mubr.bf16.mxu0 0
      %2802 = vmatmul.mubr.bf16.gmra.mrb[0].mxu0 %v2722
      %v2803 = vpop.f32.mrb[0].mxu0
      %v2804 = vadd.f32 %v2583, %v2803
      %v2805 = vpop.f32.mrb[0].mxu0
      %v2806 = vpop.f32.mrb[0].mxu0
      %v2807 = vadd.f32 %v2586, %v2806
      %v2808 = vpop.f32.mrb[0].mxu0
      %2809 = vmatprep.mubr.bf16.mxu0 0
      %2810 = vmatmul.mubr.bf16.gmra.mrb[0].mxu0 %v2725
      %v2811 = vpop.f32.mrb[0].mxu0
      %v2812 = vadd.f32 %v2591, %v2811
      %v2813 = vpop.f32.mrb[0].mxu0
      %v2814 = vpop.f32.mrb[0].mxu0
      %v2815 = vadd.f32 %v2594, %v2814
      %v2816 = vpop.f32.mrb[0].mxu0
      %2817 = vmatprep.mubr.bf16.mxu0 0
      %2818 = vmatmul.mubr.bf16.gmra.mrb[0].mxu0 %v2728
      %v2819 = vpop.f32.mrb[0].mxu0
      %v2820 = vadd.f32 %v2599, %v2819
      %v2821 = vpop.f32.mrb[0].mxu0
      %v2822 = vpop.f32.mrb[0].mxu0
      %v2823 = vadd.f32 %v2602, %v2822
      %v2824 = vpop.f32.mrb[0].mxu0
      %2825 = vmatprep.mubr.bf16.mxu0 0
      %2826 = vmatmul.mubr.bf16.gmra.mrb[0].mxu0 %v2731
      %v2827 = vpop.f32.mrb[0].mxu0
      %v2828 = vadd.f32 %v2607, %v2827
      %v2829 = vpop.f32.mrb[0].mxu0
      %v2830 = vpop.f32.mrb[0].mxu0
      %v2831 = vadd.f32 %v2610, %v2830
      %v2832 = vpop.f32.mrb[0].mxu0
      %2833 = vmatprep.mubr.bf16.mxu0 0
      %2834 = vmatmul.mubr.bf16.gmra.mrb[0].mxu0 %v2734
      %v2835 = vpop.f32.mrb[0].mxu0
      %v2836 = vadd.f32 %v2615, %v2835
      %v2837 = vpop.f32.mrb[0].mxu0
      %v2838 = vpop.f32.mrb[0].mxu0
      %v2839 = vadd.f32 %v2618, %v2838
      %v2840 = vpop.f32.mrb[0].mxu0
      %2841 = vmatprep.mubr.bf16.mxu0 0
      %2842 = vmatmul.mubr.bf16.gmra.mrb[0].mxu0 %v2737
      %v2843 = vpop.f32.mrb[0].mxu0
      %v2844 = vadd.f32 %v2623, %v2843
      %v2845 = vpop.f32.mrb[0].mxu0
      %v2846 = vpop.f32.mrb[0].mxu0
      %v2847 = vadd.f32 %v2626, %v2846
      %v2848 = vpop.f32.mrb[0].mxu0
      %2849 = vmatprep.mubr.bf16.mxu0 0
      %2850 = vmatmul.mubr.bf16.gmra.mrb[0].mxu0 %v2740
      %v2851 = vpop.f32.mrb[0].mxu0
      %v2852 = vadd.f32 %v2631, %v2851
      %v2853 = vpop.f32.mrb[0].mxu0
      %v2854 = vpop.f32.mrb[0].mxu0
      %v2855 = vadd.f32 %v2634, %v2854
      %v2856 = vpop.f32.mrb[0].mxu0
      %2857 = vmatprep.mubr.bf16.mxu0 0
      %2858 = vmatmul.mubr.bf16.gmra.mrb[0].mxu0 %v2743
      %v2859 = vpop.f32.mrb[0].mxu0
      %v2860 = vadd.f32 %v2639, %v2859
      %v2861 = vpop.f32.mrb[0].mxu0
      %v2862 = vpop.f32.mrb[0].mxu0
      %v2863 = vadd.f32 %v2642, %v2862
      %v2864 = vpop.f32.mrb[0].mxu0
      %2865 = vmatprep.mubr.bf16.mxu0 0
      %2866 = vmatmul.mubr.bf16.gmra.mrb[0].mxu0 %v2746
      %v2867 = vpop.f32.mrb[0].mxu0
      %v2868 = vadd.f32 %v2647, %v2867
      %v2869 = vpop.f32.mrb[0].mxu0
      %v2870 = vpop.f32.mrb[0].mxu0
      %v2871 = vadd.f32 %v2650, %v2870
      %v2872 = vpop.f32.mrb[0].mxu0
      %2873 = vmatprep.mubr.bf16.mxu0 0
      %2874 = vmatmul.mubr.bf16.gmra.mrb[0].mxu0 %v2749
      %v2875 = vpop.f32.mrb[0].mxu0
      %v2876 = vadd.f32 %v2655, %v2875
      %v2877 = vpop.f32.mrb[0].mxu0
      %v2878 = vpop.f32.mrb[0].mxu0
      %v2879 = vadd.f32 %v2658, %v2878
      %v2880 = vpop.f32.mrb[0].mxu0
      %2881 = vmatprep.mubr.bf16.mxu0 0
      %2882 = vmatmul.mubr.bf16.gmra.mrb[0].mxu0 %v2752
      %v2883 = vpop.f32.mrb[0].mxu0
      %v2884 = vadd.f32 %v2663, %v2883
      %v2885 = vpop.f32.mrb[0].mxu0
      %v2886 = vpop.f32.mrb[0].mxu0
      %v2887 = vadd.f32 %v2666, %v2886
      %v2888 = vpop.f32.mrb[0].mxu0
      %2889 = vmatprep.mubr.bf16.mxu0 0
      %2890 = vmatmul.mubr.bf16.gmra.mrb[0].mxu0 %v2755
      %v2891 = vpop.f32.mrb[0].mxu0
      %v2892 = vadd.f32 %v2671, %v2891
      %v2893 = vpop.f32.mrb[0].mxu0
      %v2894 = vpop.f32.mrb[0].mxu0
      %v2895 = vadd.f32 %v2674, %v2894
      %v2896 = vpop.f32.mrb[0].mxu0
      %2897 = vmatprep.mubr.bf16.mxu0 0
      %2898 = vmatmul.mubr.bf16.gmra.mrb[0].mxu0 %v2758
      %v2899 = vpop.f32.mrb[0].mxu0
      %v2900 = vadd.f32 %v2679, %v2899
      %v2901 = vpop.f32.mrb[0].mxu0
      %v2902 = vpop.f32.mrb[0].mxu0
      %v2903 = vadd.f32 %v2682, %v2902
      %v2904 = vpop.f32.mrb[0].mxu0
      %2905 = vmatprep.mubr.bf16.mxu0 0
      %2906 = vmatmul.mubr.bf16.gmra.mrb[0].mxu0 %v2761
      %v2907 = vpop.f32.mrb[0].mxu0
      %v2908 = vadd.f32 %v2687, %v2907
      %v2909 = vpop.f32.mrb[0].mxu0
      %v2910 = vpop.f32.mrb[0].mxu0
      %v2911 = vadd.f32 %v2690, %v2910
      %v2912 = vpop.f32.mrb[0].mxu0
      %2913 = vmatprep.mubr.bf16.mxu0 0
      %2914 = vmatmul.mubr.bf16.gmra.mrb[0].mxu0 %v2764
      %v2915 = vpop.f32.mrb[0].mxu0
      %v2916 = vadd.f32 %v2695, %v2915
      %v2917 = vpop.f32.mrb[0].mxu0
      %v2918 = vpop.f32.mrb[0].mxu0
      %v2919 = vadd.f32 %v2698, %v2918
      %v2920 = vpop.f32.mrb[0].mxu0
      %2921 = vmatprep.mubr.bf16.mxu0 0
      %2922 = vmatmul.mubr.bf16.gmra.mrb[0].mxu0 %v2767
      %v2923 = vpop.f32.mrb[0].mxu0
      %v2924 = vadd.f32 %v2703, %v2923
      %v2925 = vpop.f32.mrb[0].mxu0
      %v2926 = vpop.f32.mrb[0].mxu0
      %v2927 = vadd.f32 %v2706, %v2926
      %v2928 = vpop.f32.mrb[0].mxu0
      %2929 = vdwg.mxu0
      %vm2930 = vcmask 1045504
      %v2931 = vrot.slane %v2205, 2
      %v2932 = vrot.slane %v2206, 2
      %v2933 = vsel %vm2930, %v2931, %v2932
      %v2934 = vrot.slane %v2207, 2
      %v2935 = vsel %vm2930, %v2932, %v2934
      %v2936 = vrot.slane %v2208, 2
      %v2937 = vrot.slane %v2209, 2
      %v2938 = vsel %vm2930, %v2936, %v2937
      %v2939 = vrot.slane %v2210, 2
      %v2940 = vsel %vm2930, %v2937, %v2939
      %v2941 = vrot.slane %v2211, 2
      %v2942 = vrot.slane %v2212, 2
      %v2943 = vsel %vm2930, %v2941, %v2942
      %v2944 = vrot.slane %v2213, 2
      %v2945 = vsel %vm2930, %v2942, %v2944
      %v2946 = vrot.slane %v2214, 2
      %v2947 = vrot.slane %v2215, 2
      %v2948 = vsel %vm2930, %v2946, %v2947
      %v2949 = vrot.slane %v2216, 2
      %v2950 = vsel %vm2930, %v2947, %v2949
      %v2951 = vrot.slane %v2217, 2
      %v2952 = vrot.slane %v2218, 2
      %v2953 = vsel %vm2930, %v2951, %v2952
      %v2954 = vrot.slane %v2219, 2
      %v2955 = vsel %vm2930, %v2952, %v2954
      %v2956 = vrot.slane %v2220, 2
      %v2957 = vrot.slane %v2221, 2
      %v2958 = vsel %vm2930, %v2956, %v2957
      %v2959 = vrot.slane %v2222, 2
      %v2960 = vsel %vm2930, %v2957, %v2959
      %v2961 = vrot.slane %v2223, 2
      %v2962 = vrot.slane %v2224, 2
      %v2963 = vsel %vm2930, %v2961, %v2962
      %v2964 = vrot.slane %v2225, 2
      %v2965 = vsel %vm2930, %v2962, %v2964
      %v2966 = vrot.slane %v2226, 2
      %v2967 = vrot.slane %v2227, 2
      %v2968 = vsel %vm2930, %v2966, %v2967
      %v2969 = vrot.slane %v2228, 2
      %v2970 = vsel %vm2930, %v2967, %v2969
      %v2971 = vrot.slane %v2229, 2
      %v2972 = vrot.slane %v2230, 2
      %v2973 = vsel %vm2930, %v2971, %v2972
      %v2974 = vrot.slane %v2231, 2
      %v2975 = vsel %vm2930, %v2972, %v2974
      %v2976 = vrot.slane %v2232, 2
      %v2977 = vrot.slane %v2233, 2
      %v2978 = vsel %vm2930, %v2976, %v2977
      %v2979 = vrot.slane %v2234, 2
      %v2980 = vsel %vm2930, %v2977, %v2979
      %v2981 = vrot.slane %v2235, 2
      %v2982 = vrot.slane %v2236, 2
      %v2983 = vsel %vm2930, %v2981, %v2982
      %v2984 = vrot.slane %v2237, 2
      %v2985 = vsel %vm2930, %v2982, %v2984
      %v2986 = vrot.slane %v2238, 2
      %v2987 = vrot.slane %v2239, 2
      %v2988 = vsel %vm2930, %v2986, %v2987
      %v2989 = vrot.slane %v2240, 2
      %v2990 = vsel %vm2930, %v2987, %v2989
      %v2991 = vrot.slane %v2241, 2
      %v2992 = vrot.slane %v2242, 2
      %v2993 = vsel %vm2930, %v2991, %v2992
      %v2994 = vrot.slane %v2243, 2
      %v2995 = vsel %vm2930, %v2992, %v2994
      %v2996 = vrot.slane %v2244, 2
      %v2997 = vrot.slane %v2245, 2
      %v2998 = vsel %vm2930, %v2996, %v2997
      %v2999 = vrot.slane %v2246, 2
      %v3000 = vsel %vm2930, %v2997, %v2999
      %v3001 = vrot.slane %v2247, 2
      %v3002 = vrot.slane %v2248, 2
      %v3003 = vsel %vm2930, %v3001, %v3002
      %v3004 = vrot.slane %v2249, 2
      %v3005 = vsel %vm2930, %v3002, %v3004
      %v3006 = vrot.slane %v2250, 2
      %v3007 = vrot.slane %v2251, 2
      %v3008 = vsel %vm2930, %v3006, %v3007
      %v3009 = vrot.slane %v2252, 2
      %v3010 = vsel %vm2930, %v3007, %v3009
      %v3043 = vpack.c.bf16 %v2935, %v2933
      %v3044 = vpack.c.bf16 %v2940, %v2938
      %v3045 = vpack.c.bf16 %v2945, %v2943
      %v3046 = vpack.c.bf16 %v2950, %v2948
      %v3047 = vpack.c.bf16 %v2955, %v2953
      %v3048 = vpack.c.bf16 %v2960, %v2958
      %v3049 = vpack.c.bf16 %v2965, %v2963
      %v3050 = vpack.c.bf16 %v2970, %v2968
      %v3051 = vpack.c.bf16 %v2975, %v2973
      %v3052 = vpack.c.bf16 %v2980, %v2978
      %v3053 = vpack.c.bf16 %v2985, %v2983
      %v3054 = vpack.c.bf16 %v2990, %v2988
      %v3055 = vpack.c.bf16 %v2995, %v2993
      %v3056 = vpack.c.bf16 %v3000, %v2998
      %v3057 = vpack.c.bf16 %v3005, %v3003
      %v3058 = vpack.c.bf16 %v3010, %v3008
      %v3063 = vunpack.c.l.b16 %v2267
      %v3064 = vunpack.c.l.b16 %v2268
      %v3065 = vunpack.c.l.b16 %v2269
      %v3066 = vunpack.c.l.b16 %v2270
      %v3067 = vpack.c.b16 %v3064, %v3063
      %v3068 = vpack.c.b16 %v3066, %v3065
      %v3072 = vsel %vm1553, %v3043, 0
      %v3075 = vsel %vm1553, %v3044, 0
      %v3078 = vsel %vm1553, %v3045, 0
      %v3081 = vsel %vm1553, %v3046, 0
      %v3084 = vsel %vm1553, %v3047, 0
      %v3087 = vsel %vm1553, %v3048, 0
      %v3090 = vsel %vm1553, %v3049, 0
      %v3093 = vsel %vm1553, %v3050, 0
      %v3096 = vsel %vm1553, %v3051, 0
      %v3099 = vsel %vm1553, %v3052, 0
      %v3102 = vsel %vm1553, %v3053, 0
      %v3105 = vsel %vm1553, %v3054, 0
      %v3108 = vsel %vm1553, %v3055, 0
      %v3111 = vsel %vm1553, %v3056, 0
      %v3114 = vsel %vm1553, %v3057, 0
      %v3117 = vsel %vm1553, %v3058, 0
      %3119 = vmatprep.subr.bf16.mxu0 0
      %3120 = vmatpush1.bf16.msra.mxu0 %v3067
      %3121 = vmatprep.subr.bf16.mxu0 0
      %3122 = vmatpush1.bf16.msra.mxu0 %v3068
      %3123 = vmatprep.subr.bf16.mxu0 0
      %3124 = vmatpush1.bf16.msra.mxu0 0
      %3125 = vmatprep.subr.bf16.mxu0 0
      %3126 = vmatpush1.bf16.msra.mxu0 0
      %3127 = vmatprep.subr.bf16.mxu0 0
      %3128 = vmatpush1.bf16.msra.mxu0 0
      %3129 = vmatprep.subr.bf16.mxu0 0
      %3130 = vmatpush1.bf16.msra.mxu0 0
      %3131 = vmatprep.subr.bf16.mxu0 0
      %3132 = vmatpush1.bf16.msra.mxu0 0
      %3133 = vmatprep.subr.bf16.mxu0 0
      %3134 = vmatpush1.bf16.msra.mxu0 0
      %3135 = vmatprep.subr.bf16.mxu0 0
      %3136 = vmatpush1.bf16.msra.mxu0 0
      %3137 = vmatprep.subr.bf16.mxu0 0
      %3138 = vmatpush1.bf16.msra.mxu0 0
      %3139 = vmatprep.subr.bf16.mxu0 0
      %3140 = vmatpush1.bf16.msra.mxu0 0
      %3141 = vmatprep.subr.bf16.mxu0 0
      %3142 = vmatpush1.bf16.msra.mxu0 0
      %3143 = vmatprep.subr.bf16.mxu0 0
      %3144 = vmatpush1.bf16.msra.mxu0 0
      %3145 = vmatprep.subr.bf16.mxu0 0
      %3146 = vmatpush1.bf16.msra.mxu0 0
      %3147 = vmatprep.subr.bf16.mxu0 0
      %3148 = vmatpush1.bf16.msra.mxu0 0
      %3149 = vmatprep.subr.bf16.mxu0 0
      %3150 = vmatpush1.bf16.msra.mxu0 0
      %3151 = vmatprep.mubr.bf16.mxu0 0
      %3152 = vmatmul.mubr.bf16.gmra.mrb[0].mxu0 %v3072
      %v3153 = vpop.f32.mrb[0].mxu0
      %v3154 = vadd.f32 0.0, %v3153
      %v3155 = vpop.f32.mrb[0].mxu0
      %v3156 = vpop.f32.mrb[0].mxu0
      %v3157 = vadd.f32 0.0, %v3156
      %v3158 = vpop.f32.mrb[0].mxu0
      %3159 = vmatprep.mubr.bf16.mxu0 0
      %3160 = vmatmul.mubr.bf16.gmra.mrb[0].mxu0 %v3075
      %v3161 = vpop.f32.mrb[0].mxu0
      %v3162 = vadd.f32 0.0, %v3161
      %v3163 = vpop.f32.mrb[0].mxu0
      %v3164 = vpop.f32.mrb[0].mxu0
      %v3165 = vadd.f32 0.0, %v3164
      %v3166 = vpop.f32.mrb[0].mxu0
      %3167 = vmatprep.mubr.bf16.mxu0 0
      %3168 = vmatmul.mubr.bf16.gmra.mrb[0].mxu0 %v3078
      %v3169 = vpop.f32.mrb[0].mxu0
      %v3170 = vadd.f32 0.0, %v3169
      %v3171 = vpop.f32.mrb[0].mxu0
      %v3172 = vpop.f32.mrb[0].mxu0
      %v3173 = vadd.f32 0.0, %v3172
      %v3174 = vpop.f32.mrb[0].mxu0
      %3175 = vmatprep.mubr.bf16.mxu0 0
      %3176 = vmatmul.mubr.bf16.gmra.mrb[0].mxu0 %v3081
      %v3177 = vpop.f32.mrb[0].mxu0
      %v3178 = vadd.f32 0.0, %v3177
      %v3179 = vpop.f32.mrb[0].mxu0
      %v3180 = vpop.f32.mrb[0].mxu0
      %v3181 = vadd.f32 0.0, %v3180
      %v3182 = vpop.f32.mrb[0].mxu0
      %3183 = vmatprep.mubr.bf16.mxu0 0
      %3184 = vmatmul.mubr.bf16.gmra.mrb[0].mxu0 %v3084
      %v3185 = vpop.f32.mrb[0].mxu0
      %v3186 = vadd.f32 0.0, %v3185
      %v3187 = vpop.f32.mrb[0].mxu0
      %v3188 = vpop.f32.mrb[0].mxu0
      %v3189 = vadd.f32 0.0, %v3188
      %v3190 = vpop.f32.mrb[0].mxu0
      %3191 = vmatprep.mubr.bf16.mxu0 0
      %3192 = vmatmul.mubr.bf16.gmra.mrb[0].mxu0 %v3087
      %v3193 = vpop.f32.mrb[0].mxu0
      %v3194 = vadd.f32 0.0, %v3193
      %v3195 = vpop.f32.mrb[0].mxu0
      %v3196 = vpop.f32.mrb[0].mxu0
      %v3197 = vadd.f32 0.0, %v3196
      %v3198 = vpop.f32.mrb[0].mxu0
      %3199 = vmatprep.mubr.bf16.mxu0 0
      %3200 = vmatmul.mubr.bf16.gmra.mrb[0].mxu0 %v3090
      %v3201 = vpop.f32.mrb[0].mxu0
      %v3202 = vadd.f32 0.0, %v3201
      %v3203 = vpop.f32.mrb[0].mxu0
      %v3204 = vpop.f32.mrb[0].mxu0
      %v3205 = vadd.f32 0.0, %v3204
      %v3206 = vpop.f32.mrb[0].mxu0
      %3207 = vmatprep.mubr.bf16.mxu0 0
      %3208 = vmatmul.mubr.bf16.gmra.mrb[0].mxu0 %v3093
      %v3209 = vpop.f32.mrb[0].mxu0
      %v3210 = vadd.f32 0.0, %v3209
      %v3211 = vpop.f32.mrb[0].mxu0
      %v3212 = vpop.f32.mrb[0].mxu0
      %v3213 = vadd.f32 0.0, %v3212
      %v3214 = vpop.f32.mrb[0].mxu0
      %3215 = vmatprep.mubr.bf16.mxu0 0
      %3216 = vmatmul.mubr.bf16.gmra.mrb[0].mxu0 %v3096
      %v3217 = vpop.f32.mrb[0].mxu0
      %v3218 = vadd.f32 0.0, %v3217
      %v3219 = vpop.f32.mrb[0].mxu0
      %v3220 = vpop.f32.mrb[0].mxu0
      %v3221 = vadd.f32 0.0, %v3220
      %v3222 = vpop.f32.mrb[0].mxu0
      %3223 = vmatprep.mubr.bf16.mxu0 0
      %3224 = vmatmul.mubr.bf16.gmra.mrb[0].mxu0 %v3099
      %v3225 = vpop.f32.mrb[0].mxu0
      %v3226 = vadd.f32 0.0, %v3225
      %v3227 = vpop.f32.mrb[0].mxu0
      %v3228 = vpop.f32.mrb[0].mxu0
      %v3229 = vadd.f32 0.0, %v3228
      %v3230 = vpop.f32.mrb[0].mxu0
      %3231 = vmatprep.mubr.bf16.mxu0 0
      %3232 = vmatmul.mubr.bf16.gmra.mrb[0].mxu0 %v3102
      %v3233 = vpop.f32.mrb[0].mxu0
      %v3234 = vadd.f32 0.0, %v3233
      %v3235 = vpop.f32.mrb[0].mxu0
      %v3236 = vpop.f32.mrb[0].mxu0
      %v3237 = vadd.f32 0.0, %v3236
      %v3238 = vpop.f32.mrb[0].mxu0
      %3239 = vmatprep.mubr.bf16.mxu0 0
      %3240 = vmatmul.mubr.bf16.gmra.mrb[0].mxu0 %v3105
      %v3241 = vpop.f32.mrb[0].mxu0
      %v3242 = vadd.f32 0.0, %v3241
      %v3243 = vpop.f32.mrb[0].mxu0
      %v3244 = vpop.f32.mrb[0].mxu0
      %v3245 = vadd.f32 0.0, %v3244
      %v3246 = vpop.f32.mrb[0].mxu0
      %3247 = vmatprep.mubr.bf16.mxu0 0
      %3248 = vmatmul.mubr.bf16.gmra.mrb[0].mxu0 %v3108
      %v3249 = vpop.f32.mrb[0].mxu0
      %v3250 = vadd.f32 0.0, %v3249
      %v3251 = vpop.f32.mrb[0].mxu0
      %v3252 = vpop.f32.mrb[0].mxu0
      %v3253 = vadd.f32 0.0, %v3252
      %v3254 = vpop.f32.mrb[0].mxu0
      %3255 = vmatprep.mubr.bf16.mxu0 0
      %3256 = vmatmul.mubr.bf16.gmra.mrb[0].mxu0 %v3111
      %v3257 = vpop.f32.mrb[0].mxu0
      %v3258 = vadd.f32 0.0, %v3257
      %v3259 = vpop.f32.mrb[0].mxu0
      %v3260 = vpop.f32.mrb[0].mxu0
      %v3261 = vadd.f32 0.0, %v3260
      %v3262 = vpop.f32.mrb[0].mxu0
      %3263 = vmatprep.mubr.bf16.mxu0 0
      %3264 = vmatmul.mubr.bf16.gmra.mrb[0].mxu0 %v3114
      %v3265 = vpop.f32.mrb[0].mxu0
      %v3266 = vadd.f32 0.0, %v3265
      %v3267 = vpop.f32.mrb[0].mxu0
      %v3268 = vpop.f32.mrb[0].mxu0
      %v3269 = vadd.f32 0.0, %v3268
      %v3270 = vpop.f32.mrb[0].mxu0
      %3271 = vmatprep.mubr.bf16.mxu0 0
      %3272 = vmatmul.mubr.bf16.gmra.mrb[0].mxu0 %v3117
      %v3273 = vpop.f32.mrb[0].mxu0
      %v3274 = vadd.f32 0.0, %v3273
      %v3275 = vpop.f32.mrb[0].mxu0
      %v3276 = vpop.f32.mrb[0].mxu0
      %v3277 = vadd.f32 0.0, %v3276
      %v3278 = vpop.f32.mrb[0].mxu0
      %3279 = vdwg.mxu0
      %v3280 = vadd.f32 %v2804, %v3154
      %v3281 = vadd.f32 %v2807, %v3157
      %v3282 = vadd.f32 %v2812, %v3162
      %v3283 = vadd.f32 %v2815, %v3165
      %v3284 = vadd.f32 %v2820, %v3170
      %v3285 = vadd.f32 %v2823, %v3173
      %v3286 = vadd.f32 %v2828, %v3178
      %v3287 = vadd.f32 %v2831, %v3181
      %v3288 = vadd.f32 %v2836, %v3186
      %v3289 = vadd.f32 %v2839, %v3189
      %v3290 = vadd.f32 %v2844, %v3194
      %v3291 = vadd.f32 %v2847, %v3197
      %v3292 = vadd.f32 %v2852, %v3202
      %v3293 = vadd.f32 %v2855, %v3205
      %v3294 = vadd.f32 %v2860, %v3210
      %v3295 = vadd.f32 %v2863, %v3213
      %v3296 = vadd.f32 %v2868, %v3218
      %v3297 = vadd.f32 %v2871, %v3221
      %v3298 = vadd.f32 %v2876, %v3226
      %v3299 = vadd.f32 %v2879, %v3229
      %v3300 = vadd.f32 %v2884, %v3234
      %v3301 = vadd.f32 %v2887, %v3237
      %v3302 = vadd.f32 %v2892, %v3242
      %v3303 = vadd.f32 %v2895, %v3245
      %v3304 = vadd.f32 %v2900, %v3250
      %v3305 = vadd.f32 %v2903, %v3253
      %v3306 = vadd.f32 %v2908, %v3258
      %v3307 = vadd.f32 %v2911, %v3261
      %v3308 = vadd.f32 %v2916, %v3266
      %v3309 = vadd.f32 %v2919, %v3269
      %v3310 = vadd.f32 %v2924, %v3274
      %v3311 = vadd.f32 %v2927, %v3277
      %v3312 = vpack.c.bf16 %v2254, %v2253
      %v3317 = vunpack.c.l.b16 %v2271
      %v3318 = vunpack.c.l.b16 %v2272
      %v3319 = vunpack.c.l.b16 %v2273
      %v3320 = vunpack.c.l.b16 %v2274
      %v3321 = vpack.c.b16 %v3318, %v3317
      %v3322 = vpack.c.b16 %v3320, %v3319
      %v3326 = vsel %vm1553, %v3312, 0
      %3328 = vmatprep.subr.bf16.mxu0 0
      %3329 = vmatpush1.bf16.msra.mxu0 %v3321
      %3330 = vmatprep.subr.bf16.mxu0 0
      %3331 = vmatpush1.bf16.msra.mxu0 %v3322
      %3332 = vmatprep.subr.bf16.mxu0 0
      %3333 = vmatpush1.bf16.msra.mxu0 0
      %3334 = vmatprep.subr.bf16.mxu0 0
      %3335 = vmatpush1.bf16.msra.mxu0 0
      %3336 = vmatprep.subr.bf16.mxu0 0
      %3337 = vmatpush1.bf16.msra.mxu0 0
      %3338 = vmatprep.subr.bf16.mxu0 0
      %3339 = vmatpush1.bf16.msra.mxu0 0
      %3340 = vmatprep.subr.bf16.mxu0 0
      %3341 = vmatpush1.bf16.msra.mxu0 0
      %3342 = vmatprep.subr.bf16.mxu0 0
      %3343 = vmatpush1.bf16.msra.mxu0 0
      %3344 = vmatprep.subr.bf16.mxu0 0
      %3345 = vmatpush1.bf16.msra.mxu0 0
      %3346 = vmatprep.subr.bf16.mxu0 0
      %3347 = vmatpush1.bf16.msra.mxu0 0
      %3348 = vmatprep.subr.bf16.mxu0 0
      %3349 = vmatpush1.bf16.msra.mxu0 0
      %3350 = vmatprep.subr.bf16.mxu0 0
      %3351 = vmatpush1.bf16.msra.mxu0 0
      %3352 = vmatprep.subr.bf16.mxu0 0
      %3353 = vmatpush1.bf16.msra.mxu0 0
      %3354 = vmatprep.subr.bf16.mxu0 0
      %3355 = vmatpush1.bf16.msra.mxu0 0
      %3356 = vmatprep.subr.bf16.mxu0 0
      %3357 = vmatpush1.bf16.msra.mxu0 0
      %3358 = vmatprep.subr.bf16.mxu0 0
      %3359 = vmatpush1.bf16.msra.mxu0 0
      %3360 = vmatprep.mubr.bf16.mxu0 0
      %3361 = vmatmul.mubr.bf16.gmra.mrb[0].mxu0 %v2725
      %v3362 = vpop.f32.mrb[0].mxu0
      %v3363 = vadd.f32 0.0, %v3362
      %v3364 = vpop.f32.mrb[0].mxu0
      %v3365 = vpop.f32.mrb[0].mxu0
      %v3366 = vadd.f32 0.0, %v3365
      %v3367 = vpop.f32.mrb[0].mxu0
      %3368 = vmatprep.mubr.bf16.mxu0 0
      %3369 = vmatmul.mubr.bf16.gmra.mrb[0].mxu0 %v2728
      %v3370 = vpop.f32.mrb[0].mxu0
      %v3371 = vadd.f32 0.0, %v3370
      %v3372 = vpop.f32.mrb[0].mxu0
      %v3373 = vpop.f32.mrb[0].mxu0
      %v3374 = vadd.f32 0.0, %v3373
      %v3375 = vpop.f32.mrb[0].mxu0
      %3376 = vmatprep.mubr.bf16.mxu0 0
      %3377 = vmatmul.mubr.bf16.gmra.mrb[0].mxu0 %v2731
      %v3378 = vpop.f32.mrb[0].mxu0
      %v3379 = vadd.f32 0.0, %v3378
      %v3380 = vpop.f32.mrb[0].mxu0
      %v3381 = vpop.f32.mrb[0].mxu0
      %v3382 = vadd.f32 0.0, %v3381
      %v3383 = vpop.f32.mrb[0].mxu0
      %3384 = vmatprep.mubr.bf16.mxu0 0
      %3385 = vmatmul.mubr.bf16.gmra.mrb[0].mxu0 %v2734
      %v3386 = vpop.f32.mrb[0].mxu0
      %v3387 = vadd.f32 0.0, %v3386
      %v3388 = vpop.f32.mrb[0].mxu0
      %v3389 = vpop.f32.mrb[0].mxu0
      %v3390 = vadd.f32 0.0, %v3389
      %v3391 = vpop.f32.mrb[0].mxu0
      %3392 = vmatprep.mubr.bf16.mxu0 0
      %3393 = vmatmul.mubr.bf16.gmra.mrb[0].mxu0 %v2737
      %v3394 = vpop.f32.mrb[0].mxu0
      %v3395 = vadd.f32 0.0, %v3394
      %v3396 = vpop.f32.mrb[0].mxu0
      %v3397 = vpop.f32.mrb[0].mxu0
      %v3398 = vadd.f32 0.0, %v3397
      %v3399 = vpop.f32.mrb[0].mxu0
      %3400 = vmatprep.mubr.bf16.mxu0 0
      %3401 = vmatmul.mubr.bf16.gmra.mrb[0].mxu0 %v2740
      %v3402 = vpop.f32.mrb[0].mxu0
      %v3403 = vadd.f32 0.0, %v3402
      %v3404 = vpop.f32.mrb[0].mxu0
      %v3405 = vpop.f32.mrb[0].mxu0
      %v3406 = vadd.f32 0.0, %v3405
      %v3407 = vpop.f32.mrb[0].mxu0
      %3408 = vmatprep.mubr.bf16.mxu0 0
      %3409 = vmatmul.mubr.bf16.gmra.mrb[0].mxu0 %v2743
      %v3410 = vpop.f32.mrb[0].mxu0
      %v3411 = vadd.f32 0.0, %v3410
      %v3412 = vpop.f32.mrb[0].mxu0
      %v3413 = vpop.f32.mrb[0].mxu0
      %v3414 = vadd.f32 0.0, %v3413
      %v3415 = vpop.f32.mrb[0].mxu0
      %3416 = vmatprep.mubr.bf16.mxu0 0
      %3417 = vmatmul.mubr.bf16.gmra.mrb[0].mxu0 %v2746
      %v3418 = vpop.f32.mrb[0].mxu0
      %v3419 = vadd.f32 0.0, %v3418
      %v3420 = vpop.f32.mrb[0].mxu0
      %v3421 = vpop.f32.mrb[0].mxu0
      %v3422 = vadd.f32 0.0, %v3421
      %v3423 = vpop.f32.mrb[0].mxu0
      %3424 = vmatprep.mubr.bf16.mxu0 0
      %3425 = vmatmul.mubr.bf16.gmra.mrb[0].mxu0 %v2749
      %v3426 = vpop.f32.mrb[0].mxu0
      %v3427 = vadd.f32 0.0, %v3426
      %v3428 = vpop.f32.mrb[0].mxu0
      %v3429 = vpop.f32.mrb[0].mxu0
      %v3430 = vadd.f32 0.0, %v3429
      %v3431 = vpop.f32.mrb[0].mxu0
      %3432 = vmatprep.mubr.bf16.mxu0 0
      %3433 = vmatmul.mubr.bf16.gmra.mrb[0].mxu0 %v2752
      %v3434 = vpop.f32.mrb[0].mxu0
      %v3435 = vadd.f32 0.0, %v3434
      %v3436 = vpop.f32.mrb[0].mxu0
      %v3437 = vpop.f32.mrb[0].mxu0
      %v3438 = vadd.f32 0.0, %v3437
      %v3439 = vpop.f32.mrb[0].mxu0
      %3440 = vmatprep.mubr.bf16.mxu0 0
      %3441 = vmatmul.mubr.bf16.gmra.mrb[0].mxu0 %v2755
      %v3442 = vpop.f32.mrb[0].mxu0
      %v3443 = vadd.f32 0.0, %v3442
      %v3444 = vpop.f32.mrb[0].mxu0
      %v3445 = vpop.f32.mrb[0].mxu0
      %v3446 = vadd.f32 0.0, %v3445
      %v3447 = vpop.f32.mrb[0].mxu0
      %3448 = vmatprep.mubr.bf16.mxu0 0
      %3449 = vmatmul.mubr.bf16.gmra.mrb[0].mxu0 %v2758
      %v3450 = vpop.f32.mrb[0].mxu0
      %v3451 = vadd.f32 0.0, %v3450
      %v3452 = vpop.f32.mrb[0].mxu0
      %v3453 = vpop.f32.mrb[0].mxu0
      %v3454 = vadd.f32 0.0, %v3453
      %v3455 = vpop.f32.mrb[0].mxu0
      %3456 = vmatprep.mubr.bf16.mxu0 0
      %3457 = vmatmul.mubr.bf16.gmra.mrb[0].mxu0 %v2761
      %v3458 = vpop.f32.mrb[0].mxu0
      %v3459 = vadd.f32 0.0, %v3458
      %v3460 = vpop.f32.mrb[0].mxu0
      %v3461 = vpop.f32.mrb[0].mxu0
      %v3462 = vadd.f32 0.0, %v3461
      %v3463 = vpop.f32.mrb[0].mxu0
      %3464 = vmatprep.mubr.bf16.mxu0 0
      %3465 = vmatmul.mubr.bf16.gmra.mrb[0].mxu0 %v2764
      %v3466 = vpop.f32.mrb[0].mxu0
      %v3467 = vadd.f32 0.0, %v3466
      %v3468 = vpop.f32.mrb[0].mxu0
      %v3469 = vpop.f32.mrb[0].mxu0
      %v3470 = vadd.f32 0.0, %v3469
      %v3471 = vpop.f32.mrb[0].mxu0
      %3472 = vmatprep.mubr.bf16.mxu0 0
      %3473 = vmatmul.mubr.bf16.gmra.mrb[0].mxu0 %v2767
      %v3474 = vpop.f32.mrb[0].mxu0
      %v3475 = vadd.f32 0.0, %v3474
      %v3476 = vpop.f32.mrb[0].mxu0
      %v3477 = vpop.f32.mrb[0].mxu0
      %v3478 = vadd.f32 0.0, %v3477
      %v3479 = vpop.f32.mrb[0].mxu0
      %3480 = vmatprep.mubr.bf16.mxu0 0
      %3481 = vmatmul.mubr.bf16.gmra.mrb[0].mxu0 %v3326
      %v3482 = vpop.f32.mrb[0].mxu0
      %v3483 = vadd.f32 0.0, %v3482
      %v3484 = vpop.f32.mrb[0].mxu0
      %v3485 = vpop.f32.mrb[0].mxu0
      %v3486 = vadd.f32 0.0, %v3485
      %v3487 = vpop.f32.mrb[0].mxu0
      %3488 = vdwg.mxu0
      %v3489 = vadd.f32 %v3280, %v3363
      %v3490 = vadd.f32 %v3281, %v3366
      %v3491 = vadd.f32 %v3282, %v3371
      %v3492 = vadd.f32 %v3283, %v3374
      %v3493 = vadd.f32 %v3284, %v3379
      %v3494 = vadd.f32 %v3285, %v3382
      %v3495 = vadd.f32 %v3286, %v3387
      %v3496 = vadd.f32 %v3287, %v3390
      %v3497 = vadd.f32 %v3288, %v3395
      %v3498 = vadd.f32 %v3289, %v3398
      %v3499 = vadd.f32 %v3290, %v3403
      %v3500 = vadd.f32 %v3291, %v3406
      %v3501 = vadd.f32 %v3292, %v3411
      %v3502 = vadd.f32 %v3293, %v3414
      %v3503 = vadd.f32 %v3294, %v3419
      %v3504 = vadd.f32 %v3295, %v3422
      %v3505 = vadd.f32 %v3296, %v3427
      %v3506 = vadd.f32 %v3297, %v3430
      %v3507 = vadd.f32 %v3298, %v3435
      %v3508 = vadd.f32 %v3299, %v3438
      %v3509 = vadd.f32 %v3300, %v3443
      %v3510 = vadd.f32 %v3301, %v3446
      %v3511 = vadd.f32 %v3302, %v3451
      %v3512 = vadd.f32 %v3303, %v3454
      %v3513 = vadd.f32 %v3304, %v3459
      %v3514 = vadd.f32 %v3305, %v3462
      %v3515 = vadd.f32 %v3306, %v3467
      %v3516 = vadd.f32 %v3307, %v3470
      %v3517 = vadd.f32 %v3308, %v3475
      %v3518 = vadd.f32 %v3309, %v3478
      %v3519 = vadd.f32 %v3310, %v3483
      %v3520 = vadd.f32 %v3311, %v3486
      %v3524 = vrot.slane %v2253, 1
      %v3525 = vrot.slane %v2254, 1
      %v3526 = vsel %vm2359, %v3524, %v3525
      %v3527 = vrot.slane %v2255, 1
      %v3528 = vsel %vm2359, %v3525, %v3527
      %v3531 = vpack.c.bf16 %v3528, %v3526
      %v3536 = vunpack.c.l.b16 %v2275
      %v3537 = vunpack.c.l.b16 %v2276
      %v3538 = vunpack.c.l.b16 %v2277
      %v3539 = vunpack.c.l.b16 %v2278
      %v3540 = vpack.c.b16 %v3537, %v3536
      %v3541 = vpack.c.b16 %v3539, %v3538
      %v3545 = vsel %vm1553, %v3531, 0
      %3547 = vmatprep.subr.bf16.mxu0 0
      %3548 = vmatpush1.bf16.msra.mxu0 %v3540
      %3549 = vmatprep.subr.bf16.mxu0 0
      %3550 = vmatpush1.bf16.msra.mxu0 %v3541
      %3551 = vmatprep.subr.bf16.mxu0 0
      %3552 = vmatpush1.bf16.msra.mxu0 0
      %3553 = vmatprep.subr.bf16.mxu0 0
      %3554 = vmatpush1.bf16.msra.mxu0 0
      %3555 = vmatprep.subr.bf16.mxu0 0
      %3556 = vmatpush1.bf16.msra.mxu0 0
      %3557 = vmatprep.subr.bf16.mxu0 0
      %3558 = vmatpush1.bf16.msra.mxu0 0
      %3559 = vmatprep.subr.bf16.mxu0 0
      %3560 = vmatpush1.bf16.msra.mxu0 0
      %3561 = vmatprep.subr.bf16.mxu0 0
      %3562 = vmatpush1.bf16.msra.mxu0 0
      %3563 = vmatprep.subr.bf16.mxu0 0
      %3564 = vmatpush1.bf16.msra.mxu0 0
      %3565 = vmatprep.subr.bf16.mxu0 0
      %3566 = vmatpush1.bf16.msra.mxu0 0
      %3567 = vmatprep.subr.bf16.mxu0 0
      %3568 = vmatpush1.bf16.msra.mxu0 0
      %3569 = vmatprep.subr.bf16.mxu0 0
      %3570 = vmatpush1.bf16.msra.mxu0 0
      %3571 = vmatprep.subr.bf16.mxu0 0
      %3572 = vmatpush1.bf16.msra.mxu0 0
      %3573 = vmatprep.subr.bf16.mxu0 0
      %3574 = vmatpush1.bf16.msra.mxu0 0
      %3575 = vmatprep.subr.bf16.mxu0 0
      %3576 = vmatpush1.bf16.msra.mxu0 0
      %3577 = vmatprep.subr.bf16.mxu0 0
      %3578 = vmatpush1.bf16.msra.mxu0 0
      %3579 = vmatprep.mubr.bf16.mxu0 0
      %3580 = vmatmul.mubr.bf16.gmra.mrb[0].mxu0 %v2504
      %v3581 = vpop.f32.mrb[0].mxu0
      %v3582 = vadd.f32 0.0, %v3581
      %v3583 = vpop.f32.mrb[0].mxu0
      %v3584 = vpop.f32.mrb[0].mxu0
      %v3585 = vadd.f32 0.0, %v3584
      %v3586 = vpop.f32.mrb[0].mxu0
      %3587 = vmatprep.mubr.bf16.mxu0 0
      %3588 = vmatmul.mubr.bf16.gmra.mrb[0].mxu0 %v2507
      %v3589 = vpop.f32.mrb[0].mxu0
      %v3590 = vadd.f32 0.0, %v3589
      %v3591 = vpop.f32.mrb[0].mxu0
      %v3592 = vpop.f32.mrb[0].mxu0
      %v3593 = vadd.f32 0.0, %v3592
      %v3594 = vpop.f32.mrb[0].mxu0
      %3595 = vmatprep.mubr.bf16.mxu0 0
      %3596 = vmatmul.mubr.bf16.gmra.mrb[0].mxu0 %v2510
      %v3597 = vpop.f32.mrb[0].mxu0
      %v3598 = vadd.f32 0.0, %v3597
      %v3599 = vpop.f32.mrb[0].mxu0
      %v3600 = vpop.f32.mrb[0].mxu0
      %v3601 = vadd.f32 0.0, %v3600
      %v3602 = vpop.f32.mrb[0].mxu0
      %3603 = vmatprep.mubr.bf16.mxu0 0
      %3604 = vmatmul.mubr.bf16.gmra.mrb[0].mxu0 %v2513
      %v3605 = vpop.f32.mrb[0].mxu0
      %v3606 = vadd.f32 0.0, %v3605
      %v3607 = vpop.f32.mrb[0].mxu0
      %v3608 = vpop.f32.mrb[0].mxu0
      %v3609 = vadd.f32 0.0, %v3608
      %v3610 = vpop.f32.mrb[0].mxu0
      %3611 = vmatprep.mubr.bf16.mxu0 0
      %3612 = vmatmul.mubr.bf16.gmra.mrb[0].mxu0 %v2516
      %v3613 = vpop.f32.mrb[0].mxu0
      %v3614 = vadd.f32 0.0, %v3613
      %v3615 = vpop.f32.mrb[0].mxu0
      %v3616 = vpop.f32.mrb[0].mxu0
      %v3617 = vadd.f32 0.0, %v3616
      %v3618 = vpop.f32.mrb[0].mxu0
      %3619 = vmatprep.mubr.bf16.mxu0 0
      %3620 = vmatmul.mubr.bf16.gmra.mrb[0].mxu0 %v2519
      %v3621 = vpop.f32.mrb[0].mxu0
      %v3622 = vadd.f32 0.0, %v3621
      %v3623 = vpop.f32.mrb[0].mxu0
      %v3624 = vpop.f32.mrb[0].mxu0
      %v3625 = vadd.f32 0.0, %v3624
      %v3626 = vpop.f32.mrb[0].mxu0
      %3627 = vmatprep.mubr.bf16.mxu0 0
      %3628 = vmatmul.mubr.bf16.gmra.mrb[0].mxu0 %v2522
      %v3629 = vpop.f32.mrb[0].mxu0
      %v3630 = vadd.f32 0.0, %v3629
      %v3631 = vpop.f32.mrb[0].mxu0
      %v3632 = vpop.f32.mrb[0].mxu0
      %v3633 = vadd.f32 0.0, %v3632
      %v3634 = vpop.f32.mrb[0].mxu0
      %3635 = vmatprep.mubr.bf16.mxu0 0
      %3636 = vmatmul.mubr.bf16.gmra.mrb[0].mxu0 %v2525
      %v3637 = vpop.f32.mrb[0].mxu0
      %v3638 = vadd.f32 0.0, %v3637
      %v3639 = vpop.f32.mrb[0].mxu0
      %v3640 = vpop.f32.mrb[0].mxu0
      %v3641 = vadd.f32 0.0, %v3640
      %v3642 = vpop.f32.mrb[0].mxu0
      %3643 = vmatprep.mubr.bf16.mxu0 0
      %3644 = vmatmul.mubr.bf16.gmra.mrb[0].mxu0 %v2528
      %v3645 = vpop.f32.mrb[0].mxu0
      %v3646 = vadd.f32 0.0, %v3645
      %v3647 = vpop.f32.mrb[0].mxu0
      %v3648 = vpop.f32.mrb[0].mxu0
      %v3649 = vadd.f32 0.0, %v3648
      %v3650 = vpop.f32.mrb[0].mxu0
      %3651 = vmatprep.mubr.bf16.mxu0 0
      %3652 = vmatmul.mubr.bf16.gmra.mrb[0].mxu0 %v2531
      %v3653 = vpop.f32.mrb[0].mxu0
      %v3654 = vadd.f32 0.0, %v3653
      %v3655 = vpop.f32.mrb[0].mxu0
      %v3656 = vpop.f32.mrb[0].mxu0
      %v3657 = vadd.f32 0.0, %v3656
      %v3658 = vpop.f32.mrb[0].mxu0
      %3659 = vmatprep.mubr.bf16.mxu0 0
      %3660 = vmatmul.mubr.bf16.gmra.mrb[0].mxu0 %v2534
      %v3661 = vpop.f32.mrb[0].mxu0
      %v3662 = vadd.f32 0.0, %v3661
      %v3663 = vpop.f32.mrb[0].mxu0
      %v3664 = vpop.f32.mrb[0].mxu0
      %v3665 = vadd.f32 0.0, %v3664
      %v3666 = vpop.f32.mrb[0].mxu0
      %3667 = vmatprep.mubr.bf16.mxu0 0
      %3668 = vmatmul.mubr.bf16.gmra.mrb[0].mxu0 %v2537
      %v3669 = vpop.f32.mrb[0].mxu0
      %v3670 = vadd.f32 0.0, %v3669
      %v3671 = vpop.f32.mrb[0].mxu0
      %v3672 = vpop.f32.mrb[0].mxu0
      %v3673 = vadd.f32 0.0, %v3672
      %v3674 = vpop.f32.mrb[0].mxu0
      %3675 = vmatprep.mubr.bf16.mxu0 0
      %3676 = vmatmul.mubr.bf16.gmra.mrb[0].mxu0 %v2540
      %v3677 = vpop.f32.mrb[0].mxu0
      %v3678 = vadd.f32 0.0, %v3677
      %v3679 = vpop.f32.mrb[0].mxu0
      %v3680 = vpop.f32.mrb[0].mxu0
      %v3681 = vadd.f32 0.0, %v3680
      %v3682 = vpop.f32.mrb[0].mxu0
      %3683 = vmatprep.mubr.bf16.mxu0 0
      %3684 = vmatmul.mubr.bf16.gmra.mrb[0].mxu0 %v2543
      %v3685 = vpop.f32.mrb[0].mxu0
      %v3686 = vadd.f32 0.0, %v3685
      %v3687 = vpop.f32.mrb[0].mxu0
      %v3688 = vpop.f32.mrb[0].mxu0
      %v3689 = vadd.f32 0.0, %v3688
      %v3690 = vpop.f32.mrb[0].mxu0
      %3691 = vmatprep.mubr.bf16.mxu0 0
      %3692 = vmatmul.mubr.bf16.gmra.mrb[0].mxu0 %v2546
      %v3693 = vpop.f32.mrb[0].mxu0
      %v3694 = vadd.f32 0.0, %v3693
      %v3695 = vpop.f32.mrb[0].mxu0
      %v3696 = vpop.f32.mrb[0].mxu0
      %v3697 = vadd.f32 0.0, %v3696
      %v3698 = vpop.f32.mrb[0].mxu0
      %3699 = vmatprep.mubr.bf16.mxu0 0
      %3700 = vmatmul.mubr.bf16.gmra.mrb[0].mxu0 %v3545
      %v3701 = vpop.f32.mrb[0].mxu0
      %v3702 = vadd.f32 0.0, %v3701
      %v3703 = vpop.f32.mrb[0].mxu0
      %v3704 = vpop.f32.mrb[0].mxu0
      %v3705 = vadd.f32 0.0, %v3704
      %v3706 = vpop.f32.mrb[0].mxu0
      %3707 = vdwg.mxu0
      %v3708 = vadd.f32 %v3489, %v3582
      %v3709 = vadd.f32 %v3490, %v3585
      %v3710 = vadd.f32 %v3491, %v3590
      %v3711 = vadd.f32 %v3492, %v3593
      %v3712 = vadd.f32 %v3493, %v3598
      %v3713 = vadd.f32 %v3494, %v3601
      %v3714 = vadd.f32 %v3495, %v3606
      %v3715 = vadd.f32 %v3496, %v3609
      %v3716 = vadd.f32 %v3497, %v3614
      %v3717 = vadd.f32 %v3498, %v3617
      %v3718 = vadd.f32 %v3499, %v3622
      %v3719 = vadd.f32 %v3500, %v3625
      %v3720 = vadd.f32 %v3501, %v3630
      %v3721 = vadd.f32 %v3502, %v3633
      %v3722 = vadd.f32 %v3503, %v3638
      %v3723 = vadd.f32 %v3504, %v3641
      %v3724 = vadd.f32 %v3505, %v3646
      %v3725 = vadd.f32 %v3506, %v3649
      %v3726 = vadd.f32 %v3507, %v3654
      %v3727 = vadd.f32 %v3508, %v3657
      %v3728 = vadd.f32 %v3509, %v3662
      %v3729 = vadd.f32 %v3510, %v3665
      %v3730 = vadd.f32 %v3511, %v3670
      %v3731 = vadd.f32 %v3512, %v3673
      %v3732 = vadd.f32 %v3513, %v3678
      %v3733 = vadd.f32 %v3514, %v3681
      %v3734 = vadd.f32 %v3515, %v3686
      %v3735 = vadd.f32 %v3516, %v3689
      %v3736 = vadd.f32 %v3517, %v3694
      %v3737 = vadd.f32 %v3518, %v3697
      %v3738 = vadd.f32 %v3519, %v3702
      %v3739 = vadd.f32 %v3520, %v3705
      %v3740 = vrot.slane %v2253, 2
      %v3741 = vrot.slane %v2254, 2
      %v3742 = vsel %vm2930, %v3740, %v3741
      %v3743 = vrot.slane %v2255, 2
      %v3744 = vsel %vm2930, %v3741, %v3743
      %v3747 = vpack.c.bf16 %v3744, %v3742
      %v3752 = vunpack.c.l.b16 %v2279
      %v3753 = vunpack.c.l.b16 %v2280
      %v3754 = vunpack.c.l.b16 %v2281
      %v3755 = vunpack.c.l.b16 %v2282
      %v3756 = vpack.c.b16 %v3753, %v3752
      %v3757 = vpack.c.b16 %v3755, %v3754
      %v3761 = vsel %vm1553, %v3747, 0
      %3763 = vmatprep.subr.bf16.mxu0 0
      %3764 = vmatpush1.bf16.msra.mxu0 %v3756
      %3765 = vmatprep.subr.bf16.mxu0 0
      %3766 = vmatpush1.bf16.msra.mxu0 %v3757
      %3767 = vmatprep.subr.bf16.mxu0 0
      %3768 = vmatpush1.bf16.msra.mxu0 0
      %3769 = vmatprep.subr.bf16.mxu0 0
      %3770 = vmatpush1.bf16.msra.mxu0 0
      %3771 = vmatprep.subr.bf16.mxu0 0
      %3772 = vmatpush1.bf16.msra.mxu0 0
      %3773 = vmatprep.subr.bf16.mxu0 0
      %3774 = vmatpush1.bf16.msra.mxu0 0
      %3775 = vmatprep.subr.bf16.mxu0 0
      %3776 = vmatpush1.bf16.msra.mxu0 0
      %3777 = vmatprep.subr.bf16.mxu0 0
      %3778 = vmatpush1.bf16.msra.mxu0 0
      %3779 = vmatprep.subr.bf16.mxu0 0
      %3780 = vmatpush1.bf16.msra.mxu0 0
      %3781 = vmatprep.subr.bf16.mxu0 0
      %3782 = vmatpush1.bf16.msra.mxu0 0
      %3783 = vmatprep.subr.bf16.mxu0 0
      %3784 = vmatpush1.bf16.msra.mxu0 0
      %3785 = vmatprep.subr.bf16.mxu0 0
      %3786 = vmatpush1.bf16.msra.mxu0 0
      %3787 = vmatprep.subr.bf16.mxu0 0
      %3788 = vmatpush1.bf16.msra.mxu0 0
      %3789 = vmatprep.subr.bf16.mxu0 0
      %3790 = vmatpush1.bf16.msra.mxu0 0
      %3791 = vmatprep.subr.bf16.mxu0 0
      %3792 = vmatpush1.bf16.msra.mxu0 0
      %3793 = vmatprep.subr.bf16.mxu0 0
      %3794 = vmatpush1.bf16.msra.mxu0 0
      %3795 = vmatprep.mubr.bf16.mxu0 0
      %3796 = vmatmul.mubr.bf16.gmra.mrb[0].mxu0 %v3075
      %v3797 = vpop.f32.mrb[0].mxu0
      %v3798 = vadd.f32 0.0, %v3797
      %v3799 = vpop.f32.mrb[0].mxu0
      %v3800 = vpop.f32.mrb[0].mxu0
      %v3801 = vadd.f32 0.0, %v3800
      %v3802 = vpop.f32.mrb[0].mxu0
      %3803 = vmatprep.mubr.bf16.mxu0 0
      %3804 = vmatmul.mubr.bf16.gmra.mrb[0].mxu0 %v3078
      %v3805 = vpop.f32.mrb[0].mxu0
      %v3806 = vadd.f32 0.0, %v3805
      %v3807 = vpop.f32.mrb[0].mxu0
      %v3808 = vpop.f32.mrb[0].mxu0
      %v3809 = vadd.f32 0.0, %v3808
      %v3810 = vpop.f32.mrb[0].mxu0
      %3811 = vmatprep.mubr.bf16.mxu0 0
      %3812 = vmatmul.mubr.bf16.gmra.mrb[0].mxu0 %v3081
      %v3813 = vpop.f32.mrb[0].mxu0
      %v3814 = vadd.f32 0.0, %v3813
      %v3815 = vpop.f32.mrb[0].mxu0
      %v3816 = vpop.f32.mrb[0].mxu0
      %v3817 = vadd.f32 0.0, %v3816
      %v3818 = vpop.f32.mrb[0].mxu0
      %3819 = vmatprep.mubr.bf16.mxu0 0
      %3820 = vmatmul.mubr.bf16.gmra.mrb[0].mxu0 %v3084
      %v3821 = vpop.f32.mrb[0].mxu0
      %v3822 = vadd.f32 0.0, %v3821
      %v3823 = vpop.f32.mrb[0].mxu0
      %v3824 = vpop.f32.mrb[0].mxu0
      %v3825 = vadd.f32 0.0, %v3824
      %v3826 = vpop.f32.mrb[0].mxu0
      %3827 = vmatprep.mubr.bf16.mxu0 0
      %3828 = vmatmul.mubr.bf16.gmra.mrb[0].mxu0 %v3087
      %v3829 = vpop.f32.mrb[0].mxu0
      %v3830 = vadd.f32 0.0, %v3829
      %v3831 = vpop.f32.mrb[0].mxu0
      %v3832 = vpop.f32.mrb[0].mxu0
      %v3833 = vadd.f32 0.0, %v3832
      %v3834 = vpop.f32.mrb[0].mxu0
      %3835 = vmatprep.mubr.bf16.mxu0 0
      %3836 = vmatmul.mubr.bf16.gmra.mrb[0].mxu0 %v3090
      %v3837 = vpop.f32.mrb[0].mxu0
      %v3838 = vadd.f32 0.0, %v3837
      %v3839 = vpop.f32.mrb[0].mxu0
      %v3840 = vpop.f32.mrb[0].mxu0
      %v3841 = vadd.f32 0.0, %v3840
      %v3842 = vpop.f32.mrb[0].mxu0
      %3843 = vmatprep.mubr.bf16.mxu0 0
      %3844 = vmatmul.mubr.bf16.gmra.mrb[0].mxu0 %v3093
      %v3845 = vpop.f32.mrb[0].mxu0
      %v3846 = vadd.f32 0.0, %v3845
      %v3847 = vpop.f32.mrb[0].mxu0
      %v3848 = vpop.f32.mrb[0].mxu0
      %v3849 = vadd.f32 0.0, %v3848
      %v3850 = vpop.f32.mrb[0].mxu0
      %3851 = vmatprep.mubr.bf16.mxu0 0
      %3852 = vmatmul.mubr.bf16.gmra.mrb[0].mxu0 %v3096
      %v3853 = vpop.f32.mrb[0].mxu0
      %v3854 = vadd.f32 0.0, %v3853
      %v3855 = vpop.f32.mrb[0].mxu0
      %v3856 = vpop.f32.mrb[0].mxu0
      %v3857 = vadd.f32 0.0, %v3856
      %v3858 = vpop.f32.mrb[0].mxu0
      %3859 = vmatprep.mubr.bf16.mxu0 0
      %3860 = vmatmul.mubr.bf16.gmra.mrb[0].mxu0 %v3099
      %v3861 = vpop.f32.mrb[0].mxu0
      %v3862 = vadd.f32 0.0, %v3861
      %v3863 = vpop.f32.mrb[0].mxu0
      %v3864 = vpop.f32.mrb[0].mxu0
      %v3865 = vadd.f32 0.0, %v3864
      %v3866 = vpop.f32.mrb[0].mxu0
      %3867 = vmatprep.mubr.bf16.mxu0 0
      %3868 = vmatmul.mubr.bf16.gmra.mrb[0].mxu0 %v3102
      %v3869 = vpop.f32.mrb[0].mxu0
      %v3870 = vadd.f32 0.0, %v3869
      %v3871 = vpop.f32.mrb[0].mxu0
      %v3872 = vpop.f32.mrb[0].mxu0
      %v3873 = vadd.f32 0.0, %v3872
      %v3874 = vpop.f32.mrb[0].mxu0
      %3875 = vmatprep.mubr.bf16.mxu0 0
      %3876 = vmatmul.mubr.bf16.gmra.mrb[0].mxu0 %v3105
      %v3877 = vpop.f32.mrb[0].mxu0
      %v3878 = vadd.f32 0.0, %v3877
      %v3879 = vpop.f32.mrb[0].mxu0
      %v3880 = vpop.f32.mrb[0].mxu0
      %v3881 = vadd.f32 0.0, %v3880
      %v3882 = vpop.f32.mrb[0].mxu0
      %3883 = vmatprep.mubr.bf16.mxu0 0
      %3884 = vmatmul.mubr.bf16.gmra.mrb[0].mxu0 %v3108
      %v3885 = vpop.f32.mrb[0].mxu0
      %v3886 = vadd.f32 0.0, %v3885
      %v3887 = vpop.f32.mrb[0].mxu0
      %v3888 = vpop.f32.mrb[0].mxu0
      %v3889 = vadd.f32 0.0, %v3888
      %v3890 = vpop.f32.mrb[0].mxu0
      %3891 = vmatprep.mubr.bf16.mxu0 0
      %3892 = vmatmul.mubr.bf16.gmra.mrb[0].mxu0 %v3111
      %v3893 = vpop.f32.mrb[0].mxu0
      %v3894 = vadd.f32 0.0, %v3893
      %v3895 = vpop.f32.mrb[0].mxu0
      %v3896 = vpop.f32.mrb[0].mxu0
      %v3897 = vadd.f32 0.0, %v3896
      %v3898 = vpop.f32.mrb[0].mxu0
      %3899 = vmatprep.mubr.bf16.mxu0 0
      %3900 = vmatmul.mubr.bf16.gmra.mrb[0].mxu0 %v3114
      %v3901 = vpop.f32.mrb[0].mxu0
      %v3902 = vadd.f32 0.0, %v3901
      %v3903 = vpop.f32.mrb[0].mxu0
      %v3904 = vpop.f32.mrb[0].mxu0
      %v3905 = vadd.f32 0.0, %v3904
      %v3906 = vpop.f32.mrb[0].mxu0
      %3907 = vmatprep.mubr.bf16.mxu0 0
      %3908 = vmatmul.mubr.bf16.gmra.mrb[0].mxu0 %v3117
      %v3909 = vpop.f32.mrb[0].mxu0
      %v3910 = vadd.f32 0.0, %v3909
      %v3911 = vpop.f32.mrb[0].mxu0
      %v3912 = vpop.f32.mrb[0].mxu0
      %v3913 = vadd.f32 0.0, %v3912
      %v3914 = vpop.f32.mrb[0].mxu0
      %3915 = vmatprep.mubr.bf16.mxu0 0
      %3916 = vmatmul.mubr.bf16.gmra.mrb[0].mxu0 %v3761
      %v3917 = vpop.f32.mrb[0].mxu0
      %v3918 = vadd.f32 0.0, %v3917
      %v3919 = vpop.f32.mrb[0].mxu0
      %v3920 = vpop.f32.mrb[0].mxu0
      %v3921 = vadd.f32 0.0, %v3920
      %v3922 = vpop.f32.mrb[0].mxu0
      %3923 = vdwg.mxu0
      %v3924 = vadd.f32 %v3708, %v3798
      %v3925 = vadd.f32 %v3709, %v3801
      %v3926 = vadd.f32 %v3710, %v3806
      %v3927 = vadd.f32 %v3711, %v3809
      %v3928 = vadd.f32 %v3712, %v3814
      %v3929 = vadd.f32 %v3713, %v3817
      %v3930 = vadd.f32 %v3714, %v3822
      %v3931 = vadd.f32 %v3715, %v3825
      %v3932 = vadd.f32 %v3716, %v3830
      %v3933 = vadd.f32 %v3717, %v3833
      %v3934 = vadd.f32 %v3718, %v3838
      %v3935 = vadd.f32 %v3719, %v3841
      %v3936 = vadd.f32 %v3720, %v3846
      %v3937 = vadd.f32 %v3721, %v3849
      %v3938 = vadd.f32 %v3722, %v3854
      %v3939 = vadd.f32 %v3723, %v3857
      %v3940 = vadd.f32 %v3724, %v3862
      %v3941 = vadd.f32 %v3725, %v3865
      %v3942 = vadd.f32 %v3726, %v3870
      %v3943 = vadd.f32 %v3727, %v3873
      %v3944 = vadd.f32 %v3728, %v3878
      %v3945 = vadd.f32 %v3729, %v3881
      %v3946 = vadd.f32 %v3730, %v3886
      %v3947 = vadd.f32 %v3731, %v3889
      %v3948 = vadd.f32 %v3732, %v3894
      %v3949 = vadd.f32 %v3733, %v3897
      %v3950 = vadd.f32 %v3734, %v3902
      %v3951 = vadd.f32 %v3735, %v3905
      %v3952 = vadd.f32 %v3736, %v3910
      %v3953 = vadd.f32 %v3737, %v3913
      %v3954 = vadd.f32 %v3738, %v3918
      %v3955 = vadd.f32 %v3739, %v3921
      %v3956 = vpack.c.bf16 %v2257, %v2256
      %v3961 = vunpack.c.l.b16 %v2283
      %v3962 = vunpack.c.l.b16 %v2284
      %v3963 = vunpack.c.l.b16 %v2285
      %v3964 = vunpack.c.l.b16 %v2286
      %v3965 = vpack.c.b16 %v3962, %v3961
      %v3966 = vpack.c.b16 %v3964, %v3963
      %v3970 = vsel %vm1553, %v3956, 0
      %3972 = vmatprep.subr.bf16.mxu0 0
      %3973 = vmatpush1.bf16.msra.mxu0 %v3965
      %3974 = vmatprep.subr.bf16.mxu0 0
      %3975 = vmatpush1.bf16.msra.mxu0 %v3966
      %3976 = vmatprep.subr.bf16.mxu0 0
      %3977 = vmatpush1.bf16.msra.mxu0 0
      %3978 = vmatprep.subr.bf16.mxu0 0
      %3979 = vmatpush1.bf16.msra.mxu0 0
      %3980 = vmatprep.subr.bf16.mxu0 0
      %3981 = vmatpush1.bf16.msra.mxu0 0
      %3982 = vmatprep.subr.bf16.mxu0 0
      %3983 = vmatpush1.bf16.msra.mxu0 0
      %3984 = vmatprep.subr.bf16.mxu0 0
      %3985 = vmatpush1.bf16.msra.mxu0 0
      %3986 = vmatprep.subr.bf16.mxu0 0
      %3987 = vmatpush1.bf16.msra.mxu0 0
      %3988 = vmatprep.subr.bf16.mxu0 0
      %3989 = vmatpush1.bf16.msra.mxu0 0
      %3990 = vmatprep.subr.bf16.mxu0 0
      %3991 = vmatpush1.bf16.msra.mxu0 0
      %3992 = vmatprep.subr.bf16.mxu0 0
      %3993 = vmatpush1.bf16.msra.mxu0 0
      %3994 = vmatprep.subr.bf16.mxu0 0
      %3995 = vmatpush1.bf16.msra.mxu0 0
      %3996 = vmatprep.subr.bf16.mxu0 0
      %3997 = vmatpush1.bf16.msra.mxu0 0
      %3998 = vmatprep.subr.bf16.mxu0 0
      %3999 = vmatpush1.bf16.msra.mxu0 0
      %4000 = vmatprep.subr.bf16.mxu0 0
      %4001 = vmatpush1.bf16.msra.mxu0 0
      %4002 = vmatprep.subr.bf16.mxu0 0
      %4003 = vmatpush1.bf16.msra.mxu0 0
      %4004 = vmatprep.mubr.bf16.mxu0 0
      %4005 = vmatmul.mubr.bf16.gmra.mrb[0].mxu0 %v2728
      %v4006 = vpop.f32.mrb[0].mxu0
      %v4007 = vadd.f32 0.0, %v4006
      %v4008 = vpop.f32.mrb[0].mxu0
      %v4009 = vpop.f32.mrb[0].mxu0
      %v4010 = vadd.f32 0.0, %v4009
      %v4011 = vpop.f32.mrb[0].mxu0
      %4012 = vmatprep.mubr.bf16.mxu0 0
      %4013 = vmatmul.mubr.bf16.gmra.mrb[0].mxu0 %v2731
      %v4014 = vpop.f32.mrb[0].mxu0
      %v4015 = vadd.f32 0.0, %v4014
      %v4016 = vpop.f32.mrb[0].mxu0
      %v4017 = vpop.f32.mrb[0].mxu0
      %v4018 = vadd.f32 0.0, %v4017
      %v4019 = vpop.f32.mrb[0].mxu0
      %4020 = vmatprep.mubr.bf16.mxu0 0
      %4021 = vmatmul.mubr.bf16.gmra.mrb[0].mxu0 %v2734
      %v4022 = vpop.f32.mrb[0].mxu0
      %v4023 = vadd.f32 0.0, %v4022
      %v4024 = vpop.f32.mrb[0].mxu0
      %v4025 = vpop.f32.mrb[0].mxu0
      %v4026 = vadd.f32 0.0, %v4025
      %v4027 = vpop.f32.mrb[0].mxu0
      %4028 = vmatprep.mubr.bf16.mxu0 0
      %4029 = vmatmul.mubr.bf16.gmra.mrb[0].mxu0 %v2737
      %v4030 = vpop.f32.mrb[0].mxu0
      %v4031 = vadd.f32 0.0, %v4030
      %v4032 = vpop.f32.mrb[0].mxu0
      %v4033 = vpop.f32.mrb[0].mxu0
      %v4034 = vadd.f32 0.0, %v4033
      %v4035 = vpop.f32.mrb[0].mxu0
      %4036 = vmatprep.mubr.bf16.mxu0 0
      %4037 = vmatmul.mubr.bf16.gmra.mrb[0].mxu0 %v2740
      %v4038 = vpop.f32.mrb[0].mxu0
      %v4039 = vadd.f32 0.0, %v4038
      %v4040 = vpop.f32.mrb[0].mxu0
      %v4041 = vpop.f32.mrb[0].mxu0
      %v4042 = vadd.f32 0.0, %v4041
      %v4043 = vpop.f32.mrb[0].mxu0
      %4044 = vmatprep.mubr.bf16.mxu0 0
      %4045 = vmatmul.mubr.bf16.gmra.mrb[0].mxu0 %v2743
      %v4046 = vpop.f32.mrb[0].mxu0
      %v4047 = vadd.f32 0.0, %v4046
      %v4048 = vpop.f32.mrb[0].mxu0
      %v4049 = vpop.f32.mrb[0].mxu0
      %v4050 = vadd.f32 0.0, %v4049
      %v4051 = vpop.f32.mrb[0].mxu0
      %4052 = vmatprep.mubr.bf16.mxu0 0
      %4053 = vmatmul.mubr.bf16.gmra.mrb[0].mxu0 %v2746
      %v4054 = vpop.f32.mrb[0].mxu0
      %v4055 = vadd.f32 0.0, %v4054
      %v4056 = vpop.f32.mrb[0].mxu0
      %v4057 = vpop.f32.mrb[0].mxu0
      %v4058 = vadd.f32 0.0, %v4057
      %v4059 = vpop.f32.mrb[0].mxu0
      %4060 = vmatprep.mubr.bf16.mxu0 0
      %4061 = vmatmul.mubr.bf16.gmra.mrb[0].mxu0 %v2749
      %v4062 = vpop.f32.mrb[0].mxu0
      %v4063 = vadd.f32 0.0, %v4062
      %v4064 = vpop.f32.mrb[0].mxu0
      %v4065 = vpop.f32.mrb[0].mxu0
      %v4066 = vadd.f32 0.0, %v4065
      %v4067 = vpop.f32.mrb[0].mxu0
      %4068 = vmatprep.mubr.bf16.mxu0 0
      %4069 = vmatmul.mubr.bf16.gmra.mrb[0].mxu0 %v2752
      %v4070 = vpop.f32.mrb[0].mxu0
      %v4071 = vadd.f32 0.0, %v4070
      %v4072 = vpop.f32.mrb[0].mxu0
      %v4073 = vpop.f32.mrb[0].mxu0
      %v4074 = vadd.f32 0.0, %v4073
      %v4075 = vpop.f32.mrb[0].mxu0
      %4076 = vmatprep.mubr.bf16.mxu0 0
      %4077 = vmatmul.mubr.bf16.gmra.mrb[0].mxu0 %v2755
      %v4078 = vpop.f32.mrb[0].mxu0
      %v4079 = vadd.f32 0.0, %v4078
      %v4080 = vpop.f32.mrb[0].mxu0
      %v4081 = vpop.f32.mrb[0].mxu0
      %v4082 = vadd.f32 0.0, %v4081
      %v4083 = vpop.f32.mrb[0].mxu0
      %4084 = vmatprep.mubr.bf16.mxu0 0
      %4085 = vmatmul.mubr.bf16.gmra.mrb[0].mxu0 %v2758
      %v4086 = vpop.f32.mrb[0].mxu0
      %v4087 = vadd.f32 0.0, %v4086
      %v4088 = vpop.f32.mrb[0].mxu0
      %v4089 = vpop.f32.mrb[0].mxu0
      %v4090 = vadd.f32 0.0, %v4089
      %v4091 = vpop.f32.mrb[0].mxu0
      %4092 = vmatprep.mubr.bf16.mxu0 0
      %4093 = vmatmul.mubr.bf16.gmra.mrb[0].mxu0 %v2761
      %v4094 = vpop.f32.mrb[0].mxu0
      %v4095 = vadd.f32 0.0, %v4094
      %v4096 = vpop.f32.mrb[0].mxu0
      %v4097 = vpop.f32.mrb[0].mxu0
      %v4098 = vadd.f32 0.0, %v4097
      %v4099 = vpop.f32.mrb[0].mxu0
      %4100 = vmatprep.mubr.bf16.mxu0 0
      %4101 = vmatmul.mubr.bf16.gmra.mrb[0].mxu0 %v2764
      %v4102 = vpop.f32.mrb[0].mxu0
      %v4103 = vadd.f32 0.0, %v4102
      %v4104 = vpop.f32.mrb[0].mxu0
      %v4105 = vpop.f32.mrb[0].mxu0
      %v4106 = vadd.f32 0.0, %v4105
      %v4107 = vpop.f32.mrb[0].mxu0
      %4108 = vmatprep.mubr.bf16.mxu0 0
      %4109 = vmatmul.mubr.bf16.gmra.mrb[0].mxu0 %v2767
      %v4110 = vpop.f32.mrb[0].mxu0
      %v4111 = vadd.f32 0.0, %v4110
      %v4112 = vpop.f32.mrb[0].mxu0
      %v4113 = vpop.f32.mrb[0].mxu0
      %v4114 = vadd.f32 0.0, %v4113
      %v4115 = vpop.f32.mrb[0].mxu0
      %4116 = vmatprep.mubr.bf16.mxu0 0
      %4117 = vmatmul.mubr.bf16.gmra.mrb[0].mxu0 %v3326
      %v4118 = vpop.f32.mrb[0].mxu0
      %v4119 = vadd.f32 0.0, %v4118
      %v4120 = vpop.f32.mrb[0].mxu0
      %v4121 = vpop.f32.mrb[0].mxu0
      %v4122 = vadd.f32 0.0, %v4121
      %v4123 = vpop.f32.mrb[0].mxu0
      %4124 = vmatprep.mubr.bf16.mxu0 0
      %4125 = vmatmul.mubr.bf16.gmra.mrb[0].mxu0 %v3970
      %v4126 = vpop.f32.mrb[0].mxu0
      %v4127 = vadd.f32 0.0, %v4126
      %v4128 = vpop.f32.mrb[0].mxu0
      %v4129 = vpop.f32.mrb[0].mxu0
      %v4130 = vadd.f32 0.0, %v4129
      %v4131 = vpop.f32.mrb[0].mxu0
      %4132 = vdwg.mxu0
      %v4133 = vadd.f32 %v3924, %v4007
      %v4134 = vadd.f32 %v3925, %v4010
      %v4135 = vadd.f32 %v3926, %v4015
      %v4136 = vadd.f32 %v3927, %v4018
      %v4137 = vadd.f32 %v3928, %v4023
      %v4138 = vadd.f32 %v3929, %v4026
      %v4139 = vadd.f32 %v3930, %v4031
      %v4140 = vadd.f32 %v3931, %v4034
      %v4141 = vadd.f32 %v3932, %v4039
      %v4142 = vadd.f32 %v3933, %v4042
      %v4143 = vadd.f32 %v3934, %v4047
      %v4144 = vadd.f32 %v3935, %v4050
      %v4145 = vadd.f32 %v3936, %v4055
      %v4146 = vadd.f32 %v3937, %v4058
      %v4147 = vadd.f32 %v3938, %v4063
      %v4148 = vadd.f32 %v3939, %v4066
      %v4149 = vadd.f32 %v3940, %v4071
      %v4150 = vadd.f32 %v3941, %v4074
      %v4151 = vadd.f32 %v3942, %v4079
      %v4152 = vadd.f32 %v3943, %v4082
      %v4153 = vadd.f32 %v3944, %v4087
      %v4154 = vadd.f32 %v3945, %v4090
      %v4155 = vadd.f32 %v3946, %v4095
      %v4156 = vadd.f32 %v3947, %v4098
      %v4157 = vadd.f32 %v3948, %v4103
      %v4158 = vadd.f32 %v3949, %v4106
      %v4159 = vadd.f32 %v3950, %v4111
      %v4160 = vadd.f32 %v3951, %v4114
      %v4161 = vadd.f32 %v3952, %v4119
      %v4162 = vadd.f32 %v3953, %v4122
      %v4163 = vadd.f32 %v3954, %v4127
      %v4164 = vadd.f32 %v3955, %v4130
      %v4168 = vrot.slane %v2256, 1
      %v4169 = vrot.slane %v2257, 1
      %v4170 = vsel %vm2359, %v4168, %v4169
      %v4171 = vrot.slane %v2258, 1
      %v4172 = vsel %vm2359, %v4169, %v4171
      %v4175 = vpack.c.bf16 %v4172, %v4170
      %v4180 = vunpack.c.l.b16 %v2287
      %v4181 = vunpack.c.l.b16 %v2288
      %v4182 = vunpack.c.l.b16 %v2289
      %v4183 = vunpack.c.l.b16 %v2290
      %v4184 = vpack.c.b16 %v4181, %v4180
      %v4185 = vpack.c.b16 %v4183, %v4182
      %v4189 = vsel %vm1553, %v4175, 0
      %4191 = vmatprep.subr.bf16.mxu0 0
      %4192 = vmatpush1.bf16.msra.mxu0 %v4184
      %4193 = vmatprep.subr.bf16.mxu0 0
      %4194 = vmatpush1.bf16.msra.mxu0 %v4185
      %4195 = vmatprep.subr.bf16.mxu0 0
      %4196 = vmatpush1.bf16.msra.mxu0 0
      %4197 = vmatprep.subr.bf16.mxu0 0
      %4198 = vmatpush1.bf16.msra.mxu0 0
      %4199 = vmatprep.subr.bf16.mxu0 0
      %4200 = vmatpush1.bf16.msra.mxu0 0
      %4201 = vmatprep.subr.bf16.mxu0 0
      %4202 = vmatpush1.bf16.msra.mxu0 0
      %4203 = vmatprep.subr.bf16.mxu0 0
      %4204 = vmatpush1.bf16.msra.mxu0 0
      %4205 = vmatprep.subr.bf16.mxu0 0
      %4206 = vmatpush1.bf16.msra.mxu0 0
      %4207 = vmatprep.subr.bf16.mxu0 0
      %4208 = vmatpush1.bf16.msra.mxu0 0
      %4209 = vmatprep.subr.bf16.mxu0 0
      %4210 = vmatpush1.bf16.msra.mxu0 0
      %4211 = vmatprep.subr.bf16.mxu0 0
      %4212 = vmatpush1.bf16.msra.mxu0 0
      %4213 = vmatprep.subr.bf16.mxu0 0
      %4214 = vmatpush1.bf16.msra.mxu0 0
      %4215 = vmatprep.subr.bf16.mxu0 0
      %4216 = vmatpush1.bf16.msra.mxu0 0
      %4217 = vmatprep.subr.bf16.mxu0 0
      %4218 = vmatpush1.bf16.msra.mxu0 0
      %4219 = vmatprep.subr.bf16.mxu0 0
      %4220 = vmatpush1.bf16.msra.mxu0 0
      %4221 = vmatprep.subr.bf16.mxu0 0
      %4222 = vmatpush1.bf16.msra.mxu0 0
      %4223 = vmatprep.mubr.bf16.mxu0 0
      %4224 = vmatmul.mubr.bf16.gmra.mrb[0].mxu0 %v2507
      %v4225 = vpop.f32.mrb[0].mxu0
      %v4226 = vadd.f32 0.0, %v4225
      %v4227 = vpop.f32.mrb[0].mxu0
      %v4228 = vpop.f32.mrb[0].mxu0
      %v4229 = vadd.f32 0.0, %v4228
      %v4230 = vpop.f32.mrb[0].mxu0
      %4231 = vmatprep.mubr.bf16.mxu0 0
      %4232 = vmatmul.mubr.bf16.gmra.mrb[0].mxu0 %v2510
      %v4233 = vpop.f32.mrb[0].mxu0
      %v4234 = vadd.f32 0.0, %v4233
      %v4235 = vpop.f32.mrb[0].mxu0
      %v4236 = vpop.f32.mrb[0].mxu0
      %v4237 = vadd.f32 0.0, %v4236
      %v4238 = vpop.f32.mrb[0].mxu0
      %4239 = vmatprep.mubr.bf16.mxu0 0
      %4240 = vmatmul.mubr.bf16.gmra.mrb[0].mxu0 %v2513
      %v4241 = vpop.f32.mrb[0].mxu0
      %v4242 = vadd.f32 0.0, %v4241
      %v4243 = vpop.f32.mrb[0].mxu0
      %v4244 = vpop.f32.mrb[0].mxu0
      %v4245 = vadd.f32 0.0, %v4244
      %v4246 = vpop.f32.mrb[0].mxu0
      %4247 = vmatprep.mubr.bf16.mxu0 0
      %4248 = vmatmul.mubr.bf16.gmra.mrb[0].mxu0 %v2516
      %v4249 = vpop.f32.mrb[0].mxu0
      %v4250 = vadd.f32 0.0, %v4249
      %v4251 = vpop.f32.mrb[0].mxu0
      %v4252 = vpop.f32.mrb[0].mxu0
      %v4253 = vadd.f32 0.0, %v4252
      %v4254 = vpop.f32.mrb[0].mxu0
      %4255 = vmatprep.mubr.bf16.mxu0 0
      %4256 = vmatmul.mubr.bf16.gmra.mrb[0].mxu0 %v2519
      %v4257 = vpop.f32.mrb[0].mxu0
      %v4258 = vadd.f32 0.0, %v4257
      %v4259 = vpop.f32.mrb[0].mxu0
      %v4260 = vpop.f32.mrb[0].mxu0
      %v4261 = vadd.f32 0.0, %v4260
      %v4262 = vpop.f32.mrb[0].mxu0
      %4263 = vmatprep.mubr.bf16.mxu0 0
      %4264 = vmatmul.mubr.bf16.gmra.mrb[0].mxu0 %v2522
      %v4265 = vpop.f32.mrb[0].mxu0
      %v4266 = vadd.f32 0.0, %v4265
      %v4267 = vpop.f32.mrb[0].mxu0
      %v4268 = vpop.f32.mrb[0].mxu0
      %v4269 = vadd.f32 0.0, %v4268
      %v4270 = vpop.f32.mrb[0].mxu0
      %4271 = vmatprep.mubr.bf16.mxu0 0
      %4272 = vmatmul.mubr.bf16.gmra.mrb[0].mxu0 %v2525
      %v4273 = vpop.f32.mrb[0].mxu0
      %v4274 = vadd.f32 0.0, %v4273
      %v4275 = vpop.f32.mrb[0].mxu0
      %v4276 = vpop.f32.mrb[0].mxu0
      %v4277 = vadd.f32 0.0, %v4276
      %v4278 = vpop.f32.mrb[0].mxu0
      %4279 = vmatprep.mubr.bf16.mxu0 0
      %4280 = vmatmul.mubr.bf16.gmra.mrb[0].mxu0 %v2528
      %v4281 = vpop.f32.mrb[0].mxu0
      %v4282 = vadd.f32 0.0, %v4281
      %v4283 = vpop.f32.mrb[0].mxu0
      %v4284 = vpop.f32.mrb[0].mxu0
      %v4285 = vadd.f32 0.0, %v4284
      %v4286 = vpop.f32.mrb[0].mxu0
      %4287 = vmatprep.mubr.bf16.mxu0 0
      %4288 = vmatmul.mubr.bf16.gmra.mrb[0].mxu0 %v2531
      %v4289 = vpop.f32.mrb[0].mxu0
      %v4290 = vadd.f32 0.0, %v4289
      %v4291 = vpop.f32.mrb[0].mxu0
      %v4292 = vpop.f32.mrb[0].mxu0
      %v4293 = vadd.f32 0.0, %v4292
      %v4294 = vpop.f32.mrb[0].mxu0
      %4295 = vmatprep.mubr.bf16.mxu0 0
      %4296 = vmatmul.mubr.bf16.gmra.mrb[0].mxu0 %v2534
      %v4297 = vpop.f32.mrb[0].mxu0
      %v4298 = vadd.f32 0.0, %v4297
      %v4299 = vpop.f32.mrb[0].mxu0
      %v4300 = vpop.f32.mrb[0].mxu0
      %v4301 = vadd.f32 0.0, %v4300
      %v4302 = vpop.f32.mrb[0].mxu0
      %4303 = vmatprep.mubr.bf16.mxu0 0
      %4304 = vmatmul.mubr.bf16.gmra.mrb[0].mxu0 %v2537
      %v4305 = vpop.f32.mrb[0].mxu0
      %v4306 = vadd.f32 0.0, %v4305
      %v4307 = vpop.f32.mrb[0].mxu0
      %v4308 = vpop.f32.mrb[0].mxu0
      %v4309 = vadd.f32 0.0, %v4308
      %v4310 = vpop.f32.mrb[0].mxu0
      %4311 = vmatprep.mubr.bf16.mxu0 0
      %4312 = vmatmul.mubr.bf16.gmra.mrb[0].mxu0 %v2540
      %v4313 = vpop.f32.mrb[0].mxu0
      %v4314 = vadd.f32 0.0, %v4313
      %v4315 = vpop.f32.mrb[0].mxu0
      %v4316 = vpop.f32.mrb[0].mxu0
      %v4317 = vadd.f32 0.0, %v4316
      %v4318 = vpop.f32.mrb[0].mxu0
      %4319 = vmatprep.mubr.bf16.mxu0 0
      %4320 = vmatmul.mubr.bf16.gmra.mrb[0].mxu0 %v2543
      %v4321 = vpop.f32.mrb[0].mxu0
      %v4322 = vadd.f32 0.0, %v4321
      %v4323 = vpop.f32.mrb[0].mxu0
      %v4324 = vpop.f32.mrb[0].mxu0
      %v4325 = vadd.f32 0.0, %v4324
      %v4326 = vpop.f32.mrb[0].mxu0
      %4327 = vmatprep.mubr.bf16.mxu0 0
      %4328 = vmatmul.mubr.bf16.gmra.mrb[0].mxu0 %v2546
      %v4329 = vpop.f32.mrb[0].mxu0
      %v4330 = vadd.f32 0.0, %v4329
      %v4331 = vpop.f32.mrb[0].mxu0
      %v4332 = vpop.f32.mrb[0].mxu0
      %v4333 = vadd.f32 0.0, %v4332
      %v4334 = vpop.f32.mrb[0].mxu0
      %4335 = vmatprep.mubr.bf16.mxu0 0
      %4336 = vmatmul.mubr.bf16.gmra.mrb[0].mxu0 %v3545
      %v4337 = vpop.f32.mrb[0].mxu0
      %v4338 = vadd.f32 0.0, %v4337
      %v4339 = vpop.f32.mrb[0].mxu0
      %v4340 = vpop.f32.mrb[0].mxu0
      %v4341 = vadd.f32 0.0, %v4340
      %v4342 = vpop.f32.mrb[0].mxu0
      %4343 = vmatprep.mubr.bf16.mxu0 0
      %4344 = vmatmul.mubr.bf16.gmra.mrb[0].mxu0 %v4189
      %v4345 = vpop.f32.mrb[0].mxu0
      %v4346 = vadd.f32 0.0, %v4345
      %v4347 = vpop.f32.mrb[0].mxu0
      %v4348 = vpop.f32.mrb[0].mxu0
      %v4349 = vadd.f32 0.0, %v4348
      %v4350 = vpop.f32.mrb[0].mxu0
      %4351 = vdwg.mxu0
      %v4352 = vadd.f32 %v4133, %v4226
      %v4353 = vadd.f32 %v4134, %v4229
      %v4354 = vadd.f32 %v4135, %v4234
      %v4355 = vadd.f32 %v4136, %v4237
      %v4356 = vadd.f32 %v4137, %v4242
      %v4357 = vadd.f32 %v4138, %v4245
      %v4358 = vadd.f32 %v4139, %v4250
      %v4359 = vadd.f32 %v4140, %v4253
      %v4360 = vadd.f32 %v4141, %v4258
      %v4361 = vadd.f32 %v4142, %v4261
      %v4362 = vadd.f32 %v4143, %v4266
      %v4363 = vadd.f32 %v4144, %v4269
      %v4364 = vadd.f32 %v4145, %v4274
      %v4365 = vadd.f32 %v4146, %v4277
      %v4366 = vadd.f32 %v4147, %v4282
      %v4367 = vadd.f32 %v4148, %v4285
      %v4368 = vadd.f32 %v4149, %v4290
      %v4369 = vadd.f32 %v4150, %v4293
      %v4370 = vadd.f32 %v4151, %v4298
      %v4371 = vadd.f32 %v4152, %v4301
      %v4372 = vadd.f32 %v4153, %v4306
      %v4373 = vadd.f32 %v4154, %v4309
      %v4374 = vadd.f32 %v4155, %v4314
      %v4375 = vadd.f32 %v4156, %v4317
      %v4376 = vadd.f32 %v4157, %v4322
      %v4377 = vadd.f32 %v4158, %v4325
      %v4378 = vadd.f32 %v4159, %v4330
      %v4379 = vadd.f32 %v4160, %v4333
      %v4380 = vadd.f32 %v4161, %v4338
      %v4381 = vadd.f32 %v4162, %v4341
      %v4382 = vadd.f32 %v4163, %v4346
      %v4383 = vadd.f32 %v4164, %v4349
      %v4384 = vrot.slane %v2256, 2
      %v4385 = vrot.slane %v2257, 2
      %v4386 = vsel %vm2930, %v4384, %v4385
      %v4387 = vrot.slane %v2258, 2
      %v4388 = vsel %vm2930, %v4385, %v4387
      %v4391 = vpack.c.bf16 %v4388, %v4386
      %v4396 = vunpack.c.l.b16 %v2291
      %v4397 = vunpack.c.l.b16 %v2292
      %v4398 = vunpack.c.l.b16 %v2293
      %v4399 = vunpack.c.l.b16 %v2294
      %v4400 = vpack.c.b16 %v4397, %v4396
      %v4401 = vpack.c.b16 %v4399, %v4398
      %v4405 = vsel %vm1553, %v4391, 0
      %4407 = vmatprep.subr.bf16.mxu0 0
      %4408 = vmatpush1.bf16.msra.mxu0 %v4400
      %4409 = vmatprep.subr.bf16.mxu0 0
      %4410 = vmatpush1.bf16.msra.mxu0 %v4401
      %4411 = vmatprep.subr.bf16.mxu0 0
      %4412 = vmatpush1.bf16.msra.mxu0 0
      %4413 = vmatprep.subr.bf16.mxu0 0
      %4414 = vmatpush1.bf16.msra.mxu0 0
      %4415 = vmatprep.subr.bf16.mxu0 0
      %4416 = vmatpush1.bf16.msra.mxu0 0
      %4417 = vmatprep.subr.bf16.mxu0 0
      %4418 = vmatpush1.bf16.msra.mxu0 0
      %4419 = vmatprep.subr.bf16.mxu0 0
      %4420 = vmatpush1.bf16.msra.mxu0 0
      %4421 = vmatprep.subr.bf16.mxu0 0
      %4422 = vmatpush1.bf16.msra.mxu0 0
      %4423 = vmatprep.subr.bf16.mxu0 0
      %4424 = vmatpush1.bf16.msra.mxu0 0
      %4425 = vmatprep.subr.bf16.mxu0 0
      %4426 = vmatpush1.bf16.msra.mxu0 0
      %4427 = vmatprep.subr.bf16.mxu0 0
      %4428 = vmatpush1.bf16.msra.mxu0 0
      %4429 = vmatprep.subr.bf16.mxu0 0
      %4430 = vmatpush1.bf16.msra.mxu0 0
      %4431 = vmatprep.subr.bf16.mxu0 0
      %4432 = vmatpush1.bf16.msra.mxu0 0
      %4433 = vmatprep.subr.bf16.mxu0 0
      %4434 = vmatpush1.bf16.msra.mxu0 0
      %4435 = vmatprep.subr.bf16.mxu0 0
      %4436 = vmatpush1.bf16.msra.mxu0 0
      %4437 = vmatprep.subr.bf16.mxu0 0
      %4438 = vmatpush1.bf16.msra.mxu0 0
      %4439 = vmatprep.mubr.bf16.mxu0 0
      %4440 = vmatmul.mubr.bf16.gmra.mrb[0].mxu0 %v3078
      %v4441 = vpop.f32.mrb[0].mxu0
      %v4442 = vadd.f32 0.0, %v4441
      %v4443 = vpop.f32.mrb[0].mxu0
      %v4444 = vpop.f32.mrb[0].mxu0
      %v4445 = vadd.f32 0.0, %v4444
      %v4446 = vpop.f32.mrb[0].mxu0
      %4447 = vmatprep.mubr.bf16.mxu0 0
      %4448 = vmatmul.mubr.bf16.gmra.mrb[0].mxu0 %v3081
      %v4449 = vpop.f32.mrb[0].mxu0
      %v4450 = vadd.f32 0.0, %v4449
      %v4451 = vpop.f32.mrb[0].mxu0
      %v4452 = vpop.f32.mrb[0].mxu0
      %v4453 = vadd.f32 0.0, %v4452
      %v4454 = vpop.f32.mrb[0].mxu0
      %4455 = vmatprep.mubr.bf16.mxu0 0
      %4456 = vmatmul.mubr.bf16.gmra.mrb[0].mxu0 %v3084
      %v4457 = vpop.f32.mrb[0].mxu0
      %v4458 = vadd.f32 0.0, %v4457
      %v4459 = vpop.f32.mrb[0].mxu0
      %v4460 = vpop.f32.mrb[0].mxu0
      %v4461 = vadd.f32 0.0, %v4460
      %v4462 = vpop.f32.mrb[0].mxu0
      %4463 = vmatprep.mubr.bf16.mxu0 0
      %4464 = vmatmul.mubr.bf16.gmra.mrb[0].mxu0 %v3087
      %v4465 = vpop.f32.mrb[0].mxu0
      %v4466 = vadd.f32 0.0, %v4465
      %v4467 = vpop.f32.mrb[0].mxu0
      %v4468 = vpop.f32.mrb[0].mxu0
      %v4469 = vadd.f32 0.0, %v4468
      %v4470 = vpop.f32.mrb[0].mxu0
      %4471 = vmatprep.mubr.bf16.mxu0 0
      %4472 = vmatmul.mubr.bf16.gmra.mrb[0].mxu0 %v3090
      %v4473 = vpop.f32.mrb[0].mxu0
      %v4474 = vadd.f32 0.0, %v4473
      %v4475 = vpop.f32.mrb[0].mxu0
      %v4476 = vpop.f32.mrb[0].mxu0
      %v4477 = vadd.f32 0.0, %v4476
      %v4478 = vpop.f32.mrb[0].mxu0
      %4479 = vmatprep.mubr.bf16.mxu0 0
      %4480 = vmatmul.mubr.bf16.gmra.mrb[0].mxu0 %v3093
      %v4481 = vpop.f32.mrb[0].mxu0
      %v4482 = vadd.f32 0.0, %v4481
      %v4483 = vpop.f32.mrb[0].mxu0
      %v4484 = vpop.f32.mrb[0].mxu0
      %v4485 = vadd.f32 0.0, %v4484
      %v4486 = vpop.f32.mrb[0].mxu0
      %4487 = vmatprep.mubr.bf16.mxu0 0
      %4488 = vmatmul.mubr.bf16.gmra.mrb[0].mxu0 %v3096
      %v4489 = vpop.f32.mrb[0].mxu0
      %v4490 = vadd.f32 0.0, %v4489
      %v4491 = vpop.f32.mrb[0].mxu0
      %v4492 = vpop.f32.mrb[0].mxu0
      %v4493 = vadd.f32 0.0, %v4492
      %v4494 = vpop.f32.mrb[0].mxu0
      %4495 = vmatprep.mubr.bf16.mxu0 0
      %4496 = vmatmul.mubr.bf16.gmra.mrb[0].mxu0 %v3099
      %v4497 = vpop.f32.mrb[0].mxu0
      %v4498 = vadd.f32 0.0, %v4497
      %v4499 = vpop.f32.mrb[0].mxu0
      %v4500 = vpop.f32.mrb[0].mxu0
      %v4501 = vadd.f32 0.0, %v4500
      %v4502 = vpop.f32.mrb[0].mxu0
      %4503 = vmatprep.mubr.bf16.mxu0 0
      %4504 = vmatmul.mubr.bf16.gmra.mrb[0].mxu0 %v3102
      %v4505 = vpop.f32.mrb[0].mxu0
      %v4506 = vadd.f32 0.0, %v4505
      %v4507 = vpop.f32.mrb[0].mxu0
      %v4508 = vpop.f32.mrb[0].mxu0
      %v4509 = vadd.f32 0.0, %v4508
      %v4510 = vpop.f32.mrb[0].mxu0
      %4511 = vmatprep.mubr.bf16.mxu0 0
      %4512 = vmatmul.mubr.bf16.gmra.mrb[0].mxu0 %v3105
      %v4513 = vpop.f32.mrb[0].mxu0
      %v4514 = vadd.f32 0.0, %v4513
      %v4515 = vpop.f32.mrb[0].mxu0
      %v4516 = vpop.f32.mrb[0].mxu0
      %v4517 = vadd.f32 0.0, %v4516
      %v4518 = vpop.f32.mrb[0].mxu0
      %4519 = vmatprep.mubr.bf16.mxu0 0
      %4520 = vmatmul.mubr.bf16.gmra.mrb[0].mxu0 %v3108
      %v4521 = vpop.f32.mrb[0].mxu0
      %v4522 = vadd.f32 0.0, %v4521
      %v4523 = vpop.f32.mrb[0].mxu0
      %v4524 = vpop.f32.mrb[0].mxu0
      %v4525 = vadd.f32 0.0, %v4524
      %v4526 = vpop.f32.mrb[0].mxu0
      %4527 = vmatprep.mubr.bf16.mxu0 0
      %4528 = vmatmul.mubr.bf16.gmra.mrb[0].mxu0 %v3111
      %v4529 = vpop.f32.mrb[0].mxu0
      %v4530 = vadd.f32 0.0, %v4529
      %v4531 = vpop.f32.mrb[0].mxu0
      %v4532 = vpop.f32.mrb[0].mxu0
      %v4533 = vadd.f32 0.0, %v4532
      %v4534 = vpop.f32.mrb[0].mxu0
      %4535 = vmatprep.mubr.bf16.mxu0 0
      %4536 = vmatmul.mubr.bf16.gmra.mrb[0].mxu0 %v3114
      %v4537 = vpop.f32.mrb[0].mxu0
      %v4538 = vadd.f32 0.0, %v4537
      %v4539 = vpop.f32.mrb[0].mxu0
      %v4540 = vpop.f32.mrb[0].mxu0
      %v4541 = vadd.f32 0.0, %v4540
      %v4542 = vpop.f32.mrb[0].mxu0
      %4543 = vmatprep.mubr.bf16.mxu0 0
      %4544 = vmatmul.mubr.bf16.gmra.mrb[0].mxu0 %v3117
      %v4545 = vpop.f32.mrb[0].mxu0
      %v4546 = vadd.f32 0.0, %v4545
      %v4547 = vpop.f32.mrb[0].mxu0
      %v4548 = vpop.f32.mrb[0].mxu0
      %v4549 = vadd.f32 0.0, %v4548
      %v4550 = vpop.f32.mrb[0].mxu0
      %4551 = vmatprep.mubr.bf16.mxu0 0
      %4552 = vmatmul.mubr.bf16.gmra.mrb[0].mxu0 %v3761
      %v4553 = vpop.f32.mrb[0].mxu0
      %v4554 = vadd.f32 0.0, %v4553
      %v4555 = vpop.f32.mrb[0].mxu0
      %v4556 = vpop.f32.mrb[0].mxu0
      %v4557 = vadd.f32 0.0, %v4556
      %v4558 = vpop.f32.mrb[0].mxu0
      %4559 = vmatprep.mubr.bf16.mxu0 0
      %4560 = vmatmul.mubr.bf16.gmra.mrb[0].mxu0 %v4405
      %v4561 = vpop.f32.mrb[0].mxu0
      %v4562 = vadd.f32 0.0, %v4561
      %v4563 = vpop.f32.mrb[0].mxu0
      %v4564 = vpop.f32.mrb[0].mxu0
      %v4565 = vadd.f32 0.0, %v4564
      %v4566 = vpop.f32.mrb[0].mxu0
      %4567 = vdwg.mxu0
      %v4568 = vadd.f32 %v4352, %v4442
      %v4569 = vadd.f32 %v4353, %v4445
      %v4570 = vadd.f32 %v4354, %v4450
      %v4571 = vadd.f32 %v4355, %v4453
      %v4572 = vadd.f32 %v4356, %v4458
      %v4573 = vadd.f32 %v4357, %v4461
      %v4574 = vadd.f32 %v4358, %v4466
      %v4575 = vadd.f32 %v4359, %v4469
      %v4576 = vadd.f32 %v4360, %v4474
      %v4577 = vadd.f32 %v4361, %v4477
      %v4578 = vadd.f32 %v4362, %v4482
      %v4579 = vadd.f32 %v4363, %v4485
      %v4580 = vadd.f32 %v4364, %v4490
      %v4581 = vadd.f32 %v4365, %v4493
      %v4582 = vadd.f32 %v4366, %v4498
      %v4583 = vadd.f32 %v4367, %v4501
      %v4584 = vadd.f32 %v4368, %v4506
      %v4585 = vadd.f32 %v4369, %v4509
      %v4586 = vadd.f32 %v4370, %v4514
      %v4587 = vadd.f32 %v4371, %v4517
      %v4588 = vadd.f32 %v4372, %v4522
      %v4589 = vadd.f32 %v4373, %v4525
      %v4590 = vadd.f32 %v4374, %v4530
      %v4591 = vadd.f32 %v4375, %v4533
      %v4592 = vadd.f32 %v4376, %v4538
      %v4593 = vadd.f32 %v4377, %v4541
      %v4594 = vadd.f32 %v4378, %v4546
      %v4595 = vadd.f32 %v4379, %v4549
      %v4596 = vadd.f32 %v4380, %v4554
      %v4597 = vadd.f32 %v4381, %v4557
      %v4598 = vadd.f32 %v4382, %v4562
      %v4599 = vadd.f32 %v4383, %v4565
      %v4600 = vld [vmem:[%s7] sm:$0x1]
      %v4601 = vld [vmem:[%s8] sm:$0x1]
      %4602 = vmatprep.subr.mxu0 0.0
      %4603 = vmatpush1.msra.mxu0 %v4568
      %4604 = vmatprep.subr.mxu0 0.0
      %4605 = vmatpush1.msra.mxu0 %v4569
      %4606 = vmatprep.subr.mxu0 0.0
      %4607 = vmatpush1.msra.mxu0 %v4570
      %4608 = vmatprep.subr.mxu0 0.0
      %4609 = vmatpush1.msra.mxu0 %v4571
      %4610 = vmatprep.subr.mxu0 0.0
      %4611 = vmatpush1.msra.mxu0 %v4572
      %4612 = vmatprep.subr.mxu0 0.0
      %4613 = vmatpush1.msra.mxu0 %v4573
      %4614 = vmatprep.subr.mxu0 0.0
      %4615 = vmatpush1.msra.mxu0 %v4574
      %4616 = vmatprep.subr.mxu0 0.0
      %4617 = vmatpush1.msra.mxu0 %v4575
      %4618 = vmatprep.subr.mxu0 0.0
      %4619 = vmatpush1.msra.mxu0 %v4576
      %4620 = vmatprep.subr.mxu0 0.0
      %4621 = vmatpush1.msra.mxu0 %v4577
      %4622 = vmatprep.subr.mxu0 0.0
      %4623 = vmatpush1.msra.mxu0 %v4578
      %4624 = vmatprep.subr.mxu0 0.0
      %4625 = vmatpush1.msra.mxu0 %v4579
      %4626 = vmatprep.subr.mxu0 0.0
      %4627 = vmatpush1.msra.mxu0 %v4580
      %4628 = vmatprep.subr.mxu0 0.0
      %4629 = vmatpush1.msra.mxu0 %v4581
      %4630 = vmatprep.subr.mxu0 0.0
      %4631 = vmatpush1.msra.mxu0 %v4582
      %4632 = vmatprep.subr.mxu0 0.0
      %4633 = vmatpush1.msra.mxu0 %v4583
      %4634 = vmatprep.subr.mxu0 0.0
      %4635 = vmatpush1.msra.mxu0 %v4584
      %4636 = vmatprep.subr.mxu0 0.0
      %4637 = vmatpush1.msra.mxu0 %v4585
      %4638 = vmatprep.subr.mxu0 0.0
      %4639 = vmatpush1.msra.mxu0 %v4586
      %4640 = vmatprep.subr.mxu0 0.0
      %4641 = vmatpush1.msra.mxu0 %v4587
      %4642 = vmatprep.subr.mxu0 0.0
      %4643 = vmatpush1.msra.mxu0 %v4588
      %4644 = vmatprep.subr.mxu0 0.0
      %4645 = vmatpush1.msra.mxu0 %v4589
      %4646 = vmatprep.subr.mxu0 0.0
      %4647 = vmatpush1.msra.mxu0 %v4590
      %4648 = vmatprep.subr.mxu0 0.0
      %4649 = vmatpush1.msra.mxu0 %v4591
      %4650 = vmatprep.subr.mxu0 0.0
      %4651 = vmatpush1.msra.mxu0 %v4592
      %4652 = vmatprep.subr.mxu0 0.0
      %4653 = vmatpush1.msra.mxu0 %v4593
      %4654 = vmatprep.subr.mxu0 0.0
      %4655 = vmatpush1.msra.mxu0 %v4594
      %4656 = vmatprep.subr.mxu0 0.0
      %4657 = vmatpush1.msra.mxu0 %v4595
      %4658 = vmatprep.subr.mxu0 0.0
      %4659 = vmatpush1.msra.mxu0 %v4596
      %4660 = vmatprep.subr.mxu0 0.0
      %4661 = vmatpush1.msra.mxu0 %v4597
      %4662 = vmatprep.subr.mxu0 0.0
      %4663 = vmatpush1.msra.mxu0 %v4598
      %4664 = vmatprep.subr.mxu0 0.0
      %4665 = vmatpush1.msra.mxu0 %v4599
      %4666 = vmatprep.mubr.f32.mxu0 1.0
      %4667 = vmatmul.mubr.f32.gmra.mrb[0].mxu0 1.0
      %v4668 = vpop.f32.mrb[0].mxu0
      %v4669 = vadd.f32 0.0, %v4668
      %v4670 = vpop.f32.mrb[0].mxu0
      %4671 = vdwg.mxu0
      %v4672 = vmul.f32 %v4568, %v4568
      %v4673 = vmul.f32 %v4569, %v4569
      %v4674 = vmul.f32 %v4570, %v4570
      %v4675 = vmul.f32 %v4571, %v4571
      %v4676 = vmul.f32 %v4572, %v4572
      %v4677 = vmul.f32 %v4573, %v4573
      %v4678 = vmul.f32 %v4574, %v4574
      %v4679 = vmul.f32 %v4575, %v4575
      %v4680 = vmul.f32 %v4576, %v4576
      %v4681 = vmul.f32 %v4577, %v4577
      %v4682 = vmul.f32 %v4578, %v4578
      %v4683 = vmul.f32 %v4579, %v4579
      %v4684 = vmul.f32 %v4580, %v4580
      %v4685 = vmul.f32 %v4581, %v4581
      %v4686 = vmul.f32 %v4582, %v4582
      %v4687 = vmul.f32 %v4583, %v4583
      %v4688 = vmul.f32 %v4584, %v4584
      %v4689 = vmul.f32 %v4585, %v4585
      %v4690 = vmul.f32 %v4586, %v4586
      %v4691 = vmul.f32 %v4587, %v4587
      %v4692 = vmul.f32 %v4588, %v4588
      %v4693 = vmul.f32 %v4589, %v4589
      %v4694 = vmul.f32 %v4590, %v4590
      %v4695 = vmul.f32 %v4591, %v4591
      %v4696 = vmul.f32 %v4592, %v4592
      %v4697 = vmul.f32 %v4593, %v4593
      %v4698 = vmul.f32 %v4594, %v4594
      %v4699 = vmul.f32 %v4595, %v4595
      %v4700 = vmul.f32 %v4596, %v4596
      %v4701 = vmul.f32 %v4597, %v4597
      %v4702 = vmul.f32 %v4598, %v4598
      %v4703 = vmul.f32 %v4599, %v4599
      %4704 = vmatprep.subr.mxu0 0.0
      %4705 = vmatpush1.msra.mxu0 %v4672
      %4706 = vmatprep.subr.mxu0 0.0
      %4707 = vmatpush1.msra.mxu0 %v4673
      %4708 = vmatprep.subr.mxu0 0.0
      %4709 = vmatpush1.msra.mxu0 %v4674
      %4710 = vmatprep.subr.mxu0 0.0
      %4711 = vmatpush1.msra.mxu0 %v4675
      %4712 = vmatprep.subr.mxu0 0.0
      %4713 = vmatpush1.msra.mxu0 %v4676
      %4714 = vmatprep.subr.mxu0 0.0
      %4715 = vmatpush1.msra.mxu0 %v4677
      %4716 = vmatprep.subr.mxu0 0.0
      %4717 = vmatpush1.msra.mxu0 %v4678
      %4718 = vmatprep.subr.mxu0 0.0
      %4719 = vmatpush1.msra.mxu0 %v4679
      %4720 = vmatprep.subr.mxu0 0.0
      %4721 = vmatpush1.msra.mxu0 %v4680
      %4722 = vmatprep.subr.mxu0 0.0
      %4723 = vmatpush1.msra.mxu0 %v4681
      %4724 = vmatprep.subr.mxu0 0.0
      %4725 = vmatpush1.msra.mxu0 %v4682
      %4726 = vmatprep.subr.mxu0 0.0
      %4727 = vmatpush1.msra.mxu0 %v4683
      %4728 = vmatprep.subr.mxu0 0.0
      %4729 = vmatpush1.msra.mxu0 %v4684
      %4730 = vmatprep.subr.mxu0 0.0
      %4731 = vmatpush1.msra.mxu0 %v4685
      %4732 = vmatprep.subr.mxu0 0.0
      %4733 = vmatpush1.msra.mxu0 %v4686
      %4734 = vmatprep.subr.mxu0 0.0
      %4735 = vmatpush1.msra.mxu0 %v4687
      %4736 = vmatprep.subr.mxu0 0.0
      %4737 = vmatpush1.msra.mxu0 %v4688
      %4738 = vmatprep.subr.mxu0 0.0
      %4739 = vmatpush1.msra.mxu0 %v4689
      %4740 = vmatprep.subr.mxu0 0.0
      %4741 = vmatpush1.msra.mxu0 %v4690
      %4742 = vmatprep.subr.mxu0 0.0
      %4743 = vmatpush1.msra.mxu0 %v4691
      %4744 = vmatprep.subr.mxu0 0.0
      %4745 = vmatpush1.msra.mxu0 %v4692
      %4746 = vmatprep.subr.mxu0 0.0
      %4747 = vmatpush1.msra.mxu0 %v4693
      %4748 = vmatprep.subr.mxu0 0.0
      %4749 = vmatpush1.msra.mxu0 %v4694
      %4750 = vmatprep.subr.mxu0 0.0
      %4751 = vmatpush1.msra.mxu0 %v4695
      %4752 = vmatprep.subr.mxu0 0.0
      %4753 = vmatpush1.msra.mxu0 %v4696
      %4754 = vmatprep.subr.mxu0 0.0
      %4755 = vmatpush1.msra.mxu0 %v4697
      %4756 = vmatprep.subr.mxu0 0.0
      %4757 = vmatpush1.msra.mxu0 %v4698
      %4758 = vmatprep.subr.mxu0 0.0
      %4759 = vmatpush1.msra.mxu0 %v4699
      %4760 = vmatprep.subr.mxu0 0.0
      %4761 = vmatpush1.msra.mxu0 %v4700
      %4762 = vmatprep.subr.mxu0 0.0
      %4763 = vmatpush1.msra.mxu0 %v4701
      %4764 = vmatprep.subr.mxu0 0.0
      %4765 = vmatpush1.msra.mxu0 %v4702
      %4766 = vmatprep.subr.mxu0 0.0
      %4767 = vmatpush1.msra.mxu0 %v4703
      %4768 = vmatprep.mubr.f32.mxu0 1.0
      %4769 = vmatmul.mubr.f32.gmra.mrb[0].mxu0 1.0
      %v4770 = vpop.f32.mrb[0].mxu0
      %v4771 = vadd.f32 0.0, %v4770
      %v4772 = vpop.f32.mrb[0].mxu0
      %4773 = vdwg.mxu0
      %v4775 = vsel %vm1553, %v4669, 0
      %4777 = vmatprep.subr.mxu0 0.0
      %4778 = vmatpush1.msra.mxu0 %v489
      %4779 = vmatprep.subr.mxu0 0.0
      %4780 = vmatpush1.msra.mxu0 %v490
      %4781 = vmatprep.subr.mxu0 0.0
      %4782 = vmatpush1.msra.mxu0 %v491
      %4783 = vmatprep.subr.mxu0 0.0
      %4784 = vmatpush1.msra.mxu0 %v492
      %4785 = vmatprep.subr.mxu0 0.0
      %4786 = vmatpush1.msra.mxu0 0.0
      %4787 = vmatprep.subr.mxu0 0.0
      %4788 = vmatpush1.msra.mxu0 0.0
      %4789 = vmatprep.subr.mxu0 0.0
      %4790 = vmatpush1.msra.mxu0 0.0
      %4791 = vmatprep.subr.mxu0 0.0
      %4792 = vmatpush1.msra.mxu0 0.0
      %4793 = vmatprep.subr.mxu0 0.0
      %4794 = vmatpush1.msra.mxu0 0.0
      %4795 = vmatprep.subr.mxu0 0.0
      %4796 = vmatpush1.msra.mxu0 0.0
      %4797 = vmatprep.subr.mxu0 0.0
      %4798 = vmatpush1.msra.mxu0 0.0
      %4799 = vmatprep.subr.mxu0 0.0
      %4800 = vmatpush1.msra.mxu0 0.0
      %4801 = vmatprep.subr.mxu0 0.0
      %4802 = vmatpush1.msra.mxu0 0.0
      %4803 = vmatprep.subr.mxu0 0.0
      %4804 = vmatpush1.msra.mxu0 0.0
      %4805 = vmatprep.subr.mxu0 0.0
      %4806 = vmatpush1.msra.mxu0 0.0
      %4807 = vmatprep.subr.mxu0 0.0
      %4808 = vmatpush1.msra.mxu0 0.0
      %4809 = vmatprep.subr.mxu0 0.0
      %4810 = vmatpush1.msra.mxu0 0.0
      %4811 = vmatprep.subr.mxu0 0.0
      %4812 = vmatpush1.msra.mxu0 0.0
      %4813 = vmatprep.subr.mxu0 0.0
      %4814 = vmatpush1.msra.mxu0 0.0
      %4815 = vmatprep.subr.mxu0 0.0
      %4816 = vmatpush1.msra.mxu0 0.0
      %4817 = vmatprep.subr.mxu0 0.0
      %4818 = vmatpush1.msra.mxu0 0.0
      %4819 = vmatprep.subr.mxu0 0.0
      %4820 = vmatpush1.msra.mxu0 0.0
      %4821 = vmatprep.subr.mxu0 0.0
      %4822 = vmatpush1.msra.mxu0 0.0
      %4823 = vmatprep.subr.mxu0 0.0
      %4824 = vmatpush1.msra.mxu0 0.0
      %4825 = vmatprep.subr.mxu0 0.0
      %4826 = vmatpush1.msra.mxu0 0.0
      %4827 = vmatprep.subr.mxu0 0.0
      %4828 = vmatpush1.msra.mxu0 0.0
      %4829 = vmatprep.subr.mxu0 0.0
      %4830 = vmatpush1.msra.mxu0 0.0
      %4831 = vmatprep.subr.mxu0 0.0
      %4832 = vmatpush1.msra.mxu0 0.0
      %4833 = vmatprep.subr.mxu0 0.0
      %4834 = vmatpush1.msra.mxu0 0.0
      %4835 = vmatprep.subr.mxu0 0.0
      %4836 = vmatpush1.msra.mxu0 0.0
      %4837 = vmatprep.subr.mxu0 0.0
      %4838 = vmatpush1.msra.mxu0 0.0
      %4839 = vmatprep.subr.mxu0 0.0
      %4840 = vmatpush1.msra.mxu0 0.0
      %4841 = vmatprep.mubr.f32.mxu0 0.0
      %4842 = vmatmul.mubr.f32.gmra.mrb[0].mxu0 %v4775
      %v4843 = vpop.f32.mrb[0].mxu0
      %v4844 = vadd.f32 0.0, %v4843
      %v4845 = vpop.f32.mrb[0].mxu0
      %4846 = vdwg.mxu0
      %v4848 = vsel %vm1553, %v4771, 0
      %4850 = vmatprep.subr.mxu0 0.0
      %4851 = vmatpush1.msra.mxu0 %v489
      %4852 = vmatprep.subr.mxu0 0.0
      %4853 = vmatpush1.msra.mxu0 %v490
      %4854 = vmatprep.subr.mxu0 0.0
      %4855 = vmatpush1.msra.mxu0 %v491
      %4856 = vmatprep.subr.mxu0 0.0
      %4857 = vmatpush1.msra.mxu0 %v492
      %4858 = vmatprep.subr.mxu0 0.0
      %4859 = vmatpush1.msra.mxu0 0.0
      %4860 = vmatprep.subr.mxu0 0.0
      %4861 = vmatpush1.msra.mxu0 0.0
      %4862 = vmatprep.subr.mxu0 0.0
      %4863 = vmatpush1.msra.mxu0 0.0
      %4864 = vmatprep.subr.mxu0 0.0
      %4865 = vmatpush1.msra.mxu0 0.0
      %4866 = vmatprep.subr.mxu0 0.0
      %4867 = vmatpush1.msra.mxu0 0.0
      %4868 = vmatprep.subr.mxu0 0.0
      %4869 = vmatpush1.msra.mxu0 0.0
      %4870 = vmatprep.subr.mxu0 0.0
      %4871 = vmatpush1.msra.mxu0 0.0
      %4872 = vmatprep.subr.mxu0 0.0
      %4873 = vmatpush1.msra.mxu0 0.0
      %4874 = vmatprep.subr.mxu0 0.0
      %4875 = vmatpush1.msra.mxu0 0.0
      %4876 = vmatprep.subr.mxu0 0.0
      %4877 = vmatpush1.msra.mxu0 0.0
      %4878 = vmatprep.subr.mxu0 0.0
      %4879 = vmatpush1.msra.mxu0 0.0
      %4880 = vmatprep.subr.mxu0 0.0
      %4881 = vmatpush1.msra.mxu0 0.0
      %4882 = vmatprep.subr.mxu0 0.0
      %4883 = vmatpush1.msra.mxu0 0.0
      %4884 = vmatprep.subr.mxu0 0.0
      %4885 = vmatpush1.msra.mxu0 0.0
      %4886 = vmatprep.subr.mxu0 0.0
      %4887 = vmatpush1.msra.mxu0 0.0
      %4888 = vmatprep.subr.mxu0 0.0
      %4889 = vmatpush1.msra.mxu0 0.0
      %4890 = vmatprep.subr.mxu0 0.0
      %4891 = vmatpush1.msra.mxu0 0.0
      %4892 = vmatprep.subr.mxu0 0.0
      %4893 = vmatpush1.msra.mxu0 0.0
      %4894 = vmatprep.subr.mxu0 0.0
      %4895 = vmatpush1.msra.mxu0 0.0
      %4896 = vmatprep.subr.mxu0 0.0
      %4897 = vmatpush1.msra.mxu0 0.0
      %4898 = vmatprep.subr.mxu0 0.0
      %4899 = vmatpush1.msra.mxu0 0.0
      %4900 = vmatprep.subr.mxu0 0.0
      %4901 = vmatpush1.msra.mxu0 0.0
      %4902 = vmatprep.subr.mxu0 0.0
      %4903 = vmatpush1.msra.mxu0 0.0
      %4904 = vmatprep.subr.mxu0 0.0
      %4905 = vmatpush1.msra.mxu0 0.0
      %4906 = vmatprep.subr.mxu0 0.0
      %4907 = vmatpush1.msra.mxu0 0.0
      %4908 = vmatprep.subr.mxu0 0.0
      %4909 = vmatpush1.msra.mxu0 0.0
      %4910 = vmatprep.subr.mxu0 0.0
      %4911 = vmatpush1.msra.mxu0 0.0
      %4912 = vmatprep.subr.mxu0 0.0
      %4913 = vmatpush1.msra.mxu0 0.0
      %4914 = vmatprep.mubr.f32.mxu0 0.0
      %4915 = vmatmul.mubr.f32.gmra.mrb[0].mxu0 %v4848
      %v4916 = vpop.f32.mrb[0].mxu0
      %v4917 = vadd.f32 0.0, %v4916
      %v4918 = vpop.f32.mrb[0].mxu0
      %4919 = vdwg.mxu0
      %v4920 = vmul.f32 %v4844, %v4844
      %v4921 = vsub.f32 %v4917, %v4920
      %v4922 = vadd.f32 %v4921, 1e-05
      %v4923 = vrsqrt.pop %v4922
      %v4924 = vmul.f32 %v4600, %v4923
      %v4925 = vmul.f32 %v4844, %v4924
      %v4926 = vsub.f32 %v4601, %v4925
      %v4928 = vlaneseq
      %v4929 = vshrl.u32 %v4928, 7
      %v4930 = vsub.s32 0, %v4929
      %v4931 = vrot.slane %v4924, %v4930
      %v4933 = vmul.f32 %v4568, %v4931
      %v4934 = vmul.f32 %v4569, %v4931
      %v4935 = vmul.f32 %v4570, %v4931
      %v4936 = vmul.f32 %v4571, %v4931
      %v4937 = vmul.f32 %v4572, %v4931
      %v4938 = vmul.f32 %v4573, %v4931
      %v4939 = vmul.f32 %v4574, %v4931
      %v4940 = vmul.f32 %v4575, %v4931
      %v4941 = vmul.f32 %v4576, %v4931
      %v4942 = vmul.f32 %v4577, %v4931
      %v4943 = vmul.f32 %v4578, %v4931
      %v4944 = vmul.f32 %v4579, %v4931
      %v4945 = vmul.f32 %v4580, %v4931
      %v4946 = vmul.f32 %v4581, %v4931
      %v4947 = vmul.f32 %v4582, %v4931
      %v4948 = vmul.f32 %v4583, %v4931
      %v4949 = vmul.f32 %v4584, %v4931
      %v4950 = vmul.f32 %v4585, %v4931
      %v4951 = vmul.f32 %v4586, %v4931
      %v4952 = vmul.f32 %v4587, %v4931
      %v4953 = vmul.f32 %v4588, %v4931
      %v4954 = vmul.f32 %v4589, %v4931
      %v4955 = vmul.f32 %v4590, %v4931
      %v4956 = vmul.f32 %v4591, %v4931
      %v4957 = vmul.f32 %v4592, %v4931
      %v4958 = vmul.f32 %v4593, %v4931
      %v4959 = vmul.f32 %v4594, %v4931
      %v4960 = vmul.f32 %v4595, %v4931
      %v4961 = vmul.f32 %v4596, %v4931
      %v4962 = vmul.f32 %v4597, %v4931
      %v4963 = vmul.f32 %v4598, %v4931
      %v4964 = vmul.f32 %v4599, %v4931
      %v4966 = vlaneseq
      %v4967 = vshrl.u32 %v4966, 7
      %v4968 = vsub.s32 0, %v4967
      %v4969 = vrot.slane %v4926, %v4968
      %v4971 = vadd.f32 %v4933, %v4969
      %v4972 = vadd.f32 %v4934, %v4969
      %v4973 = vadd.f32 %v4935, %v4969
      %v4974 = vadd.f32 %v4936, %v4969
      %v4975 = vadd.f32 %v4937, %v4969
      %v4976 = vadd.f32 %v4938, %v4969
      %v4977 = vadd.f32 %v4939, %v4969
      %v4978 = vadd.f32 %v4940, %v4969
      %v4979 = vadd.f32 %v4941, %v4969
      %v4980 = vadd.f32 %v4942, %v4969
      %v4981 = vadd.f32 %v4943, %v4969
      %v4982 = vadd.f32 %v4944, %v4969
      %v4983 = vadd.f32 %v4945, %v4969
      %v4984 = vadd.f32 %v4946, %v4969
      %v4985 = vadd.f32 %v4947, %v4969
      %v4986 = vadd.f32 %v4948, %v4969
      %v4987 = vadd.f32 %v4949, %v4969
      %v4988 = vadd.f32 %v4950, %v4969
      %v4989 = vadd.f32 %v4951, %v4969
      %v4990 = vadd.f32 %v4952, %v4969
      %v4991 = vadd.f32 %v4953, %v4969
      %v4992 = vadd.f32 %v4954, %v4969
      %v4993 = vadd.f32 %v4955, %v4969
      %v4994 = vadd.f32 %v4956, %v4969
      %v4995 = vadd.f32 %v4957, %v4969
      %v4996 = vadd.f32 %v4958, %v4969
      %v4997 = vadd.f32 %v4959, %v4969
      %v4998 = vadd.f32 %v4960, %v4969
      %v4999 = vadd.f32 %v4961, %v4969
      %v5000 = vadd.f32 %v4962, %v4969
      %v5001 = vadd.f32 %v4963, %v4969
      %v5002 = vadd.f32 %v4964, %v4969
      %v5003 = vld [vmem:[%s482] sm:$0xf]
      %v5004 = vld [vmem:[%s482 + $0x4] sm:$0xf]
      %v5005 = vld [vmem:[%s482 + $0x8] sm:$0xf]
      %v5006 = vld [vmem:[%s482 + $0xc] sm:$0xf]
      %v5007 = vld [vmem:[%s482 + $0x10] sm:$0xf]
      %v5008 = vld [vmem:[%s482 + $0x14] sm:$0xf]
      %v5009 = vld [vmem:[%s482 + $0x18] sm:$0xf]
      %v5010 = vld [vmem:[%s482 + $0x1c] sm:$0xf]
      %v5011 = vld [vmem:[%s482 + $0x20] sm:$0xf]
      %v5012 = vld [vmem:[%s482 + $0x24] sm:$0xf]
      %v5013 = vld [vmem:[%s482 + $0x28] sm:$0xf]
      %v5014 = vld [vmem:[%s482 + $0x2c] sm:$0xf]
      %v5015 = vld [vmem:[%s482 + $0x30] sm:$0xf]
      %v5016 = vld [vmem:[%s482 + $0x34] sm:$0xf]
      %v5017 = vld [vmem:[%s482 + $0x38] sm:$0xf]
      %v5018 = vld [vmem:[%s482 + $0x3c] sm:$0xf]
      %v5019 = vld [vmem:[%s482 + $0x40] sm:$0xf]
      %v5020 = vld [vmem:[%s482 + $0x44] sm:$0xf]
      %v5021 = vld [vmem:[%s482 + $0x48] sm:$0xf]
      %v5022 = vld [vmem:[%s482 + $0x4c] sm:$0xf]
      %v5023 = vld [vmem:[%s482 + $0x50] sm:$0xf]
      %v5024 = vld [vmem:[%s482 + $0x54] sm:$0xf]
      %v5025 = vld [vmem:[%s482 + $0x58] sm:$0xf]
      %v5026 = vld [vmem:[%s482 + $0x5c] sm:$0xf]
      %v5027 = vld [vmem:[%s482 + $0x60] sm:$0xf]
      %v5028 = vld [vmem:[%s482 + $0x64] sm:$0xf]
      %v5029 = vld [vmem:[%s482 + $0x68] sm:$0xf]
      %v5030 = vld [vmem:[%s482 + $0x6c] sm:$0xf]
      %v5031 = vld [vmem:[%s482 + $0x70] sm:$0xf]
      %v5032 = vld [vmem:[%s482 + $0x74] sm:$0xf]
      %v5033 = vld [vmem:[%s482 + $0x78] sm:$0xf]
      %v5034 = vld [vmem:[%s482 + $0x7c] sm:$0xf]
      %v5035 = vld [vmem:[%s4] sm:$0xf]
      %v5036 = vld [vmem:[%s4 + $0x4] sm:$0xf]
      %v5069 = vunpack.c.l.b16 %v5003
      %v5070 = vunpack.c.l.b16 %v5004
      %v5071 = vunpack.c.l.b16 %v5005
      %v5072 = vunpack.c.l.b16 %v5006
      %v5073 = vunpack.c.l.b16 %v5007
      %v5074 = vunpack.c.l.b16 %v5008
      %v5075 = vunpack.c.l.b16 %v5009
      %v5076 = vunpack.c.l.b16 %v5010
      %v5077 = vunpack.c.l.b16 %v5011
      %v5078 = vunpack.c.l.b16 %v5012
      %v5079 = vunpack.c.l.b16 %v5013
      %v5080 = vunpack.c.l.b16 %v5014
      %v5081 = vunpack.c.l.b16 %v5015
      %v5082 = vunpack.c.l.b16 %v5016
      %v5083 = vunpack.c.l.b16 %v5017
      %v5084 = vunpack.c.l.b16 %v5018
      %v5085 = vunpack.c.l.b16 %v5019
      %v5086 = vunpack.c.l.b16 %v5020
      %v5087 = vunpack.c.l.b16 %v5021
      %v5088 = vunpack.c.l.b16 %v5022
      %v5089 = vunpack.c.l.b16 %v5023
      %v5090 = vunpack.c.l.b16 %v5024
      %v5091 = vunpack.c.l.b16 %v5025
      %v5092 = vunpack.c.l.b16 %v5026
      %v5093 = vunpack.c.l.b16 %v5027
      %v5094 = vunpack.c.l.b16 %v5028
      %v5095 = vunpack.c.l.b16 %v5029
      %v5096 = vunpack.c.l.b16 %v5030
      %v5097 = vunpack.c.l.b16 %v5031
      %v5098 = vunpack.c.l.b16 %v5032
      %v5099 = vunpack.c.l.b16 %v5033
      %v5100 = vunpack.c.l.b16 %v5034
      %v5101 = vpack.c.b16 %v5070, %v5069
      %v5102 = vpack.c.b16 %v5072, %v5071
      %v5103 = vpack.c.b16 %v5074, %v5073
      %v5104 = vpack.c.b16 %v5076, %v5075
      %v5105 = vpack.c.b16 %v5078, %v5077
      %v5106 = vpack.c.b16 %v5080, %v5079
      %v5107 = vpack.c.b16 %v5082, %v5081
      %v5108 = vpack.c.b16 %v5084, %v5083
      %v5109 = vpack.c.b16 %v5086, %v5085
      %v5110 = vpack.c.b16 %v5088, %v5087
      %v5111 = vpack.c.b16 %v5090, %v5089
      %v5112 = vpack.c.b16 %v5092, %v5091
      %v5113 = vpack.c.b16 %v5094, %v5093
      %v5114 = vpack.c.b16 %v5096, %v5095
      %v5115 = vpack.c.b16 %v5098, %v5097
      %v5116 = vpack.c.b16 %v5100, %v5099
      %v5119 = vunpack.c.l.b16 %v5035
      %v5120 = vunpack.c.l.b16 %v5036
      %v5121 = vpack.c.b16 %v5120, %v5119
      %v5124 = vsel %vm863, %v5101, 0
      %v5127 = vsel %vm863, %v5102, 0
      %v5130 = vsel %vm863, %v5103, 0
      %v5133 = vsel %vm863, %v5104, 0
      %v5136 = vsel %vm863, %v5105, 0
      %v5139 = vsel %vm863, %v5106, 0
      %v5142 = vsel %vm863, %v5107, 0
      %v5145 = vsel %vm863, %v5108, 0
      %v5148 = vsel %vm863, %v5109, 0
      %v5151 = vsel %vm863, %v5110, 0
      %v5154 = vsel %vm863, %v5111, 0
      %v5157 = vsel %vm863, %v5112, 0
      %v5160 = vsel %vm863, %v5113, 0
      %v5163 = vsel %vm863, %v5114, 0
      %v5166 = vsel %vm863, %v5115, 0
      %v5169 = vsel %vm863, %v5116, 0
      %5171 = vmatprep.subr.bf16.mxu0 0
      %5172 = vmatpush1.bf16.msra.mxu0 %v5121
      %5173 = vmatprep.subr.bf16.mxu0 0
      %5174 = vmatpush1.bf16.msra.mxu0 0
      %5175 = vmatprep.subr.bf16.mxu0 0
      %5176 = vmatpush1.bf16.msra.mxu0 0
      %5177 = vmatprep.subr.bf16.mxu0 0
      %5178 = vmatpush1.bf16.msra.mxu0 0
      %5179 = vmatprep.subr.bf16.mxu0 0
      %5180 = vmatpush1.bf16.msra.mxu0 0
      %5181 = vmatprep.subr.bf16.mxu0 0
      %5182 = vmatpush1.bf16.msra.mxu0 0
      %5183 = vmatprep.subr.bf16.mxu0 0
      %5184 = vmatpush1.bf16.msra.mxu0 0
      %5185 = vmatprep.subr.bf16.mxu0 0
      %5186 = vmatpush1.bf16.msra.mxu0 0
      %5187 = vmatprep.subr.bf16.mxu0 0
      %5188 = vmatpush1.bf16.msra.mxu0 0
      %5189 = vmatprep.subr.bf16.mxu0 0
      %5190 = vmatpush1.bf16.msra.mxu0 0
      %5191 = vmatprep.subr.bf16.mxu0 0
      %5192 = vmatpush1.bf16.msra.mxu0 0
      %5193 = vmatprep.subr.bf16.mxu0 0
      %5194 = vmatpush1.bf16.msra.mxu0 0
      %5195 = vmatprep.subr.bf16.mxu0 0
      %5196 = vmatpush1.bf16.msra.mxu0 0
      %5197 = vmatprep.subr.bf16.mxu0 0
      %5198 = vmatpush1.bf16.msra.mxu0 0
      %5199 = vmatprep.subr.bf16.mxu0 0
      %5200 = vmatpush1.bf16.msra.mxu0 0
      %5201 = vmatprep.subr.bf16.mxu0 0
      %5202 = vmatpush1.bf16.msra.mxu0 0
      %5203 = vmatprep.mubr.bf16.mxu0 0
      %5204 = vmatmul.mubr.bf16.gmra.mrb[0].mxu0 %v5124
      %v5205 = vpop.f32.mrb[0].mxu0
      %v5206 = vadd.f32 0.0, %v5205
      %v5207 = vpop.f32.mrb[0].mxu0
      %v5208 = vpop.f32.mrb[0].mxu0
      %v5209 = vadd.f32 0.0, %v5208
      %v5210 = vpop.f32.mrb[0].mxu0
      %5211 = vmatprep.mubr.bf16.mxu0 0
      %5212 = vmatmul.mubr.bf16.gmra.mrb[0].mxu0 %v5127
      %v5213 = vpop.f32.mrb[0].mxu0
      %v5214 = vadd.f32 0.0, %v5213
      %v5215 = vpop.f32.mrb[0].mxu0
      %v5216 = vpop.f32.mrb[0].mxu0
      %v5217 = vadd.f32 0.0, %v5216
      %v5218 = vpop.f32.mrb[0].mxu0
      %5219 = vmatprep.mubr.bf16.mxu0 0
      %5220 = vmatmul.mubr.bf16.gmra.mrb[0].mxu0 %v5130
      %v5221 = vpop.f32.mrb[0].mxu0
      %v5222 = vadd.f32 0.0, %v5221
      %v5223 = vpop.f32.mrb[0].mxu0
      %v5224 = vpop.f32.mrb[0].mxu0
      %v5225 = vadd.f32 0.0, %v5224
      %v5226 = vpop.f32.mrb[0].mxu0
      %5227 = vmatprep.mubr.bf16.mxu0 0
      %5228 = vmatmul.mubr.bf16.gmra.mrb[0].mxu0 %v5133
      %v5229 = vpop.f32.mrb[0].mxu0
      %v5230 = vadd.f32 0.0, %v5229
      %v5231 = vpop.f32.mrb[0].mxu0
      %v5232 = vpop.f32.mrb[0].mxu0
      %v5233 = vadd.f32 0.0, %v5232
      %v5234 = vpop.f32.mrb[0].mxu0
      %5235 = vmatprep.mubr.bf16.mxu0 0
      %5236 = vmatmul.mubr.bf16.gmra.mrb[0].mxu0 %v5136
      %v5237 = vpop.f32.mrb[0].mxu0
      %v5238 = vadd.f32 0.0, %v5237
      %v5239 = vpop.f32.mrb[0].mxu0
      %v5240 = vpop.f32.mrb[0].mxu0
      %v5241 = vadd.f32 0.0, %v5240
      %v5242 = vpop.f32.mrb[0].mxu0
      %5243 = vmatprep.mubr.bf16.mxu0 0
      %5244 = vmatmul.mubr.bf16.gmra.mrb[0].mxu0 %v5139
      %v5245 = vpop.f32.mrb[0].mxu0
      %v5246 = vadd.f32 0.0, %v5245
      %v5247 = vpop.f32.mrb[0].mxu0
      %v5248 = vpop.f32.mrb[0].mxu0
      %v5249 = vadd.f32 0.0, %v5248
      %v5250 = vpop.f32.mrb[0].mxu0
      %5251 = vmatprep.mubr.bf16.mxu0 0
      %5252 = vmatmul.mubr.bf16.gmra.mrb[0].mxu0 %v5142
      %v5253 = vpop.f32.mrb[0].mxu0
      %v5254 = vadd.f32 0.0, %v5253
      %v5255 = vpop.f32.mrb[0].mxu0
      %v5256 = vpop.f32.mrb[0].mxu0
      %v5257 = vadd.f32 0.0, %v5256
      %v5258 = vpop.f32.mrb[0].mxu0
      %5259 = vmatprep.mubr.bf16.mxu0 0
      %5260 = vmatmul.mubr.bf16.gmra.mrb[0].mxu0 %v5145
      %v5261 = vpop.f32.mrb[0].mxu0
      %v5262 = vadd.f32 0.0, %v5261
      %v5263 = vpop.f32.mrb[0].mxu0
      %v5264 = vpop.f32.mrb[0].mxu0
      %v5265 = vadd.f32 0.0, %v5264
      %v5266 = vpop.f32.mrb[0].mxu0
      %5267 = vmatprep.mubr.bf16.mxu0 0
      %5268 = vmatmul.mubr.bf16.gmra.mrb[0].mxu0 %v5148
      %v5269 = vpop.f32.mrb[0].mxu0
      %v5270 = vadd.f32 0.0, %v5269
      %v5271 = vpop.f32.mrb[0].mxu0
      %v5272 = vpop.f32.mrb[0].mxu0
      %v5273 = vadd.f32 0.0, %v5272
      %v5274 = vpop.f32.mrb[0].mxu0
      %5275 = vmatprep.mubr.bf16.mxu0 0
      %5276 = vmatmul.mubr.bf16.gmra.mrb[0].mxu0 %v5151
      %v5277 = vpop.f32.mrb[0].mxu0
      %v5278 = vadd.f32 0.0, %v5277
      %v5279 = vpop.f32.mrb[0].mxu0
      %v5280 = vpop.f32.mrb[0].mxu0
      %v5281 = vadd.f32 0.0, %v5280
      %v5282 = vpop.f32.mrb[0].mxu0
      %5283 = vmatprep.mubr.bf16.mxu0 0
      %5284 = vmatmul.mubr.bf16.gmra.mrb[0].mxu0 %v5154
      %v5285 = vpop.f32.mrb[0].mxu0
      %v5286 = vadd.f32 0.0, %v5285
      %v5287 = vpop.f32.mrb[0].mxu0
      %v5288 = vpop.f32.mrb[0].mxu0
      %v5289 = vadd.f32 0.0, %v5288
      %v5290 = vpop.f32.mrb[0].mxu0
      %5291 = vmatprep.mubr.bf16.mxu0 0
      %5292 = vmatmul.mubr.bf16.gmra.mrb[0].mxu0 %v5157
      %v5293 = vpop.f32.mrb[0].mxu0
      %v5294 = vadd.f32 0.0, %v5293
      %v5295 = vpop.f32.mrb[0].mxu0
      %v5296 = vpop.f32.mrb[0].mxu0
      %v5297 = vadd.f32 0.0, %v5296
      %v5298 = vpop.f32.mrb[0].mxu0
      %5299 = vmatprep.mubr.bf16.mxu0 0
      %5300 = vmatmul.mubr.bf16.gmra.mrb[0].mxu0 %v5160
      %v5301 = vpop.f32.mrb[0].mxu0
      %v5302 = vadd.f32 0.0, %v5301
      %v5303 = vpop.f32.mrb[0].mxu0
      %v5304 = vpop.f32.mrb[0].mxu0
      %v5305 = vadd.f32 0.0, %v5304
      %v5306 = vpop.f32.mrb[0].mxu0
      %5307 = vmatprep.mubr.bf16.mxu0 0
      %5308 = vmatmul.mubr.bf16.gmra.mrb[0].mxu0 %v5163
      %v5309 = vpop.f32.mrb[0].mxu0
      %v5310 = vadd.f32 0.0, %v5309
      %v5311 = vpop.f32.mrb[0].mxu0
      %v5312 = vpop.f32.mrb[0].mxu0
      %v5313 = vadd.f32 0.0, %v5312
      %v5314 = vpop.f32.mrb[0].mxu0
      %5315 = vmatprep.mubr.bf16.mxu0 0
      %5316 = vmatmul.mubr.bf16.gmra.mrb[0].mxu0 %v5166
      %v5317 = vpop.f32.mrb[0].mxu0
      %v5318 = vadd.f32 0.0, %v5317
      %v5319 = vpop.f32.mrb[0].mxu0
      %v5320 = vpop.f32.mrb[0].mxu0
      %v5321 = vadd.f32 0.0, %v5320
      %v5322 = vpop.f32.mrb[0].mxu0
      %5323 = vmatprep.mubr.bf16.mxu0 0
      %5324 = vmatmul.mubr.bf16.gmra.mrb[0].mxu0 %v5169
      %v5325 = vpop.f32.mrb[0].mxu0
      %v5326 = vadd.f32 0.0, %v5325
      %v5327 = vpop.f32.mrb[0].mxu0
      %v5328 = vpop.f32.mrb[0].mxu0
      %v5329 = vadd.f32 0.0, %v5328
      %v5330 = vpop.f32.mrb[0].mxu0
      %5331 = vdwg.mxu0
      %v5332 = vld [vmem:[%s9] sm:$0x1]
      %v5333 = vld [vmem:[%s10] sm:$0x1]
      %5334 = vmatprep.subr.mxu0 0.0
      %5335 = vmatpush1.msra.mxu0 %v5206
      %5336 = vmatprep.subr.mxu0 0.0
      %5337 = vmatpush1.msra.mxu0 %v5209
      %5338 = vmatprep.subr.mxu0 0.0
      %5339 = vmatpush1.msra.mxu0 %v5214
      %5340 = vmatprep.subr.mxu0 0.0
      %5341 = vmatpush1.msra.mxu0 %v5217
      %5342 = vmatprep.subr.mxu0 0.0
      %5343 = vmatpush1.msra.mxu0 %v5222
      %5344 = vmatprep.subr.mxu0 0.0
      %5345 = vmatpush1.msra.mxu0 %v5225
      %5346 = vmatprep.subr.mxu0 0.0
      %5347 = vmatpush1.msra.mxu0 %v5230
      %5348 = vmatprep.subr.mxu0 0.0
      %5349 = vmatpush1.msra.mxu0 %v5233
      %5350 = vmatprep.subr.mxu0 0.0
      %5351 = vmatpush1.msra.mxu0 %v5238
      %5352 = vmatprep.subr.mxu0 0.0
      %5353 = vmatpush1.msra.mxu0 %v5241
      %5354 = vmatprep.subr.mxu0 0.0
      %5355 = vmatpush1.msra.mxu0 %v5246
      %5356 = vmatprep.subr.mxu0 0.0
      %5357 = vmatpush1.msra.mxu0 %v5249
      %5358 = vmatprep.subr.mxu0 0.0
      %5359 = vmatpush1.msra.mxu0 %v5254
      %5360 = vmatprep.subr.mxu0 0.0
      %5361 = vmatpush1.msra.mxu0 %v5257
      %5362 = vmatprep.subr.mxu0 0.0
      %5363 = vmatpush1.msra.mxu0 %v5262
      %5364 = vmatprep.subr.mxu0 0.0
      %5365 = vmatpush1.msra.mxu0 %v5265
      %5366 = vmatprep.subr.mxu0 0.0
      %5367 = vmatpush1.msra.mxu0 %v5270
      %5368 = vmatprep.subr.mxu0 0.0
      %5369 = vmatpush1.msra.mxu0 %v5273
      %5370 = vmatprep.subr.mxu0 0.0
      %5371 = vmatpush1.msra.mxu0 %v5278
      %5372 = vmatprep.subr.mxu0 0.0
      %5373 = vmatpush1.msra.mxu0 %v5281
      %5374 = vmatprep.subr.mxu0 0.0
      %5375 = vmatpush1.msra.mxu0 %v5286
      %5376 = vmatprep.subr.mxu0 0.0
      %5377 = vmatpush1.msra.mxu0 %v5289
      %5378 = vmatprep.subr.mxu0 0.0
      %5379 = vmatpush1.msra.mxu0 %v5294
      %5380 = vmatprep.subr.mxu0 0.0
      %5381 = vmatpush1.msra.mxu0 %v5297
      %5382 = vmatprep.subr.mxu0 0.0
      %5383 = vmatpush1.msra.mxu0 %v5302
      %5384 = vmatprep.subr.mxu0 0.0
      %5385 = vmatpush1.msra.mxu0 %v5305
      %5386 = vmatprep.subr.mxu0 0.0
      %5387 = vmatpush1.msra.mxu0 %v5310
      %5388 = vmatprep.subr.mxu0 0.0
      %5389 = vmatpush1.msra.mxu0 %v5313
      %5390 = vmatprep.subr.mxu0 0.0
      %5391 = vmatpush1.msra.mxu0 %v5318
      %5392 = vmatprep.subr.mxu0 0.0
      %5393 = vmatpush1.msra.mxu0 %v5321
      %5394 = vmatprep.subr.mxu0 0.0
      %5395 = vmatpush1.msra.mxu0 %v5326
      %5396 = vmatprep.subr.mxu0 0.0
      %5397 = vmatpush1.msra.mxu0 %v5329
      %5398 = vmatprep.mubr.f32.mxu0 1.0
      %5399 = vmatmul.mubr.f32.gmra.mrb[0].mxu0 1.0
      %v5400 = vpop.f32.mrb[0].mxu0
      %v5401 = vadd.f32 0.0, %v5400
      %v5402 = vpop.f32.mrb[0].mxu0
      %5403 = vdwg.mxu0
      %v5404 = vmul.f32 %v5206, %v5206
      %v5405 = vmul.f32 %v5209, %v5209
      %v5406 = vmul.f32 %v5214, %v5214
      %v5407 = vmul.f32 %v5217, %v5217
      %v5408 = vmul.f32 %v5222, %v5222
      %v5409 = vmul.f32 %v5225, %v5225
      %v5410 = vmul.f32 %v5230, %v5230
      %v5411 = vmul.f32 %v5233, %v5233
      %v5412 = vmul.f32 %v5238, %v5238
      %v5413 = vmul.f32 %v5241, %v5241
      %v5414 = vmul.f32 %v5246, %v5246
      %v5415 = vmul.f32 %v5249, %v5249
      %v5416 = vmul.f32 %v5254, %v5254
      %v5417 = vmul.f32 %v5257, %v5257
      %v5418 = vmul.f32 %v5262, %v5262
      %v5419 = vmul.f32 %v5265, %v5265
      %v5420 = vmul.f32 %v5270, %v5270
      %v5421 = vmul.f32 %v5273, %v5273
      %v5422 = vmul.f32 %v5278, %v5278
      %v5423 = vmul.f32 %v5281, %v5281
      %v5424 = vmul.f32 %v5286, %v5286
      %v5425 = vmul.f32 %v5289, %v5289
      %v5426 = vmul.f32 %v5294, %v5294
      %v5427 = vmul.f32 %v5297, %v5297
      %v5428 = vmul.f32 %v5302, %v5302
      %v5429 = vmul.f32 %v5305, %v5305
      %v5430 = vmul.f32 %v5310, %v5310
      %v5431 = vmul.f32 %v5313, %v5313
      %v5432 = vmul.f32 %v5318, %v5318
      %v5433 = vmul.f32 %v5321, %v5321
      %v5434 = vmul.f32 %v5326, %v5326
      %v5435 = vmul.f32 %v5329, %v5329
      %5436 = vmatprep.subr.mxu0 0.0
      %5437 = vmatpush1.msra.mxu0 %v5404
      %5438 = vmatprep.subr.mxu0 0.0
      %5439 = vmatpush1.msra.mxu0 %v5405
      %5440 = vmatprep.subr.mxu0 0.0
      %5441 = vmatpush1.msra.mxu0 %v5406
      %5442 = vmatprep.subr.mxu0 0.0
      %5443 = vmatpush1.msra.mxu0 %v5407
      %5444 = vmatprep.subr.mxu0 0.0
      %5445 = vmatpush1.msra.mxu0 %v5408
      %5446 = vmatprep.subr.mxu0 0.0
      %5447 = vmatpush1.msra.mxu0 %v5409
      %5448 = vmatprep.subr.mxu0 0.0
      %5449 = vmatpush1.msra.mxu0 %v5410
      %5450 = vmatprep.subr.mxu0 0.0
      %5451 = vmatpush1.msra.mxu0 %v5411
      %5452 = vmatprep.subr.mxu0 0.0
      %5453 = vmatpush1.msra.mxu0 %v5412
      %5454 = vmatprep.subr.mxu0 0.0
      %5455 = vmatpush1.msra.mxu0 %v5413
      %5456 = vmatprep.subr.mxu0 0.0
      %5457 = vmatpush1.msra.mxu0 %v5414
      %5458 = vmatprep.subr.mxu0 0.0
      %5459 = vmatpush1.msra.mxu0 %v5415
      %5460 = vmatprep.subr.mxu0 0.0
      %5461 = vmatpush1.msra.mxu0 %v5416
      %5462 = vmatprep.subr.mxu0 0.0
      %5463 = vmatpush1.msra.mxu0 %v5417
      %5464 = vmatprep.subr.mxu0 0.0
      %5465 = vmatpush1.msra.mxu0 %v5418
      %5466 = vmatprep.subr.mxu0 0.0
      %5467 = vmatpush1.msra.mxu0 %v5419
      %5468 = vmatprep.subr.mxu0 0.0
      %5469 = vmatpush1.msra.mxu0 %v5420
      %5470 = vmatprep.subr.mxu0 0.0
      %5471 = vmatpush1.msra.mxu0 %v5421
      %5472 = vmatprep.subr.mxu0 0.0
      %5473 = vmatpush1.msra.mxu0 %v5422
      %5474 = vmatprep.subr.mxu0 0.0
      %5475 = vmatpush1.msra.mxu0 %v5423
      %5476 = vmatprep.subr.mxu0 0.0
      %5477 = vmatpush1.msra.mxu0 %v5424
      %5478 = vmatprep.subr.mxu0 0.0
      %5479 = vmatpush1.msra.mxu0 %v5425
      %5480 = vmatprep.subr.mxu0 0.0
      %5481 = vmatpush1.msra.mxu0 %v5426
      %5482 = vmatprep.subr.mxu0 0.0
      %5483 = vmatpush1.msra.mxu0 %v5427
      %5484 = vmatprep.subr.mxu0 0.0
      %5485 = vmatpush1.msra.mxu0 %v5428
      %5486 = vmatprep.subr.mxu0 0.0
      %5487 = vmatpush1.msra.mxu0 %v5429
      %5488 = vmatprep.subr.mxu0 0.0
      %5489 = vmatpush1.msra.mxu0 %v5430
      %5490 = vmatprep.subr.mxu0 0.0
      %5491 = vmatpush1.msra.mxu0 %v5431
      %5492 = vmatprep.subr.mxu0 0.0
      %5493 = vmatpush1.msra.mxu0 %v5432
      %5494 = vmatprep.subr.mxu0 0.0
      %5495 = vmatpush1.msra.mxu0 %v5433
      %5496 = vmatprep.subr.mxu0 0.0
      %5497 = vmatpush1.msra.mxu0 %v5434
      %5498 = vmatprep.subr.mxu0 0.0
      %5499 = vmatpush1.msra.mxu0 %v5435
      %5500 = vmatprep.mubr.f32.mxu0 1.0
      %5501 = vmatmul.mubr.f32.gmra.mrb[0].mxu0 1.0
      %v5502 = vpop.f32.mrb[0].mxu0
      %v5503 = vadd.f32 0.0, %v5502
      %v5504 = vpop.f32.mrb[0].mxu0
      %5505 = vdwg.mxu0
      %v5507 = vsel %vm1553, %v5401, 0
      %5509 = vmatprep.subr.mxu0 0.0
      %5510 = vmatpush1.msra.mxu0 %v489
      %5511 = vmatprep.subr.mxu0 0.0
      %5512 = vmatpush1.msra.mxu0 %v490
      %5513 = vmatprep.subr.mxu0 0.0
      %5514 = vmatpush1.msra.mxu0 %v491
      %5515 = vmatprep.subr.mxu0 0.0
      %5516 = vmatpush1.msra.mxu0 %v492
      %5517 = vmatprep.subr.mxu0 0.0
      %5518 = vmatpush1.msra.mxu0 0.0
      %5519 = vmatprep.subr.mxu0 0.0
      %5520 = vmatpush1.msra.mxu0 0.0
      %5521 = vmatprep.subr.mxu0 0.0
      %5522 = vmatpush1.msra.mxu0 0.0
      %5523 = vmatprep.subr.mxu0 0.0
      %5524 = vmatpush1.msra.mxu0 0.0
      %5525 = vmatprep.subr.mxu0 0.0
      %5526 = vmatpush1.msra.mxu0 0.0
      %5527 = vmatprep.subr.mxu0 0.0
      %5528 = vmatpush1.msra.mxu0 0.0
      %5529 = vmatprep.subr.mxu0 0.0
      %5530 = vmatpush1.msra.mxu0 0.0
      %5531 = vmatprep.subr.mxu0 0.0
      %5532 = vmatpush1.msra.mxu0 0.0
      %5533 = vmatprep.subr.mxu0 0.0
      %5534 = vmatpush1.msra.mxu0 0.0
      %5535 = vmatprep.subr.mxu0 0.0
      %5536 = vmatpush1.msra.mxu0 0.0
      %5537 = vmatprep.subr.mxu0 0.0
      %5538 = vmatpush1.msra.mxu0 0.0
      %5539 = vmatprep.subr.mxu0 0.0
      %5540 = vmatpush1.msra.mxu0 0.0
      %5541 = vmatprep.subr.mxu0 0.0
      %5542 = vmatpush1.msra.mxu0 0.0
      %5543 = vmatprep.subr.mxu0 0.0
      %5544 = vmatpush1.msra.mxu0 0.0
      %5545 = vmatprep.subr.mxu0 0.0
      %5546 = vmatpush1.msra.mxu0 0.0
      %5547 = vmatprep.subr.mxu0 0.0
      %5548 = vmatpush1.msra.mxu0 0.0
      %5549 = vmatprep.subr.mxu0 0.0
      %5550 = vmatpush1.msra.mxu0 0.0
      %5551 = vmatprep.subr.mxu0 0.0
      %5552 = vmatpush1.msra.mxu0 0.0
      %5553 = vmatprep.subr.mxu0 0.0
      %5554 = vmatpush1.msra.mxu0 0.0
      %5555 = vmatprep.subr.mxu0 0.0
      %5556 = vmatpush1.msra.mxu0 0.0
      %5557 = vmatprep.subr.mxu0 0.0
      %5558 = vmatpush1.msra.mxu0 0.0
      %5559 = vmatprep.subr.mxu0 0.0
      %5560 = vmatpush1.msra.mxu0 0.0
      %5561 = vmatprep.subr.mxu0 0.0
      %5562 = vmatpush1.msra.mxu0 0.0
      %5563 = vmatprep.subr.mxu0 0.0
      %5564 = vmatpush1.msra.mxu0 0.0
      %5565 = vmatprep.subr.mxu0 0.0
      %5566 = vmatpush1.msra.mxu0 0.0
      %5567 = vmatprep.subr.mxu0 0.0
      %5568 = vmatpush1.msra.mxu0 0.0
      %5569 = vmatprep.subr.mxu0 0.0
      %5570 = vmatpush1.msra.mxu0 0.0
      %5571 = vmatprep.subr.mxu0 0.0
      %5572 = vmatpush1.msra.mxu0 0.0
      %5573 = vmatprep.mubr.f32.mxu0 0.0
      %5574 = vmatmul.mubr.f32.gmra.mrb[0].mxu0 %v5507
      %v5575 = vpop.f32.mrb[0].mxu0
      %v5576 = vadd.f32 0.0, %v5575
      %v5577 = vpop.f32.mrb[0].mxu0
      %5578 = vdwg.mxu0
      %v5580 = vsel %vm1553, %v5503, 0
      %5582 = vmatprep.subr.mxu0 0.0
      %5583 = vmatpush1.msra.mxu0 %v489
      %5584 = vmatprep.subr.mxu0 0.0
      %5585 = vmatpush1.msra.mxu0 %v490
      %5586 = vmatprep.subr.mxu0 0.0
      %5587 = vmatpush1.msra.mxu0 %v491
      %5588 = vmatprep.subr.mxu0 0.0
      %5589 = vmatpush1.msra.mxu0 %v492
      %5590 = vmatprep.subr.mxu0 0.0
      %5591 = vmatpush1.msra.mxu0 0.0
      %5592 = vmatprep.subr.mxu0 0.0
      %5593 = vmatpush1.msra.mxu0 0.0
      %5594 = vmatprep.subr.mxu0 0.0
      %5595 = vmatpush1.msra.mxu0 0.0
      %5596 = vmatprep.subr.mxu0 0.0
      %5597 = vmatpush1.msra.mxu0 0.0
      %5598 = vmatprep.subr.mxu0 0.0
      %5599 = vmatpush1.msra.mxu0 0.0
      %5600 = vmatprep.subr.mxu0 0.0
      %5601 = vmatpush1.msra.mxu0 0.0
      %5602 = vmatprep.subr.mxu0 0.0
      %5603 = vmatpush1.msra.mxu0 0.0
      %5604 = vmatprep.subr.mxu0 0.0
      %5605 = vmatpush1.msra.mxu0 0.0
      %5606 = vmatprep.subr.mxu0 0.0
      %5607 = vmatpush1.msra.mxu0 0.0
      %5608 = vmatprep.subr.mxu0 0.0
      %5609 = vmatpush1.msra.mxu0 0.0
      %5610 = vmatprep.subr.mxu0 0.0
      %5611 = vmatpush1.msra.mxu0 0.0
      %5612 = vmatprep.subr.mxu0 0.0
      %5613 = vmatpush1.msra.mxu0 0.0
      %5614 = vmatprep.subr.mxu0 0.0
      %5615 = vmatpush1.msra.mxu0 0.0
      %5616 = vmatprep.subr.mxu0 0.0
      %5617 = vmatpush1.msra.mxu0 0.0
      %5618 = vmatprep.subr.mxu0 0.0
      %5619 = vmatpush1.msra.mxu0 0.0
      %5620 = vmatprep.subr.mxu0 0.0
      %5621 = vmatpush1.msra.mxu0 0.0
      %5622 = vmatprep.subr.mxu0 0.0
      %5623 = vmatpush1.msra.mxu0 0.0
      %5624 = vmatprep.subr.mxu0 0.0
      %5625 = vmatpush1.msra.mxu0 0.0
      %5626 = vmatprep.subr.mxu0 0.0
      %5627 = vmatpush1.msra.mxu0 0.0
      %5628 = vmatprep.subr.mxu0 0.0
      %5629 = vmatpush1.msra.mxu0 0.0
      %5630 = vmatprep.subr.mxu0 0.0
      %5631 = vmatpush1.msra.mxu0 0.0
      %5632 = vmatprep.subr.mxu0 0.0
      %5633 = vmatpush1.msra.mxu0 0.0
      %5634 = vmatprep.subr.mxu0 0.0
      %5635 = vmatpush1.msra.mxu0 0.0
      %5636 = vmatprep.subr.mxu0 0.0
      %5637 = vmatpush1.msra.mxu0 0.0
      %5638 = vmatprep.subr.mxu0 0.0
      %5639 = vmatpush1.msra.mxu0 0.0
      %5640 = vmatprep.subr.mxu0 0.0
      %5641 = vmatpush1.msra.mxu0 0.0
      %5642 = vmatprep.subr.mxu0 0.0
      %5643 = vmatpush1.msra.mxu0 0.0
      %5644 = vmatprep.subr.mxu0 0.0
      %5645 = vmatpush1.msra.mxu0 0.0
      %5646 = vmatprep.mubr.f32.mxu0 0.0
      %5647 = vmatmul.mubr.f32.gmra.mrb[0].mxu0 %v5580
      %v5648 = vpop.f32.mrb[0].mxu0
      %v5649 = vadd.f32 0.0, %v5648
      %v5650 = vpop.f32.mrb[0].mxu0
      %5651 = vdwg.mxu0
      %v5652 = vmul.f32 %v5576, %v5576
      %v5653 = vsub.f32 %v5649, %v5652
      %v5654 = vadd.f32 %v5653, 1e-05
      %v5655 = vrsqrt.pop %v5654
      %v5656 = vmul.f32 %v5332, %v5655
      %v5657 = vmul.f32 %v5576, %v5656
      %v5658 = vsub.f32 %v5333, %v5657
      %v5660 = vlaneseq
      %v5661 = vshrl.u32 %v5660, 7
      %v5662 = vsub.s32 0, %v5661
      %v5663 = vrot.slane %v5656, %v5662
      %v5665 = vmul.f32 %v5206, %v5663
      %v5666 = vmul.f32 %v5209, %v5663
      %v5667 = vmul.f32 %v5214, %v5663
      %v5668 = vmul.f32 %v5217, %v5663
      %v5669 = vmul.f32 %v5222, %v5663
      %v5670 = vmul.f32 %v5225, %v5663
      %v5671 = vmul.f32 %v5230, %v5663
      %v5672 = vmul.f32 %v5233, %v5663
      %v5673 = vmul.f32 %v5238, %v5663
      %v5674 = vmul.f32 %v5241, %v5663
      %v5675 = vmul.f32 %v5246, %v5663
      %v5676 = vmul.f32 %v5249, %v5663
      %v5677 = vmul.f32 %v5254, %v5663
      %v5678 = vmul.f32 %v5257, %v5663
      %v5679 = vmul.f32 %v5262, %v5663
      %v5680 = vmul.f32 %v5265, %v5663
      %v5681 = vmul.f32 %v5270, %v5663
      %v5682 = vmul.f32 %v5273, %v5663
      %v5683 = vmul.f32 %v5278, %v5663
      %v5684 = vmul.f32 %v5281, %v5663
      %v5685 = vmul.f32 %v5286, %v5663
      %v5686 = vmul.f32 %v5289, %v5663
      %v5687 = vmul.f32 %v5294, %v5663
      %v5688 = vmul.f32 %v5297, %v5663
      %v5689 = vmul.f32 %v5302, %v5663
      %v5690 = vmul.f32 %v5305, %v5663
      %v5691 = vmul.f32 %v5310, %v5663
      %v5692 = vmul.f32 %v5313, %v5663
      %v5693 = vmul.f32 %v5318, %v5663
      %v5694 = vmul.f32 %v5321, %v5663
      %v5695 = vmul.f32 %v5326, %v5663
      %v5696 = vmul.f32 %v5329, %v5663
      %v5698 = vlaneseq
      %v5699 = vshrl.u32 %v5698, 7
      %v5700 = vsub.s32 0, %v5699
      %v5701 = vrot.slane %v5658, %v5700
      %v5703 = vadd.f32 %v5665, %v5701
      %v5704 = vadd.f32 %v5666, %v5701
      %v5705 = vadd.f32 %v5667, %v5701
      %v5706 = vadd.f32 %v5668, %v5701
      %v5707 = vadd.f32 %v5669, %v5701
      %v5708 = vadd.f32 %v5670, %v5701
      %v5709 = vadd.f32 %v5671, %v5701
      %v5710 = vadd.f32 %v5672, %v5701
      %v5711 = vadd.f32 %v5673, %v5701
      %v5712 = vadd.f32 %v5674, %v5701
      %v5713 = vadd.f32 %v5675, %v5701
      %v5714 = vadd.f32 %v5676, %v5701
      %v5715 = vadd.f32 %v5677, %v5701
      %v5716 = vadd.f32 %v5678, %v5701
      %v5717 = vadd.f32 %v5679, %v5701
      %v5718 = vadd.f32 %v5680, %v5701
      %v5719 = vadd.f32 %v5681, %v5701
      %v5720 = vadd.f32 %v5682, %v5701
      %v5721 = vadd.f32 %v5683, %v5701
      %v5722 = vadd.f32 %v5684, %v5701
      %v5723 = vadd.f32 %v5685, %v5701
      %v5724 = vadd.f32 %v5686, %v5701
      %v5725 = vadd.f32 %v5687, %v5701
      %v5726 = vadd.f32 %v5688, %v5701
      %v5727 = vadd.f32 %v5689, %v5701
      %v5728 = vadd.f32 %v5690, %v5701
      %v5729 = vadd.f32 %v5691, %v5701
      %v5730 = vadd.f32 %v5692, %v5701
      %v5731 = vadd.f32 %v5693, %v5701
      %v5732 = vadd.f32 %v5694, %v5701
      %v5733 = vadd.f32 %v5695, %v5701
      %v5734 = vadd.f32 %v5696, %v5701
      %v5735 = vadd.f32 %v4971, %v5703
      %v5736 = vadd.f32 %v4972, %v5704
      %v5737 = vadd.f32 %v4973, %v5705
      %v5738 = vadd.f32 %v4974, %v5706
      %v5739 = vadd.f32 %v4975, %v5707
      %v5740 = vadd.f32 %v4976, %v5708
      %v5741 = vadd.f32 %v4977, %v5709
      %v5742 = vadd.f32 %v4978, %v5710
      %v5743 = vadd.f32 %v4979, %v5711
      %v5744 = vadd.f32 %v4980, %v5712
      %v5745 = vadd.f32 %v4981, %v5713
      %v5746 = vadd.f32 %v4982, %v5714
      %v5747 = vadd.f32 %v4983, %v5715
      %v5748 = vadd.f32 %v4984, %v5716
      %v5749 = vadd.f32 %v4985, %v5717
      %v5750 = vadd.f32 %v4986, %v5718
      %v5751 = vadd.f32 %v4987, %v5719
      %v5752 = vadd.f32 %v4988, %v5720
      %v5753 = vadd.f32 %v4989, %v5721
      %v5754 = vadd.f32 %v4990, %v5722
      %v5755 = vadd.f32 %v4991, %v5723
      %v5756 = vadd.f32 %v4992, %v5724
      %v5757 = vadd.f32 %v4993, %v5725
      %v5758 = vadd.f32 %v4994, %v5726
      %v5759 = vadd.f32 %v4995, %v5727
      %v5760 = vadd.f32 %v4996, %v5728
      %v5761 = vadd.f32 %v4997, %v5729
      %v5762 = vadd.f32 %v4998, %v5730
      %v5763 = vadd.f32 %v4999, %v5731
      %v5764 = vadd.f32 %v5000, %v5732
      %v5765 = vadd.f32 %v5001, %v5733
      %v5766 = vadd.f32 %v5002, %v5734
      %v5767 = vmax.f32 %v5735, 0.0
      %v5768 = vmax.f32 %v5736, 0.0
      %v5769 = vmax.f32 %v5737, 0.0
      %v5770 = vmax.f32 %v5738, 0.0
      %v5771 = vmax.f32 %v5739, 0.0
      %v5772 = vmax.f32 %v5740, 0.0
      %v5773 = vmax.f32 %v5741, 0.0
      %v5774 = vmax.f32 %v5742, 0.0
      %v5775 = vmax.f32 %v5743, 0.0
      %v5776 = vmax.f32 %v5744, 0.0
      %v5777 = vmax.f32 %v5745, 0.0
      %v5778 = vmax.f32 %v5746, 0.0
      %v5779 = vmax.f32 %v5747, 0.0
      %v5780 = vmax.f32 %v5748, 0.0
      %v5781 = vmax.f32 %v5749, 0.0
      %v5782 = vmax.f32 %v5750, 0.0
      %v5783 = vmax.f32 %v5751, 0.0
      %v5784 = vmax.f32 %v5752, 0.0
      %v5785 = vmax.f32 %v5753, 0.0
      %v5786 = vmax.f32 %v5754, 0.0
      %v5787 = vmax.f32 %v5755, 0.0
      %v5788 = vmax.f32 %v5756, 0.0
      %v5789 = vmax.f32 %v5757, 0.0
      %v5790 = vmax.f32 %v5758, 0.0
      %v5791 = vmax.f32 %v5759, 0.0
      %v5792 = vmax.f32 %v5760, 0.0
      %v5793 = vmax.f32 %v5761, 0.0
      %v5794 = vmax.f32 %v5762, 0.0
      %v5795 = vmax.f32 %v5763, 0.0
      %v5796 = vmax.f32 %v5764, 0.0
      %v5797 = vmax.f32 %v5765, 0.0
      %v5798 = vmax.f32 %v5766, 0.0
      %5799 = vxpose.xlu0.b32.start [1/16] %v5767, 128
      %5800 = vxpose.xlu0.b32.cont [2/16] %v5768, 128
      %5801 = vxpose.xlu0.b32.cont [3/16] %v5769, 128
      %5802 = vxpose.xlu0.b32.cont [4/16] %v5770, 128
      %5803 = vxpose.xlu0.b32.cont [5/16] %v5771, 128
      %5804 = vxpose.xlu0.b32.cont [6/16] %v5772, 128
      %5805 = vxpose.xlu0.b32.cont [7/16] %v5773, 128
      %5806 = vxpose.xlu0.b32.cont [8/16] %v5774, 128
      %5807 = vxpose.xlu0.b32.cont [9/16] %v5775, 128
      %5808 = vxpose.xlu0.b32.cont [10/16] %v5776, 128
      %5809 = vxpose.xlu0.b32.cont [11/16] %v5777, 128
      %5810 = vxpose.xlu0.b32.cont [12/16] %v5778, 128
      %5811 = vxpose.xlu0.b32.cont [13/16] %v5779, 128
      %5812 = vxpose.xlu0.b32.cont [14/16] %v5780, 128
      %5813 = vxpose.xlu0.b32.cont [15/16] %v5781, 128
      %5814 = vxpose.xlu0.b32.end [16/16] %v5782, 128
      %v5815 = vpop.trf.xlu0
      %v5816 = vpop.trf.xlu0
      %v5817 = vpop.trf.xlu0
      %v5818 = vpop.trf.xlu0
      %v5819 = vpop.trf.xlu0
      %v5820 = vpop.trf.xlu0
      %v5821 = vpop.trf.xlu0
      %v5822 = vpop.trf.xlu0
      %v5823 = vpop.trf.xlu0
      %v5824 = vpop.trf.xlu0
      %v5825 = vpop.trf.xlu0
      %v5826 = vpop.trf.xlu0
      %v5827 = vpop.trf.xlu0
      %v5828 = vpop.trf.xlu0
      %v5829 = vpop.trf.xlu0
      %v5830 = vpop.trf.xlu0
      %5831 = vxpose.xlu0.b32.start [1/16] %v5783, 128
      %5832 = vxpose.xlu0.b32.cont [2/16] %v5784, 128
      %5833 = vxpose.xlu0.b32.cont [3/16] %v5785, 128
      %5834 = vxpose.xlu0.b32.cont [4/16] %v5786, 128
      %5835 = vxpose.xlu0.b32.cont [5/16] %v5787, 128
      %5836 = vxpose.xlu0.b32.cont [6/16] %v5788, 128
      %5837 = vxpose.xlu0.b32.cont [7/16] %v5789, 128
      %5838 = vxpose.xlu0.b32.cont [8/16] %v5790, 128
      %5839 = vxpose.xlu0.b32.cont [9/16] %v5791, 128
      %5840 = vxpose.xlu0.b32.cont [10/16] %v5792, 128
      %5841 = vxpose.xlu0.b32.cont [11/16] %v5793, 128
      %5842 = vxpose.xlu0.b32.cont [12/16] %v5794, 128
      %5843 = vxpose.xlu0.b32.cont [13/16] %v5795, 128
      %5844 = vxpose.xlu0.b32.cont [14/16] %v5796, 128
      %5845 = vxpose.xlu0.b32.cont [15/16] %v5797, 128
      %5846 = vxpose.xlu0.b32.end [16/16] %v5798, 128
      %v5847 = vpop.trf.xlu0
      %v5848 = vpop.trf.xlu0
      %v5849 = vpop.trf.xlu0
      %v5850 = vpop.trf.xlu0
      %v5851 = vpop.trf.xlu0
      %v5852 = vpop.trf.xlu0
      %v5853 = vpop.trf.xlu0
      %v5854 = vpop.trf.xlu0
      %v5855 = vpop.trf.xlu0
      %v5856 = vpop.trf.xlu0
      %v5857 = vpop.trf.xlu0
      %v5858 = vpop.trf.xlu0
      %v5859 = vpop.trf.xlu0
      %v5860 = vpop.trf.xlu0
      %v5861 = vpop.trf.xlu0
      %v5862 = vpop.trf.xlu0
      %5863 = vst [vmem:[%s487] sm:$0xff] %v5815
      %5864 = vst [vmem:[%s487 + $0x8] sm:$0xff] %v5847
      %5865 = vst [vmem:[%s487 + $0x10] sm:$0xff] %v5816
      %5866 = vst [vmem:[%s487 + $0x18] sm:$0xff] %v5848
      %5867 = vst [vmem:[%s487 + $0x20] sm:$0xff] %v5817
      %5868 = vst [vmem:[%s487 + $0x28] sm:$0xff] %v5849
      %5869 = vst [vmem:[%s487 + $0x30] sm:$0xff] %v5818
      %5870 = vst [vmem:[%s487 + $0x38] sm:$0xff] %v5850
      %p5871 = scmp.lt.s32.totalorder %s25, 1
      %s5872 = scalar_select %p5871, %s25, 1
      %s5873 = smul.addr %s5872, 8
      %s5874 = smul.addr %s5873, 8
      %s5875 = scalar_lea.vmem %s14, %s5874
      // Predicated region
      $region77: #{basic_block_forward.1} parent=75 // pred_check
        %p5876 = pneg %p347
      $region78: #{basic_block_forward.1} parent=75 // pred_check_branch
        %5878 = sbr.rel (%p5876) target = $region80
      $region79: #{basic_block_forward.1} parent=75 // pred_region
        _
      $region80: #{basic_block_forward.1} parent=75 // pred_fallthru
        _
    $region76: #{basic_block_forward.1} parent=5 // pred_fallthru
      _
    %p5879 = scmp.le.s32.totalorder 2, %s20
    // Predicated region
    $region81: #{basic_block_forward.1} parent=5 // pred_check
      %p5880 = pneg %p5879
    $region82: #{basic_block_forward.1} parent=5 // pred_check_branch
      %5882 = sbr.rel (%p5880) target = $region84
    $region83: #{basic_block_forward.1} parent=5 // pred_region
      %s5883 = ssub.s32 %s20, 2
      // Predicated region
      $region85: #{basic_block_forward.1} parent=83 // pred_check
        %p5884 = pneg %p353
      $region86: #{basic_block_forward.1} parent=83 // pred_check_branch
        %5886 = sbr.rel (%p5884) target = $region88
      $region87: #{basic_block_forward.1} parent=83 // pred_region
        %p5887 = scmp.lt.s32.totalorder %s26, 1
        %s5888 = scalar_select %p5887, %s26, 1
        %s5889 = smul.addr %s5888, 8
        %s5890 = smul.addr %s5889, 8
        %s5891 = scalar_lea.vmem %s14, %s5890
      $region88: #{basic_block_forward.1} parent=83 // pred_fallthru
        _
    $region84: #{basic_block_forward.1} parent=5 // pred_fallthru
      _
  $region6: #{basic_block_forward.1} parent=0 // loop_footer
    %s24 = sadd.s32 1, %s20
  $region7: #{basic_block_forward.1} parent=0 // loop_footer_branch
    %19 = sbr.rel target = $region3
  $region8: #{basic_block_forward.1} parent=0 // loop_exit
    _

</llo_original>
